<compile_context>
chip_gen: v7x
topology: tpu7x:2x2x1
jax: 0.10.0
libtpu: 0.0.40
codegen_flags: <defaults>
</compile_context>

<pallas_src>
import jax
import jax.numpy as jnp
from jax.experimental import pallas as pl
from jax.experimental.pallas import tpu as pltpu


def _round_up(n, m):
    return ((n + m - 1) // m) * m


def discriminator_kernel(x_ref,
                         w1_ref, b1_ref,
                         w2_ref, b2_ref,
                         w3_ref, b3_ref,
                         w4_ref, b4_ref,
                         w5_ref, b5_ref,
                         wn_wt_ref, wn_inv_ref, wn_b_ref,
                         out_ref):
    # x arrives as bf16 (the cast was folded into the wrapper's pad op).
    h = x_ref[...]

    def lin_relu(h_bf16, w_ref, b_ref):
        # bf16 x bf16 -> f32 accumulation on the MXU (no in-kernel weight upcast,
        # no f32 weight temporaries).  Bias-add / ReLU run in f32, then the
        # activation is narrowed back to bf16 for the next matmul.
        a = jnp.dot(h_bf16, w_ref[...], preferred_element_type=jnp.float32)
        a = a + b_ref[...]
        return jnp.maximum(a, 0.0).astype(jnp.bfloat16)

    # feat_net: 5x (Linear + ReLU)
    h = lin_relu(h, w1_ref, b1_ref)
    h = lin_relu(h, w2_ref, b2_ref)
    h = lin_relu(h, w3_ref, b3_ref)
    h = lin_relu(h, w4_ref, b4_ref)
    h = lin_relu(h, w5_ref, b5_ref)

    # WN_Linear head:  raw = h @ W.T ;  out = raw * (g / sqrt(||w_row||^2+1e-6)) + b.
    # The per-column scale is a weight-only constant precomputed in the wrapper
    # (wn_inv_ref), so the kernel does only the matmul + one fused scale/bias.
    raw = jnp.dot(h, wn_wt_ref[...], preferred_element_type=jnp.float32)
    out_ref[...] = raw * wn_inv_ref[...] + wn_b_ref[...]


def discriminator_forward(x_nchw, params):
    """x_nchw: (B, 1, H, W) float32 -> logits (B, num_label). require='class' path."""
    (w1, b1, w2, b2, w3, b3, w4, b4, w5, b5, wn_w, wn_scale, wn_b) = params

    B = x_nchw.shape[0]
    x = x_nchw.reshape(B, -1)                      # X.view(X.size(0), -1)
    input_size = x.shape[1]
    num_label, feature_size = wn_w.shape

    in_pad = _round_up(input_size, 128)
    label_pad = _round_up(num_label, 128)

    def pad2(a, rows, cols, dtype):
        a = a.astype(dtype)
        return jnp.pad(a, ((0, rows - a.shape[0]), (0, cols - a.shape[1])))

    def pad_row(v, cols, dtype):
        v = v.reshape(1, -1).astype(dtype)
        return jnp.pad(v, ((0, 0), (0, cols - v.shape[1])))

    layer_ws = [w1, w2, w3, w4, w5]
    layer_bs = [b1, b2, b3, b4, b5]
    dims_out = [w.shape[1] for w in layer_ws]
    dims_in_pad = [in_pad] + [_round_up(d, 128) for d in dims_out[:-1]]
    dims_out_pad = [_round_up(d, 128) for d in dims_out]
    feat_pad = dims_out_pad[-1]

    padded = []
    for w, b, rin, rout in zip(layer_ws, layer_bs, dims_in_pad, dims_out_pad):
        padded.append(pad2(w, rin, rout, jnp.bfloat16))   # weights stored bf16
        padded.append(pad_row(b, rout, jnp.float32))      # biases stay f32

    # WN head: store W.T in bf16 and hoist the weight-norm scale out of the kernel.
    wn_w_q = wn_w.astype(jnp.bfloat16)
    wn_wt_p = pad2(wn_w_q.T, feat_pad, label_pad, jnp.bfloat16)   # (feat_pad, L_pad)
    w32 = wn_w_q.astype(jnp.float32)
    inv_norm = wn_scale.astype(jnp.float32) * jax.lax.rsqrt(
        jnp.sum(w32 * w32, axis=1) + 1e-6)                        # (num_label,)
    wn_inv_p = pad_row(inv_norm, label_pad, jnp.float32)          # padded lanes = 0
    wn_b_p = pad_row(wn_b, label_pad, jnp.float32)

    # Batch tiling: multiple of 8 sublanes; >= 2 parallel grid steps for mid-size
    # batches (v7x has 2 TensorCores); 128-row tiles for large batches so the
    # dead padding in the last tile is bounded by 127 rows.
    b_pad = _round_up(B, 8)
    if b_pad <= 128:
        tb = b_pad                               # single-tile latency path
    elif b_pad <= 256:
        tb = _round_up((b_pad + 1) // 2, 8)      # two parallel tiles
        b_pad = _round_up(b_pad, tb)
    else:
        tb = 128
        b_pad = _round_up(b_pad, tb)

    # Fold the bf16 cast of x into the op that already pads/copies it.
    x_p = jnp.pad(x.astype(jnp.bfloat16),
                  ((0, b_pad - B), (0, in_pad - input_size)))

    inputs = (x_p, *padded, wn_wt_p, wn_inv_p, wn_b_p)

    def resident(shape):
        # Weight/bias blocks never change across grid steps (constant index map);
        # single-buffer them instead of the default double buffer.
        return pl.BlockSpec(shape, lambda i: (0, 0), pipeline_mode=pl.Buffered(1))

    in_specs = [pl.BlockSpec((tb, in_pad), lambda i: (i, 0))]
    in_specs += [resident(a.shape) for a in inputs[1:]]

    out = pl.pallas_call(
        discriminator_kernel,
        out_shape=jax.ShapeDtypeStruct((b_pad, label_pad), jnp.float32),
        grid=(b_pad // tb,),
        in_specs=in_specs,
        out_specs=pl.BlockSpec((tb, label_pad), lambda i: (i, 0)),
        compiler_params=pltpu.CompilerParams(
            dimension_semantics=("parallel",)),
    )(*inputs)

    return out[:B, :num_label]


def make_params(key, input_size, feature_size, num_label):
    """Synthetic init mirroring the module: Linear weight ~ N(0, 0.01), bias = 0;
       WN_Linear weight ~ N(0, 0.1), bias = 0, weight_scale = 1 (train_scale=True).
       Linear weights are stored transposed as (in, out) for the MXU."""
    sizes = [input_size, 1000, 500, 250, 250, feature_size]
    keys = jax.random.split(key, 6)
    params = []
    for i in range(5):
        w = 0.01 * jax.random.normal(keys[i], (sizes[i], sizes[i + 1]), jnp.float32)
        b = jnp.zeros((sizes[i + 1],), jnp.float32)
        params += [w, b]
    wn_w = 0.1 * jax.random.normal(keys[5], (num_label, feature_size), jnp.float32)
    wn_scale = jnp.ones((num_label,), jnp.float32)   # weight_scale, 1-D like PyTorch
    wn_b = jnp.zeros((num_label,), jnp.float32)
    params += [wn_w, wn_scale, wn_b]
    return tuple(params)


def reference_forward(x_nchw, params):
    """Pure-JAX reference with the same numerics as the kernel: bf16 weights,
       bf16 activations fed to each matmul, f32 accumulation, f32 bias/ReLU,
       and the weight-norm scale applied post-matmul."""
    (w1, b1, w2, b2, w3, b3, w4, b4, w5, b5, wn_w, wn_scale, wn_b) = params
    qb = lambda a: a.astype(jnp.bfloat16)
    h = qb(x_nchw.reshape(x_nchw.shape[0], -1))
    for w, b in ((w1, b1), (w2, b2), (w3, b3), (w4, b4), (w5, b5)):
        a = jnp.dot(h, qb(w), preferred_element_type=jnp.float32) + b[None, :]
        h = qb(jnp.maximum(a, 0.0))
    wq = qb(wn_w)
    w32 = wq.astype(jnp.float32)
    inv_norm = wn_scale / jnp.sqrt(jnp.sum(w32 * w32, axis=1) + 1e-6)
    raw = jnp.dot(h, wq.T, preferred_element_type=jnp.float32)
    return raw * inv_norm[None, :] + wn_b[None, :]


if __name__ == "__main__":
    # Small MNIST-like config: image_size=16 -> input_size=256, feature_size=32, 10 labels.
    batch, image_size, feature_size, num_label = 4, 16, 32, 10
    input_size = image_size * image_size

    key = jax.random.PRNGKey(0)
    k_x, k_p = jax.random.split(key)
    x = jax.random.normal(k_x, (batch, 1, image_size, image_size), jnp.float32)
    params = make_params(k_p, input_size, feature_size, num_label)

    out = jax.block_until_ready(discriminator_forward(x, params))
    ref = reference_forward(x, params)

    assert out.shape == (batch, num_label)
    max_diff = float(jnp.max(jnp.abs(out - ref)))
    assert jnp.allclose(out, ref, atol=2e-3, rtol=2e-3), \
        f"mismatch vs pure-JAX reference (max abs diff {max_diff})"

    # TODO(synk): WN_Linear's init_mode data-dependent re-initialization path is a
    # training-time side effect and is not implemented (inference forward only).
    print("KERNEL_OK")
</pallas_src>

<mosaic_0001>
module attributes {stable_mosaic.version = 11 : i64} {
  func.func @discriminator_kernel(%arg0: i32, %arg1: memref<8x256xbf16, #tpu.memory_space<vmem>>, %arg2: memref<256x1024xbf16, #tpu.memory_space<vmem>>, %arg3: memref<1x1024xf32, #tpu.memory_space<vmem>>, %arg4: memref<1024x512xbf16, #tpu.memory_space<vmem>>, %arg5: memref<1x512xf32, #tpu.memory_space<vmem>>, %arg6: memref<512x256xbf16, #tpu.memory_space<vmem>>, %arg7: memref<1x256xf32, #tpu.memory_space<vmem>>, %arg8: memref<256x256xbf16, #tpu.memory_space<vmem>>, %arg9: memref<1x256xf32, #tpu.memory_space<vmem>>, %arg10: memref<256x128xbf16, #tpu.memory_space<vmem>>, %arg11: memref<1x128xf32, #tpu.memory_space<vmem>>, %arg12: memref<128x128xbf16, #tpu.memory_space<vmem>>, %arg13: memref<1x128xf32, #tpu.memory_space<vmem>>, %arg14: memref<1x128xf32, #tpu.memory_space<vmem>>, %arg15: memref<8x128xf32, #tpu.memory_space<vmem>>) attributes {dimension_semantics = [#tpu.dimension_semantics<parallel>], iteration_bounds = array<i64: 1>, scalar_prefetch = 0 : i64, scratch_operands = 0 : i64, tpu.core_type = #tpu.core_type<tc>, window_params = [{transform_indices = @transform_0, window_bounds = array<i64: 8, 256>}, {pipeline_mode = #tpu.pipeline_mode<synchronous>, transform_indices = @transform_1, window_bounds = array<i64: 256, 1024>}, {pipeline_mode = #tpu.pipeline_mode<synchronous>, transform_indices = @transform_2, window_bounds = array<i64: 1, 1024>}, {pipeline_mode = #tpu.pipeline_mode<synchronous>, transform_indices = @transform_3, window_bounds = array<i64: 1024, 512>}, {pipeline_mode = #tpu.pipeline_mode<synchronous>, transform_indices = @transform_4, window_bounds = array<i64: 1, 512>}, {pipeline_mode = #tpu.pipeline_mode<synchronous>, transform_indices = @transform_5, window_bounds = array<i64: 512, 256>}, {pipeline_mode = #tpu.pipeline_mode<synchronous>, transform_indices = @transform_6, window_bounds = array<i64: 1, 256>}, {pipeline_mode = #tpu.pipeline_mode<synchronous>, transform_indices = @transform_7, window_bounds = array<i64: 256, 256>}, {pipeline_mode = #tpu.pipeline_mode<synchronous>, transform_indices = @transform_8, window_bounds = array<i64: 1, 256>}, {pipeline_mode = #tpu.pipeline_mode<synchronous>, transform_indices = @transform_9, window_bounds = array<i64: 256, 128>}, {pipeline_mode = #tpu.pipeline_mode<synchronous>, transform_indices = @transform_10, window_bounds = array<i64: 1, 128>}, {pipeline_mode = #tpu.pipeline_mode<synchronous>, transform_indices = @transform_11, window_bounds = array<i64: 128, 128>}, {pipeline_mode = #tpu.pipeline_mode<synchronous>, transform_indices = @transform_12, window_bounds = array<i64: 1, 128>}, {pipeline_mode = #tpu.pipeline_mode<synchronous>, transform_indices = @transform_13, window_bounds = array<i64: 1, 128>}, {transform_indices = @transform_14, window_bounds = array<i64: 8, 128>}]} {
    %c0 = arith.constant 0 : index
    %c0_0 = arith.constant 0 : index
    %0 = vector.load %arg1[%c0, %c0_0] : memref<8x256xbf16, #tpu.memory_space<vmem>>, vector<8x256xbf16>
    %c0_1 = arith.constant 0 : index
    %c0_2 = arith.constant 0 : index
    %1 = vector.load %arg2[%c0_1, %c0_2] : memref<256x1024xbf16, #tpu.memory_space<vmem>>, vector<256x1024xbf16>
    %cst = arith.constant dense<0.000000e+00> : vector<8x1024xf32>
    %2 = tpu.matmul %0, %1, %cst {dimension_numbers = #tpu.dot_dimension_numbers<[1], [0], [0], [1], [0, 0, 1, 1], [], []>} : vector<8x256xbf16>, vector<256x1024xbf16>, vector<8x1024xf32> -> vector<8x1024xf32>
    %c0_3 = arith.constant 0 : index
    %c0_4 = arith.constant 0 : index
    %3 = vector.load %arg3[%c0_3, %c0_4] : memref<1x1024xf32, #tpu.memory_space<vmem>>, vector<1x1024xf32>
    %4 = vector.broadcast %3 : vector<1x1024xf32> to vector<8x1024xf32>
    %5 = arith.addf %2, %4 : vector<8x1024xf32>
    %cst_5 = arith.constant 0.000000e+00 : f32
    %6 = vector.broadcast %cst_5 : f32 to vector<8x1024xf32>
    %7 = arith.maximumf %5, %6 : vector<8x1024xf32>
    %8 = arith.truncf %7 : vector<8x1024xf32> to vector<8x1024xbf16>
    %c0_6 = arith.constant 0 : index
    %c0_7 = arith.constant 0 : index
    %9 = vector.load %arg4[%c0_6, %c0_7] : memref<1024x512xbf16, #tpu.memory_space<vmem>>, vector<1024x512xbf16>
    %cst_8 = arith.constant dense<0.000000e+00> : vector<8x512xf32>
    %10 = tpu.matmul %8, %9, %cst_8 {dimension_numbers = #tpu.dot_dimension_numbers<[1], [0], [0], [1], [0, 0, 1, 1], [], []>} : vector<8x1024xbf16>, vector<1024x512xbf16>, vector<8x512xf32> -> vector<8x512xf32>
    %c0_9 = arith.constant 0 : index
    %c0_10 = arith.constant 0 : index
    %11 = vector.load %arg5[%c0_9, %c0_10] : memref<1x512xf32, #tpu.memory_space<vmem>>, vector<1x512xf32>
    %12 = vector.broadcast %11 : vector<1x512xf32> to vector<8x512xf32>
    %13 = arith.addf %10, %12 : vector<8x512xf32>
    %cst_11 = arith.constant 0.000000e+00 : f32
    %14 = vector.broadcast %cst_11 : f32 to vector<8x512xf32>
    %15 = arith.maximumf %13, %14 : vector<8x512xf32>
    %16 = arith.truncf %15 : vector<8x512xf32> to vector<8x512xbf16>
    %c0_12 = arith.constant 0 : index
    %c0_13 = arith.constant 0 : index
    %17 = vector.load %arg6[%c0_12, %c0_13] : memref<512x256xbf16, #tpu.memory_space<vmem>>, vector<512x256xbf16>
    %cst_14 = arith.constant dense<0.000000e+00> : vector<8x256xf32>
    %18 = tpu.matmul %16, %17, %cst_14 {dimension_numbers = #tpu.dot_dimension_numbers<[1], [0], [0], [1], [0, 0, 1, 1], [], []>} : vector<8x512xbf16>, vector<512x256xbf16>, vector<8x256xf32> -> vector<8x256xf32>
    %c0_15 = arith.constant 0 : index
    %c0_16 = arith.constant 0 : index
    %19 = vector.load %arg7[%c0_15, %c0_16] : memref<1x256xf32, #tpu.memory_space<vmem>>, vector<1x256xf32>
    %20 = vector.broadcast %19 : vector<1x256xf32> to vector<8x256xf32>
    %21 = arith.addf %18, %20 : vector<8x256xf32>
    %cst_17 = arith.constant 0.000000e+00 : f32
    %22 = vector.broadcast %cst_17 : f32 to vector<8x256xf32>
    %23 = arith.maximumf %21, %22 : vector<8x256xf32>
    %24 = arith.truncf %23 : vector<8x256xf32> to vector<8x256xbf16>
    %c0_18 = arith.constant 0 : index
    %c0_19 = arith.constant 0 : index
    %25 = vector.load %arg8[%c0_18, %c0_19] : memref<256x256xbf16, #tpu.memory_space<vmem>>, vector<256x256xbf16>
    %cst_20 = arith.constant dense<0.000000e+00> : vector<8x256xf32>
    %26 = tpu.matmul %24, %25, %cst_20 {dimension_numbers = #tpu.dot_dimension_numbers<[1], [0], [0], [1], [0, 0, 1, 1], [], []>} : vector<8x256xbf16>, vector<256x256xbf16>, vector<8x256xf32> -> vector<8x256xf32>
    %c0_21 = arith.constant 0 : index
    %c0_22 = arith.constant 0 : index
    %27 = vector.load %arg9[%c0_21, %c0_22] : memref<1x256xf32, #tpu.memory_space<vmem>>, vector<1x256xf32>
    %28 = vector.broadcast %27 : vector<1x256xf32> to vector<8x256xf32>
    %29 = arith.addf %26, %28 : vector<8x256xf32>
    %cst_23 = arith.constant 0.000000e+00 : f32
    %30 = vector.broadcast %cst_23 : f32 to vector<8x256xf32>
    %31 = arith.maximumf %29, %30 : vector<8x256xf32>
    %32 = arith.truncf %31 : vector<8x256xf32> to vector<8x256xbf16>
    %c0_24 = arith.constant 0 : index
    %c0_25 = arith.constant 0 : index
    %33 = vector.load %arg10[%c0_24, %c0_25] : memref<256x128xbf16, #tpu.memory_space<vmem>>, vector<256x128xbf16>
    %cst_26 = arith.constant dense<0.000000e+00> : vector<8x128xf32>
    %34 = tpu.matmul %32, %33, %cst_26 {dimension_numbers = #tpu.dot_dimension_numbers<[1], [0], [0], [1], [0, 0, 1, 1], [], []>} : vector<8x256xbf16>, vector<256x128xbf16>, vector<8x128xf32> -> vector<8x128xf32>
    %c0_27 = arith.constant 0 : index
    %c0_28 = arith.constant 0 : index
    %35 = vector.load %arg11[%c0_27, %c0_28] : memref<1x128xf32, #tpu.memory_space<vmem>>, vector<1x128xf32>
    %36 = vector.broadcast %35 : vector<1x128xf32> to vector<8x128xf32>
    %37 = arith.addf %34, %36 : vector<8x128xf32>
    %cst_29 = arith.constant 0.000000e+00 : f32
    %38 = vector.broadcast %cst_29 : f32 to vector<8x128xf32>
    %39 = arith.maximumf %37, %38 : vector<8x128xf32>
    %40 = arith.truncf %39 : vector<8x128xf32> to vector<8x128xbf16>
    %c0_30 = arith.constant 0 : index
    %c0_31 = arith.constant 0 : index
    %41 = vector.load %arg12[%c0_30, %c0_31] : memref<128x128xbf16, #tpu.memory_space<vmem>>, vector<128x128xbf16>
    %cst_32 = arith.constant dense<0.000000e+00> : vector<8x128xf32>
    %42 = tpu.matmul %40, %41, %cst_32 {dimension_numbers = #tpu.dot_dimension_numbers<[1], [0], [0], [1], [0, 0, 1, 1], [], []>} : vector<8x128xbf16>, vector<128x128xbf16>, vector<8x128xf32> -> vector<8x128xf32>
    %c0_33 = arith.constant 0 : index
    %c0_34 = arith.constant 0 : index
    %43 = vector.load %arg13[%c0_33, %c0_34] : memref<1x128xf32, #tpu.memory_space<vmem>>, vector<1x128xf32>
    %44 = vector.broadcast %43 : vector<1x128xf32> to vector<8x128xf32>
    %45 = arith.mulf %42, %44 : vector<8x128xf32>
    %c0_35 = arith.constant 0 : index
    %c0_36 = arith.constant 0 : index
    %46 = vector.load %arg14[%c0_35, %c0_36] : memref<1x128xf32, #tpu.memory_space<vmem>>, vector<1x128xf32>
    %47 = vector.broadcast %46 : vector<1x128xf32> to vector<8x128xf32>
    %48 = arith.addf %45, %47 : vector<8x128xf32>
    %c0_37 = arith.constant 0 : index
    %c0_38 = arith.constant 0 : index
    %49 = vector.load %arg15[%c0_37, %c0_38] : memref<8x128xf32, #tpu.memory_space<vmem>>, vector<8x128xf32>
    tpu.vector_store %arg15[%c0_37, %c0_38], %48 {strides = array<i32>} : memref<8x128xf32, #tpu.memory_space<vmem>>, vector<8x128xf32>,
    return
  }
  func.func @transform_0(%arg0: i32) -> (i32, i32) {
    %c0_i32 = arith.constant 0 : i32
    %c0_i32_0 = arith.constant 0 : i32
    return %arg0, %c0_i32 : i32, i32
  }
  func.func @transform_1(%arg0: i32) -> (i32, i32) {
    %c0_i32 = arith.constant 0 : i32
    %c0_i32_0 = arith.constant 0 : i32
    %c0_i32_1 = arith.constant 0 : i32
    return %c0_i32, %c0_i32_0 : i32, i32
  }
  func.func @transform_2(%arg0: i32) -> (i32, i32) {
    %c0_i32 = arith.constant 0 : i32
    %c0_i32_0 = arith.constant 0 : i32
    %c0_i32_1 = arith.constant 0 : i32
    return %c0_i32, %c0_i32_0 : i32, i32
  }
  func.func @transform_3(%arg0: i32) -> (i32, i32) {
    %c0_i32 = arith.constant 0 : i32
    %c0_i32_0 = arith.constant 0 : i32
    %c0_i32_1 = arith.constant 0 : i32
    return %c0_i32, %c0_i32_0 : i32, i32
  }
  func.func @transform_4(%arg0: i32) -> (i32, i32) {
    %c0_i32 = arith.constant 0 : i32
    %c0_i32_0 = arith.constant 0 : i32
    %c0_i32_1 = arith.constant 0 : i32
    return %c0_i32, %c0_i32_0 : i32, i32
  }
  func.func @transform_5(%arg0: i32) -> (i32, i32) {
    %c0_i32 = arith.constant 0 : i32
    %c0_i32_0 = arith.constant 0 : i32
    %c0_i32_1 = arith.constant 0 : i32
    return %c0_i32, %c0_i32_0 : i32, i32
  }
  func.func @transform_6(%arg0: i32) -> (i32, i32) {
    %c0_i32 = arith.constant 0 : i32
    %c0_i32_0 = arith.constant 0 : i32
    %c0_i32_1 = arith.constant 0 : i32
    return %c0_i32, %c0_i32_0 : i32, i32
  }
  func.func @transform_7(%arg0: i32) -> (i32, i32) {
    %c0_i32 = arith.constant 0 : i32
    %c0_i32_0 = arith.constant 0 : i32
    %c0_i32_1 = arith.constant 0 : i32
    return %c0_i32, %c0_i32_0 : i32, i32
  }
  func.func @transform_8(%arg0: i32) -> (i32, i32) {
    %c0_i32 = arith.constant 0 : i32
    %c0_i32_0 = arith.constant 0 : i32
    %c0_i32_1 = arith.constant 0 : i32
    return %c0_i32, %c0_i32_0 : i32, i32
  }
  func.func @transform_9(%arg0: i32) -> (i32, i32) {
    %c0_i32 = arith.constant 0 : i32
    %c0_i32_0 = arith.constant 0 : i32
    %c0_i32_1 = arith.constant 0 : i32
    return %c0_i32, %c0_i32_0 : i32, i32
  }
  func.func @transform_10(%arg0: i32) -> (i32, i32) {
    %c0_i32 = arith.constant 0 : i32
    %c0_i32_0 = arith.constant 0 : i32
    %c0_i32_1 = arith.constant 0 : i32
    return %c0_i32, %c0_i32_0 : i32, i32
  }
  func.func @transform_11(%arg0: i32) -> (i32, i32) {
    %c0_i32 = arith.constant 0 : i32
    %c0_i32_0 = arith.constant 0 : i32
    %c0_i32_1 = arith.constant 0 : i32
    return %c0_i32, %c0_i32_0 : i32, i32
  }
  func.func @transform_12(%arg0: i32) -> (i32, i32) {
    %c0_i32 = arith.constant 0 : i32
    %c0_i32_0 = arith.constant 0 : i32
    %c0_i32_1 = arith.constant 0 : i32
    return %c0_i32, %c0_i32_0 : i32, i32
  }
  func.func @transform_13(%arg0: i32) -> (i32, i32) {
    %c0_i32 = arith.constant 0 : i32
    %c0_i32_0 = arith.constant 0 : i32
    %c0_i32_1 = arith.constant 0 : i32
    return %c0_i32, %c0_i32_0 : i32, i32
  }
  func.func @transform_14(%arg0: i32) -> (i32, i32) {
    %c0_i32 = arith.constant 0 : i32
    %c0_i32_0 = arith.constant 0 : i32
    return %arg0, %c0_i32 : i32, i32
  }
}

</mosaic_0001>

<llo_original>
// kernel: tpu_custom_call.1
$region0: #{tpu_custom_call.1}
  #allocation0 [shape = 'u32[]', space=smem, size = 0x4, offset = 0x4, fixed_abs, tag = 'smem constant byte address 0x4 - core index']
  #allocation1 [shape = 'u32[144,128]{1,0:T(1,128)}', space=vmem, size = 0x12000, scoped, tag = 'internal scratch']
  %s0 = inlined_call_operand.hbm [shape: bf16[8,256], index: 0, kind: input, shape index: {}]
  %s1 = inlined_call_operand.hbm [shape: bf16[256,1024], index: 1, kind: input, shape index: {}]
  %s2 = inlined_call_operand.hbm [shape: f32[1,1024], index: 2, kind: input, shape index: {}]
  %s3 = inlined_call_operand.hbm [shape: bf16[1024,512], index: 3, kind: input, shape index: {}]
  %s4 = inlined_call_operand.vmem [shape: f32[1,512], index: 4, kind: input, shape index: {}]
  %s5 = inlined_call_operand.hbm [shape: bf16[512,256], index: 5, kind: input, shape index: {}]
  %s6 = inlined_call_operand.vmem [shape: f32[1,256], index: 6, kind: input, shape index: {}]
  %s7 = inlined_call_operand.hbm [shape: bf16[256,256], index: 7, kind: input, shape index: {}]
  %s8 = inlined_call_operand.vmem [shape: f32[1,256], index: 8, kind: input, shape index: {}]
  %s9 = inlined_call_operand.hbm [shape: bf16[256,128], index: 9, kind: input, shape index: {}]
  %s10 = inlined_call_operand.vmem [shape: f32[1,128], index: 10, kind: input, shape index: {}]
  %s11 = inlined_call_operand.hbm [shape: bf16[128,128], index: 11, kind: input, shape index: {}]
  %s12 = inlined_call_operand.vmem [shape: f32[1,128], index: 12, kind: input, shape index: {}]
  %s13 = inlined_call_operand.vmem [shape: f32[1,128], index: 13, kind: input, shape index: {}]
  %s14 = inlined_call_operand.hbm [shape: f32[8,128], index: 14, kind: output, shape index: {}]
  %s15 = sld [smem:[#allocation0]]
  $region98: #{tpu_custom_call.1} parent=0
    _
  %s17 = ssub.s32 1, %s15
  %s18 = scalar_select 0, %s17, %s15
  $region1: #{tpu_custom_call.1} parent=0
    #allocation2 [shape = 'u8[4096]{0}', space=vmem, size = 0x1000, scoped, tag = 'input window, operand 0, single buffered']
    #allocation3 [shape = 's32[1]{0}', space=sflag, size = 0x4, scoped, tag = 'scoped memory for tpu_custom_call.1']
    #allocation4 [shape = 's32[1]{0}', space=sflag, size = 0x4, scoped, tag = 'scoped memory for tpu_custom_call.1']
    #allocation5 [shape = 'u8[524288]{0}', space=vmem, size = 0x80000, scoped, tag = 'input window, operand 1, single buffered']
    #allocation6 [shape = 's32[1]{0}', space=sflag, size = 0x4, scoped, tag = 'scoped memory for tpu_custom_call.1']
    #allocation7 [shape = 'u8[4096]{0}', space=vmem, size = 0x1000, scoped, tag = 'input window, operand 2, single buffered']
    #allocation8 [shape = 'u8[1048576]{0}', space=vmem, size = 0x100000, scoped, tag = 'input window, operand 3, single buffered']
    #allocation9 [shape = 's32[1]{0}', space=sflag, size = 0x4, scoped, tag = 'scoped memory for tpu_custom_call.1']
    #allocation10 [shape = 'u8[262144]{0}', space=vmem, size = 0x40000, scoped, tag = 'input window, operand 5, single buffered']
    #allocation11 [shape = 'u8[131072]{0}', space=vmem, size = 0x20000, scoped, tag = 'input window, operand 7, single buffered']
    #allocation12 [shape = 's32[1]{0}', space=sflag, size = 0x4, scoped, tag = 'scoped memory for tpu_custom_call.1']
    #allocation13 [shape = 'u8[65536]{0}', space=vmem, size = 0x10000, scoped, tag = 'input window, operand 9, single buffered']
    #allocation14 [shape = 'u8[32768]{0}', space=vmem, size = 0x8000, scoped, tag = 'input window, operand 11, single buffered']
    #allocation15 [shape = 's32[1]{0}', space=sflag, size = 0x4, scoped, tag = 'scoped memory for tpu_custom_call.1']
    #allocation16 [shape = 'u8[4096]{0}', space=vmem, size = 0x1000, scoped, tag = 'output window, operand 0, single buffered']
    %19 = vsyncpa [#allocation3], 0
    %20 = vsyncpa [#allocation6], 0
    %21 = vsyncpa [#allocation9], 0
    %22 = vsyncpa [#allocation12], 0
    %23 = vsyncpa [#allocation15], 0
    %24 = vsyncpa [#allocation4], 0
    // Predicated region
    $region2: #{tpu_custom_call.1} parent=1 // pred_check
      _
    $region3: #{tpu_custom_call.1} parent=1 // pred_check_branch
      %26 = sbr.rel (0) target = $region5
    $region4: #{tpu_custom_call.1} parent=1 // pred_region
      %s28 = ssub.s32 128, 128
      %29 = vsyncadd [#allocation3], %s28
      %s31 = sshll.u32 [#allocation2], 4
      %s32 = int_to_ptr.vmem [resolvable:$true] %s31
      %34 = dma.hbm_to_vmem [thread:$0]  %s0, 128, %s32, [#allocation3]
    $region5: #{tpu_custom_call.1} parent=1 // pred_fallthru
      _
    // Predicated region
    $region6: #{tpu_custom_call.1} parent=1 // pred_check
      _
    $region7: #{tpu_custom_call.1} parent=1 // pred_check_branch
      %36 = sbr.rel (0) target = $region9
    $region8: #{tpu_custom_call.1} parent=1 // pred_region
      %s38 = ssub.s32 16384, 16384
      %39 = vsyncadd [#allocation6], %s38
      %s40 = sshll.u32 [#allocation5], 4
      %s41 = int_to_ptr.vmem [resolvable:$true] %s40
      %46 = dma.hbm_to_vmem [thread:$0]  %s1, 16384, %s41, [#allocation6], 512, 512, 32
    $region9: #{tpu_custom_call.1} parent=1 // pred_fallthru
      _
    // Predicated region
    $region10: #{tpu_custom_call.1} parent=1 // pred_check
      _
    $region11: #{tpu_custom_call.1} parent=1 // pred_check_branch
      %48 = sbr.rel (0) target = $region13
    $region12: #{tpu_custom_call.1} parent=1 // pred_region
      %s50 = ssub.s32 128, 128
      %51 = vsyncadd [#allocation6], %s50
      %s53 = sshll.u32 [#allocation7], 4
      %s54 = int_to_ptr.vmem [resolvable:$true] %s53
      %56 = dma.hbm_to_vmem [thread:$0]  %s2, 128, %s54, [#allocation6]
    $region13: #{tpu_custom_call.1} parent=1 // pred_fallthru
      _
    // Predicated region
    $region14: #{tpu_custom_call.1} parent=1 // pred_check
      _
    $region15: #{tpu_custom_call.1} parent=1 // pred_check_branch
      %58 = sbr.rel (0) target = $region17
    $region16: #{tpu_custom_call.1} parent=1 // pred_region
      %s60 = ssub.s32 32768, 32768
      %61 = vsyncadd [#allocation9], %s60
      %s62 = sshll.u32 [#allocation8], 4
      %s63 = int_to_ptr.vmem [resolvable:$true] %s62
      %68 = dma.hbm_to_vmem [thread:$0]  %s3, 32768, %s63, [#allocation9], 256, 256, 16
    $region17: #{tpu_custom_call.1} parent=1 // pred_fallthru
      _
    // Predicated region
    $region18: #{tpu_custom_call.1} parent=1 // pred_check
      _
    $region19: #{tpu_custom_call.1} parent=1 // pred_check_branch
      %70 = sbr.rel (0) target = $region21
    $region20: #{tpu_custom_call.1} parent=1 // pred_region
      _
    $region21: #{tpu_custom_call.1} parent=1 // pred_fallthru
      _
    // Predicated region
    $region22: #{tpu_custom_call.1} parent=1 // pred_check
      _
    $region23: #{tpu_custom_call.1} parent=1 // pred_check_branch
      %72 = sbr.rel (0) target = $region25
    $region24: #{tpu_custom_call.1} parent=1 // pred_region
      %s74 = ssub.s32 8192, 8192
      %75 = vsyncadd [#allocation9], %s74
      %s76 = sshll.u32 [#allocation10], 4
      %s77 = int_to_ptr.vmem [resolvable:$true] %s76
      %82 = dma.hbm_to_vmem [thread:$0]  %s5, 8192, %s77, [#allocation9], 128, 128, 8
    $region25: #{tpu_custom_call.1} parent=1 // pred_fallthru
      _
    // Predicated region
    $region26: #{tpu_custom_call.1} parent=1 // pred_check
      _
    $region27: #{tpu_custom_call.1} parent=1 // pred_check_branch
      %84 = sbr.rel (0) target = $region29
    $region28: #{tpu_custom_call.1} parent=1 // pred_region
      _
    $region29: #{tpu_custom_call.1} parent=1 // pred_fallthru
      _
    // Predicated region
    $region30: #{tpu_custom_call.1} parent=1 // pred_check
      _
    $region31: #{tpu_custom_call.1} parent=1 // pred_check_branch
      %86 = sbr.rel (0) target = $region33
    $region32: #{tpu_custom_call.1} parent=1 // pred_region
      %s88 = ssub.s32 4096, 4096
      %89 = vsyncadd [#allocation12], %s88
      %s90 = sshll.u32 [#allocation11], 4
      %s91 = int_to_ptr.vmem [resolvable:$true] %s90
      %96 = dma.hbm_to_vmem [thread:$0]  %s7, 4096, %s91, [#allocation12], 128, 128, 8
    $region33: #{tpu_custom_call.1} parent=1 // pred_fallthru
      _
    // Predicated region
    $region34: #{tpu_custom_call.1} parent=1 // pred_check
      _
    $region35: #{tpu_custom_call.1} parent=1 // pred_check_branch
      %98 = sbr.rel (0) target = $region37
    $region36: #{tpu_custom_call.1} parent=1 // pred_region
      _
    $region37: #{tpu_custom_call.1} parent=1 // pred_fallthru
      _
    // Predicated region
    $region38: #{tpu_custom_call.1} parent=1 // pred_check
      _
    $region39: #{tpu_custom_call.1} parent=1 // pred_check_branch
      %100 = sbr.rel (0) target = $region41
    $region40: #{tpu_custom_call.1} parent=1 // pred_region
      %s102 = ssub.s32 2048, 2048
      %103 = vsyncadd [#allocation12], %s102
      %s104 = sshll.u32 [#allocation13], 4
      %s105 = int_to_ptr.vmem [resolvable:$true] %s104
      %110 = dma.hbm_to_vmem [thread:$0]  %s9, 2048, %s105, [#allocation12], 64, 64, 4
    $region41: #{tpu_custom_call.1} parent=1 // pred_fallthru
      _
    // Predicated region
    $region42: #{tpu_custom_call.1} parent=1 // pred_check
      _
    $region43: #{tpu_custom_call.1} parent=1 // pred_check_branch
      %112 = sbr.rel (0) target = $region45
    $region44: #{tpu_custom_call.1} parent=1 // pred_region
      _
    $region45: #{tpu_custom_call.1} parent=1 // pred_fallthru
      _
    // Predicated region
    $region46: #{tpu_custom_call.1} parent=1 // pred_check
      _
    $region47: #{tpu_custom_call.1} parent=1 // pred_check_branch
      %114 = sbr.rel (0) target = $region49
    $region48: #{tpu_custom_call.1} parent=1 // pred_region
      %s116 = ssub.s32 1024, 1024
      %117 = vsyncadd [#allocation15], %s116
      %s118 = sshll.u32 [#allocation14], 4
      %s119 = int_to_ptr.vmem [resolvable:$true] %s118
      %124 = dma.hbm_to_vmem [thread:$0]  %s11, 1024, %s119, [#allocation15], 64, 64, 4
    $region49: #{tpu_custom_call.1} parent=1 // pred_fallthru
      _
    // Predicated region
    $region50: #{tpu_custom_call.1} parent=1 // pred_check
      _
    $region51: #{tpu_custom_call.1} parent=1 // pred_check_branch
      %126 = sbr.rel (0) target = $region53
    $region52: #{tpu_custom_call.1} parent=1 // pred_region
      _
    $region53: #{tpu_custom_call.1} parent=1 // pred_fallthru
      _
    // Predicated region
    $region54: #{tpu_custom_call.1} parent=1 // pred_check
      _
    $region55: #{tpu_custom_call.1} parent=1 // pred_check_branch
      %128 = sbr.rel (0) target = $region57
    $region56: #{tpu_custom_call.1} parent=1 // pred_region
      _
    $region57: #{tpu_custom_call.1} parent=1 // pred_fallthru
      _
    // Predicated region
    $region58: #{tpu_custom_call.1} parent=1 // pred_check
      _
    $region59: #{tpu_custom_call.1} parent=1 // pred_check_branch
      %130 = sbr.rel (0) target = $region61
    $region60: #{tpu_custom_call.1} parent=1 // pred_region
      %131 = dma.done [#allocation3], 128
    $region61: #{tpu_custom_call.1} parent=1 // pred_fallthru
      _
    // Predicated region
    $region62: #{tpu_custom_call.1} parent=1 // pred_check
      _
    $region63: #{tpu_custom_call.1} parent=1 // pred_check_branch
      %133 = sbr.rel (0) target = $region65
    $region64: #{tpu_custom_call.1} parent=1 // pred_region
      %134 = dma.done [#allocation6], 16384
    $region65: #{tpu_custom_call.1} parent=1 // pred_fallthru
      _
    // Predicated region
    $region66: #{tpu_custom_call.1} parent=1 // pred_check
      _
    $region67: #{tpu_custom_call.1} parent=1 // pred_check_branch
      %136 = sbr.rel (0) target = $region69
    $region68: #{tpu_custom_call.1} parent=1 // pred_region
      %137 = dma.done [#allocation6], 128
    $region69: #{tpu_custom_call.1} parent=1 // pred_fallthru
      _
    // Predicated region
    $region70: #{tpu_custom_call.1} parent=1 // pred_check
      _
    $region71: #{tpu_custom_call.1} parent=1 // pred_check_branch
      %139 = sbr.rel (0) target = $region73
    $region72: #{tpu_custom_call.1} parent=1 // pred_region
      %140 = dma.done [#allocation9], 32768
    $region73: #{tpu_custom_call.1} parent=1 // pred_fallthru
      _
    // Predicated region
    $region74: #{tpu_custom_call.1} parent=1 // pred_check
      _
    $region75: #{tpu_custom_call.1} parent=1 // pred_check_branch
      %142 = sbr.rel (0) target = $region77
    $region76: #{tpu_custom_call.1} parent=1 // pred_region
      %143 = dma.done [#allocation9], 8192
    $region77: #{tpu_custom_call.1} parent=1 // pred_fallthru
      _
    // Predicated region
    $region78: #{tpu_custom_call.1} parent=1 // pred_check
      _
    $region79: #{tpu_custom_call.1} parent=1 // pred_check_branch
      %145 = sbr.rel (0) target = $region81
    $region80: #{tpu_custom_call.1} parent=1 // pred_region
      %146 = dma.done [#allocation12], 4096
    $region81: #{tpu_custom_call.1} parent=1 // pred_fallthru
      _
    // Predicated region
    $region82: #{tpu_custom_call.1} parent=1 // pred_check
      _
    $region83: #{tpu_custom_call.1} parent=1 // pred_check_branch
      %148 = sbr.rel (0) target = $region85
    $region84: #{tpu_custom_call.1} parent=1 // pred_region
      %149 = dma.done [#allocation12], 2048
    $region85: #{tpu_custom_call.1} parent=1 // pred_fallthru
      _
    // Predicated region
    $region86: #{tpu_custom_call.1} parent=1 // pred_check
      _
    $region87: #{tpu_custom_call.1} parent=1 // pred_check_branch
      %151 = sbr.rel (0) target = $region89
    $region88: #{tpu_custom_call.1} parent=1 // pred_region
      %152 = dma.done [#allocation15], 1024
    $region89: #{tpu_custom_call.1} parent=1 // pred_fallthru
      _
    %v154 = vld [vmem:[#allocation2] sm:$0xff]
    %v155 = vld [vmem:[#allocation5] sm:$0xff]
    %v156 = vld [vmem:[#allocation5 + $0x8] sm:$0xff]
    %v157 = vld [vmem:[#allocation5 + $0x10] sm:$0xff]
    %v158 = vld [vmem:[#allocation5 + $0x18] sm:$0xff]
    %v159 = vld [vmem:[#allocation5 + $0x20] sm:$0xff]
    %v160 = vld [vmem:[#allocation5 + $0x28] sm:$0xff]
    %v161 = vld [vmem:[#allocation5 + $0x30] sm:$0xff]
    %v162 = vld [vmem:[#allocation5 + $0x38] sm:$0xff]
    %v163 = vld [vmem:[#allocation5 + $0x40] sm:$0xff]
    %v164 = vld [vmem:[#allocation5 + $0x48] sm:$0xff]
    %v165 = vld [vmem:[#allocation5 + $0x50] sm:$0xff]
    %v166 = vld [vmem:[#allocation5 + $0x58] sm:$0xff]
    %v167 = vld [vmem:[#allocation5 + $0x60] sm:$0xff]
    %v168 = vld [vmem:[#allocation5 + $0x68] sm:$0xff]
    %v169 = vld [vmem:[#allocation5 + $0x70] sm:$0xff]
    %v170 = vld [vmem:[#allocation5 + $0x78] sm:$0xff]
    %v171 = vld [vmem:[#allocation5 + $0x80] sm:$0xff]
    %v172 = vld [vmem:[#allocation5 + $0x88] sm:$0xff]
    %v173 = vld [vmem:[#allocation5 + $0x90] sm:$0xff]
    %v174 = vld [vmem:[#allocation5 + $0x98] sm:$0xff]
    %v175 = vld [vmem:[#allocation5 + $0xa0] sm:$0xff]
    %v176 = vld [vmem:[#allocation5 + $0xa8] sm:$0xff]
    %v177 = vld [vmem:[#allocation5 + $0xb0] sm:$0xff]
    %v178 = vld [vmem:[#allocation5 + $0xb8] sm:$0xff]
    %v179 = vld [vmem:[#allocation5 + $0xc0] sm:$0xff]
    %v180 = vld [vmem:[#allocation5 + $0xc8] sm:$0xff]
    %v181 = vld [vmem:[#allocation5 + $0xd0] sm:$0xff]
    %v182 = vld [vmem:[#allocation5 + $0xd8] sm:$0xff]
    %v183 = vld [vmem:[#allocation5 + $0xe0] sm:$0xff]
    %v184 = vld [vmem:[#allocation5 + $0xe8] sm:$0xff]
    %v185 = vld [vmem:[#allocation5 + $0xf0] sm:$0xff]
    %v186 = vld [vmem:[#allocation5 + $0xf8] sm:$0xff]
    %v187 = vld [vmem:[#allocation5 + $0x100] sm:$0xff]
    %v188 = vld [vmem:[#allocation5 + $0x108] sm:$0xff]
    %v189 = vld [vmem:[#allocation5 + $0x110] sm:$0xff]
    %v190 = vld [vmem:[#allocation5 + $0x118] sm:$0xff]
    %v191 = vld [vmem:[#allocation5 + $0x120] sm:$0xff]
    %v192 = vld [vmem:[#allocation5 + $0x128] sm:$0xff]
    %v193 = vld [vmem:[#allocation5 + $0x130] sm:$0xff]
    %v194 = vld [vmem:[#allocation5 + $0x138] sm:$0xff]
    %v195 = vld [vmem:[#allocation5 + $0x140] sm:$0xff]
    %v196 = vld [vmem:[#allocation5 + $0x148] sm:$0xff]
    %v197 = vld [vmem:[#allocation5 + $0x150] sm:$0xff]
    %v198 = vld [vmem:[#allocation5 + $0x158] sm:$0xff]
    %v199 = vld [vmem:[#allocation5 + $0x160] sm:$0xff]
    %v200 = vld [vmem:[#allocation5 + $0x168] sm:$0xff]
    %v201 = vld [vmem:[#allocation5 + $0x170] sm:$0xff]
    %v202 = vld [vmem:[#allocation5 + $0x178] sm:$0xff]
    %v203 = vld [vmem:[#allocation5 + $0x180] sm:$0xff]
    %v204 = vld [vmem:[#allocation5 + $0x188] sm:$0xff]
    %v205 = vld [vmem:[#allocation5 + $0x190] sm:$0xff]
    %v206 = vld [vmem:[#allocation5 + $0x198] sm:$0xff]
    %v207 = vld [vmem:[#allocation5 + $0x1a0] sm:$0xff]
    %v208 = vld [vmem:[#allocation5 + $0x1a8] sm:$0xff]
    %v209 = vld [vmem:[#allocation5 + $0x1b0] sm:$0xff]
    %v210 = vld [vmem:[#allocation5 + $0x1b8] sm:$0xff]
    %v211 = vld [vmem:[#allocation5 + $0x1c0] sm:$0xff]
    %v212 = vld [vmem:[#allocation5 + $0x1c8] sm:$0xff]
    %v213 = vld [vmem:[#allocation5 + $0x1d0] sm:$0xff]
    %v214 = vld [vmem:[#allocation5 + $0x1d8] sm:$0xff]
    %v215 = vld [vmem:[#allocation5 + $0x1e0] sm:$0xff]
    %v216 = vld [vmem:[#allocation5 + $0x1e8] sm:$0xff]
    %v217 = vld [vmem:[#allocation5 + $0x1f0] sm:$0xff]
    %v218 = vld [vmem:[#allocation5 + $0x1f8] sm:$0xff]
    %v219 = vld [vmem:[#allocation5 + $0x200] sm:$0xff]
    %v220 = vld [vmem:[#allocation5 + $0x208] sm:$0xff]
    %v221 = vld [vmem:[#allocation5 + $0x210] sm:$0xff]
    %v222 = vld [vmem:[#allocation5 + $0x218] sm:$0xff]
    %v223 = vld [vmem:[#allocation5 + $0x220] sm:$0xff]
    %v224 = vld [vmem:[#allocation5 + $0x228] sm:$0xff]
    %v225 = vld [vmem:[#allocation5 + $0x230] sm:$0xff]
    %v226 = vld [vmem:[#allocation5 + $0x238] sm:$0xff]
    %v227 = vld [vmem:[#allocation5 + $0x240] sm:$0xff]
    %v228 = vld [vmem:[#allocation5 + $0x248] sm:$0xff]
    %v229 = vld [vmem:[#allocation5 + $0x250] sm:$0xff]
    %v230 = vld [vmem:[#allocation5 + $0x258] sm:$0xff]
    %v231 = vld [vmem:[#allocation5 + $0x260] sm:$0xff]
    %v232 = vld [vmem:[#allocation5 + $0x268] sm:$0xff]
    %v233 = vld [vmem:[#allocation5 + $0x270] sm:$0xff]
    %v234 = vld [vmem:[#allocation5 + $0x278] sm:$0xff]
    %v235 = vld [vmem:[#allocation5 + $0x280] sm:$0xff]
    %v236 = vld [vmem:[#allocation5 + $0x288] sm:$0xff]
    %v237 = vld [vmem:[#allocation5 + $0x290] sm:$0xff]
    %v238 = vld [vmem:[#allocation5 + $0x298] sm:$0xff]
    %v239 = vld [vmem:[#allocation5 + $0x2a0] sm:$0xff]
    %v240 = vld [vmem:[#allocation5 + $0x2a8] sm:$0xff]
    %v241 = vld [vmem:[#allocation5 + $0x2b0] sm:$0xff]
    %v242 = vld [vmem:[#allocation5 + $0x2b8] sm:$0xff]
    %v243 = vld [vmem:[#allocation5 + $0x2c0] sm:$0xff]
    %v244 = vld [vmem:[#allocation5 + $0x2c8] sm:$0xff]
    %v245 = vld [vmem:[#allocation5 + $0x2d0] sm:$0xff]
    %v246 = vld [vmem:[#allocation5 + $0x2d8] sm:$0xff]
    %v247 = vld [vmem:[#allocation5 + $0x2e0] sm:$0xff]
    %v248 = vld [vmem:[#allocation5 + $0x2e8] sm:$0xff]
    %v249 = vld [vmem:[#allocation5 + $0x2f0] sm:$0xff]
    %v250 = vld [vmem:[#allocation5 + $0x2f8] sm:$0xff]
    %v251 = vld [vmem:[#allocation5 + $0x300] sm:$0xff]
    %v252 = vld [vmem:[#allocation5 + $0x308] sm:$0xff]
    %v253 = vld [vmem:[#allocation5 + $0x310] sm:$0xff]
    %v254 = vld [vmem:[#allocation5 + $0x318] sm:$0xff]
    %v255 = vld [vmem:[#allocation5 + $0x320] sm:$0xff]
    %v256 = vld [vmem:[#allocation5 + $0x328] sm:$0xff]
    %v257 = vld [vmem:[#allocation5 + $0x330] sm:$0xff]
    %v258 = vld [vmem:[#allocation5 + $0x338] sm:$0xff]
    %v259 = vld [vmem:[#allocation5 + $0x340] sm:$0xff]
    %v260 = vld [vmem:[#allocation5 + $0x348] sm:$0xff]
    %v261 = vld [vmem:[#allocation5 + $0x350] sm:$0xff]
    %v262 = vld [vmem:[#allocation5 + $0x358] sm:$0xff]
    %v263 = vld [vmem:[#allocation5 + $0x360] sm:$0xff]
    %v264 = vld [vmem:[#allocation5 + $0x368] sm:$0xff]
    %v265 = vld [vmem:[#allocation5 + $0x370] sm:$0xff]
    %v266 = vld [vmem:[#allocation5 + $0x378] sm:$0xff]
    %v267 = vld [vmem:[#allocation5 + $0x380] sm:$0xff]
    %v268 = vld [vmem:[#allocation5 + $0x388] sm:$0xff]
    %v269 = vld [vmem:[#allocation5 + $0x390] sm:$0xff]
    %v270 = vld [vmem:[#allocation5 + $0x398] sm:$0xff]
    %v271 = vld [vmem:[#allocation5 + $0x3a0] sm:$0xff]
    %v272 = vld [vmem:[#allocation5 + $0x3a8] sm:$0xff]
    %v273 = vld [vmem:[#allocation5 + $0x3b0] sm:$0xff]
    %v274 = vld [vmem:[#allocation5 + $0x3b8] sm:$0xff]
    %v275 = vld [vmem:[#allocation5 + $0x3c0] sm:$0xff]
    %v276 = vld [vmem:[#allocation5 + $0x3c8] sm:$0xff]
    %v277 = vld [vmem:[#allocation5 + $0x3d0] sm:$0xff]
    %v278 = vld [vmem:[#allocation5 + $0x3d8] sm:$0xff]
    %v279 = vld [vmem:[#allocation5 + $0x3e0] sm:$0xff]
    %v280 = vld [vmem:[#allocation5 + $0x3e8] sm:$0xff]
    %v281 = vld [vmem:[#allocation5 + $0x3f0] sm:$0xff]
    %v282 = vld [vmem:[#allocation5 + $0x3f8] sm:$0xff]
    %v283 = vld [vmem:[#allocation7] sm:$0xff]
    %v285 = vlaneseq
    %v286 = vshrl.u32 %v285, 7
    %v287 = vsub.s32 0, %v286
    %v288 = vrot.slane %v283, %v287
    %v289 = vlaneseq
    %v290 = vshrl.u32 %v289, 7
    %v291 = vsub.s32 1, %v290
    %v292 = vrot.slane %v283, %v291
    %v293 = vlaneseq
    %v294 = vshrl.u32 %v293, 7
    %v295 = vsub.s32 2, %v294
    %v296 = vrot.slane %v283, %v295
    %v297 = vlaneseq
    %v298 = vshrl.u32 %v297, 7
    %v299 = vsub.s32 3, %v298
    %v300 = vrot.slane %v283, %v299
    %v301 = vlaneseq
    %v302 = vshrl.u32 %v301, 7
    %v303 = vsub.s32 4, %v302
    %v304 = vrot.slane %v283, %v303
    %v305 = vlaneseq
    %v306 = vshrl.u32 %v305, 7
    %v307 = vsub.s32 5, %v306
    %v308 = vrot.slane %v283, %v307
    %v309 = vlaneseq
    %v310 = vshrl.u32 %v309, 7
    %v311 = vsub.s32 6, %v310
    %v312 = vrot.slane %v283, %v311
    %v313 = vlaneseq
    %v314 = vshrl.u32 %v313, 7
    %v315 = vsub.s32 7, %v314
    %v316 = vrot.slane %v283, %v315
    %v326 = vunpack.c.l.b16 %v154
    %v327 = vunpack.c.h.b16 %v154
    %v328 = vpack.c.b16 %v326, %v326
    %v329 = vpack.c.b16 %v327, %v327
    %v460 = vunpack.c.l.b16 %v155
    %v461 = vunpack.c.h.b16 %v155
    %v462 = vunpack.c.l.b16 %v156
    %v463 = vunpack.c.h.b16 %v156
    %v464 = vunpack.c.l.b16 %v157
    %v465 = vunpack.c.h.b16 %v157
    %v466 = vunpack.c.l.b16 %v158
    %v467 = vunpack.c.h.b16 %v158
    %v468 = vunpack.c.l.b16 %v159
    %v469 = vunpack.c.h.b16 %v159
    %v470 = vunpack.c.l.b16 %v160
    %v471 = vunpack.c.h.b16 %v160
    %v472 = vunpack.c.l.b16 %v161
    %v473 = vunpack.c.h.b16 %v161
    %v474 = vunpack.c.l.b16 %v162
    %v475 = vunpack.c.h.b16 %v162
    %v476 = vunpack.c.l.b16 %v163
    %v477 = vunpack.c.h.b16 %v163
    %v478 = vunpack.c.l.b16 %v164
    %v479 = vunpack.c.h.b16 %v164
    %v480 = vunpack.c.l.b16 %v165
    %v481 = vunpack.c.h.b16 %v165
    %v482 = vunpack.c.l.b16 %v166
    %v483 = vunpack.c.h.b16 %v166
    %v484 = vunpack.c.l.b16 %v167
    %v485 = vunpack.c.h.b16 %v167
    %v486 = vunpack.c.l.b16 %v168
    %v487 = vunpack.c.h.b16 %v168
    %v488 = vunpack.c.l.b16 %v169
    %v489 = vunpack.c.h.b16 %v169
    %v490 = vunpack.c.l.b16 %v170
    %v491 = vunpack.c.h.b16 %v170
    %v492 = vunpack.c.l.b16 %v171
    %v493 = vunpack.c.h.b16 %v171
    %v494 = vunpack.c.l.b16 %v172
    %v495 = vunpack.c.h.b16 %v172
    %v496 = vunpack.c.l.b16 %v173
    %v497 = vunpack.c.h.b16 %v173
    %v498 = vunpack.c.l.b16 %v174
    %v499 = vunpack.c.h.b16 %v174
    %v500 = vunpack.c.l.b16 %v175
    %v501 = vunpack.c.h.b16 %v175
    %v502 = vunpack.c.l.b16 %v176
    %v503 = vunpack.c.h.b16 %v176
    %v504 = vunpack.c.l.b16 %v177
    %v505 = vunpack.c.h.b16 %v177
    %v506 = vunpack.c.l.b16 %v178
    %v507 = vunpack.c.h.b16 %v178
    %v508 = vunpack.c.l.b16 %v179
    %v509 = vunpack.c.h.b16 %v179
    %v510 = vunpack.c.l.b16 %v180
    %v511 = vunpack.c.h.b16 %v180
    %v512 = vunpack.c.l.b16 %v181
    %v513 = vunpack.c.h.b16 %v181
    %v514 = vunpack.c.l.b16 %v182
    %v515 = vunpack.c.h.b16 %v182
    %v516 = vunpack.c.l.b16 %v183
    %v517 = vunpack.c.h.b16 %v183
    %v518 = vunpack.c.l.b16 %v184
    %v519 = vunpack.c.h.b16 %v184
    %v520 = vunpack.c.l.b16 %v185
    %v521 = vunpack.c.h.b16 %v185
    %v522 = vunpack.c.l.b16 %v186
    %v523 = vunpack.c.h.b16 %v186
    %v524 = vunpack.c.l.b16 %v187
    %v525 = vunpack.c.h.b16 %v187
    %v526 = vunpack.c.l.b16 %v188
    %v527 = vunpack.c.h.b16 %v188
    %v528 = vunpack.c.l.b16 %v189
    %v529 = vunpack.c.h.b16 %v189
    %v530 = vunpack.c.l.b16 %v190
    %v531 = vunpack.c.h.b16 %v190
    %v532 = vunpack.c.l.b16 %v191
    %v533 = vunpack.c.h.b16 %v191
    %v534 = vunpack.c.l.b16 %v192
    %v535 = vunpack.c.h.b16 %v192
    %v536 = vunpack.c.l.b16 %v193
    %v537 = vunpack.c.h.b16 %v193
    %v538 = vunpack.c.l.b16 %v194
    %v539 = vunpack.c.h.b16 %v194
    %v540 = vunpack.c.l.b16 %v195
    %v541 = vunpack.c.h.b16 %v195
    %v542 = vunpack.c.l.b16 %v196
    %v543 = vunpack.c.h.b16 %v196
    %v544 = vunpack.c.l.b16 %v197
    %v545 = vunpack.c.h.b16 %v197
    %v546 = vunpack.c.l.b16 %v198
    %v547 = vunpack.c.h.b16 %v198
    %v548 = vunpack.c.l.b16 %v199
    %v549 = vunpack.c.h.b16 %v199
    %v550 = vunpack.c.l.b16 %v200
    %v551 = vunpack.c.h.b16 %v200
    %v552 = vunpack.c.l.b16 %v201
    %v553 = vunpack.c.h.b16 %v201
    %v554 = vunpack.c.l.b16 %v202
    %v555 = vunpack.c.h.b16 %v202
    %v556 = vunpack.c.l.b16 %v203
    %v557 = vunpack.c.h.b16 %v203
    %v558 = vunpack.c.l.b16 %v204
    %v559 = vunpack.c.h.b16 %v204
    %v560 = vunpack.c.l.b16 %v205
    %v561 = vunpack.c.h.b16 %v205
    %v562 = vunpack.c.l.b16 %v206
    %v563 = vunpack.c.h.b16 %v206
    %v564 = vunpack.c.l.b16 %v207
    %v565 = vunpack.c.h.b16 %v207
    %v566 = vunpack.c.l.b16 %v208
    %v567 = vunpack.c.h.b16 %v208
    %v568 = vunpack.c.l.b16 %v209
    %v569 = vunpack.c.h.b16 %v209
    %v570 = vunpack.c.l.b16 %v210
    %v571 = vunpack.c.h.b16 %v210
    %v572 = vunpack.c.l.b16 %v211
    %v573 = vunpack.c.h.b16 %v211
    %v574 = vunpack.c.l.b16 %v212
    %v575 = vunpack.c.h.b16 %v212
    %v576 = vunpack.c.l.b16 %v213
    %v577 = vunpack.c.h.b16 %v213
    %v578 = vunpack.c.l.b16 %v214
    %v579 = vunpack.c.h.b16 %v214
    %v580 = vunpack.c.l.b16 %v215
    %v581 = vunpack.c.h.b16 %v215
    %v582 = vunpack.c.l.b16 %v216
    %v583 = vunpack.c.h.b16 %v216
    %v584 = vunpack.c.l.b16 %v217
    %v585 = vunpack.c.h.b16 %v217
    %v586 = vunpack.c.l.b16 %v218
    %v587 = vunpack.c.h.b16 %v218
    %v588 = vunpack.c.l.b16 %v219
    %v589 = vunpack.c.h.b16 %v219
    %v590 = vunpack.c.l.b16 %v220
    %v591 = vunpack.c.h.b16 %v220
    %v592 = vunpack.c.l.b16 %v221
    %v593 = vunpack.c.h.b16 %v221
    %v594 = vunpack.c.l.b16 %v222
    %v595 = vunpack.c.h.b16 %v222
    %v596 = vunpack.c.l.b16 %v223
    %v597 = vunpack.c.h.b16 %v223
    %v598 = vunpack.c.l.b16 %v224
    %v599 = vunpack.c.h.b16 %v224
    %v600 = vunpack.c.l.b16 %v225
    %v601 = vunpack.c.h.b16 %v225
    %v602 = vunpack.c.l.b16 %v226
    %v603 = vunpack.c.h.b16 %v226
    %v604 = vunpack.c.l.b16 %v227
    %v605 = vunpack.c.h.b16 %v227
    %v606 = vunpack.c.l.b16 %v228
    %v607 = vunpack.c.h.b16 %v228
    %v608 = vunpack.c.l.b16 %v229
    %v609 = vunpack.c.h.b16 %v229
    %v610 = vunpack.c.l.b16 %v230
    %v611 = vunpack.c.h.b16 %v230
    %v612 = vunpack.c.l.b16 %v231
    %v613 = vunpack.c.h.b16 %v231
    %v614 = vunpack.c.l.b16 %v232
    %v615 = vunpack.c.h.b16 %v232
    %v616 = vunpack.c.l.b16 %v233
    %v617 = vunpack.c.h.b16 %v233
    %v618 = vunpack.c.l.b16 %v234
    %v619 = vunpack.c.h.b16 %v234
    %v620 = vunpack.c.l.b16 %v235
    %v621 = vunpack.c.h.b16 %v235
    %v622 = vunpack.c.l.b16 %v236
    %v623 = vunpack.c.h.b16 %v236
    %v624 = vunpack.c.l.b16 %v237
    %v625 = vunpack.c.h.b16 %v237
    %v626 = vunpack.c.l.b16 %v238
    %v627 = vunpack.c.h.b16 %v238
    %v628 = vunpack.c.l.b16 %v239
    %v629 = vunpack.c.h.b16 %v239
    %v630 = vunpack.c.l.b16 %v240
    %v631 = vunpack.c.h.b16 %v240
    %v632 = vunpack.c.l.b16 %v241
    %v633 = vunpack.c.h.b16 %v241
    %v634 = vunpack.c.l.b16 %v242
    %v635 = vunpack.c.h.b16 %v242
    %v636 = vunpack.c.l.b16 %v243
    %v637 = vunpack.c.h.b16 %v243
    %v638 = vunpack.c.l.b16 %v244
    %v639 = vunpack.c.h.b16 %v244
    %v640 = vunpack.c.l.b16 %v245
    %v641 = vunpack.c.h.b16 %v245
    %v642 = vunpack.c.l.b16 %v246
    %v643 = vunpack.c.h.b16 %v246
    %v644 = vunpack.c.l.b16 %v247
    %v645 = vunpack.c.h.b16 %v247
    %v646 = vunpack.c.l.b16 %v248
    %v647 = vunpack.c.h.b16 %v248
    %v648 = vunpack.c.l.b16 %v249
    %v649 = vunpack.c.h.b16 %v249
    %v650 = vunpack.c.l.b16 %v250
    %v651 = vunpack.c.h.b16 %v250
    %v652 = vunpack.c.l.b16 %v251
    %v653 = vunpack.c.h.b16 %v251
    %v654 = vunpack.c.l.b16 %v252
    %v655 = vunpack.c.h.b16 %v252
    %v656 = vunpack.c.l.b16 %v253
    %v657 = vunpack.c.h.b16 %v253
    %v658 = vunpack.c.l.b16 %v254
    %v659 = vunpack.c.h.b16 %v254
    %v660 = vunpack.c.l.b16 %v255
    %v661 = vunpack.c.h.b16 %v255
    %v662 = vunpack.c.l.b16 %v256
    %v663 = vunpack.c.h.b16 %v256
    %v664 = vunpack.c.l.b16 %v257
    %v665 = vunpack.c.h.b16 %v257
    %v666 = vunpack.c.l.b16 %v258
    %v667 = vunpack.c.h.b16 %v258
    %v668 = vunpack.c.l.b16 %v259
    %v669 = vunpack.c.h.b16 %v259
    %v670 = vunpack.c.l.b16 %v260
    %v671 = vunpack.c.h.b16 %v260
    %v672 = vunpack.c.l.b16 %v261
    %v673 = vunpack.c.h.b16 %v261
    %v674 = vunpack.c.l.b16 %v262
    %v675 = vunpack.c.h.b16 %v262
    %v676 = vunpack.c.l.b16 %v263
    %v677 = vunpack.c.h.b16 %v263
    %v678 = vunpack.c.l.b16 %v264
    %v679 = vunpack.c.h.b16 %v264
    %v680 = vunpack.c.l.b16 %v265
    %v681 = vunpack.c.h.b16 %v265
    %v682 = vunpack.c.l.b16 %v266
    %v683 = vunpack.c.h.b16 %v266
    %v684 = vunpack.c.l.b16 %v267
    %v685 = vunpack.c.h.b16 %v267
    %v686 = vunpack.c.l.b16 %v268
    %v687 = vunpack.c.h.b16 %v268
    %v688 = vunpack.c.l.b16 %v269
    %v689 = vunpack.c.h.b16 %v269
    %v690 = vunpack.c.l.b16 %v270
    %v691 = vunpack.c.h.b16 %v270
    %v692 = vunpack.c.l.b16 %v271
    %v693 = vunpack.c.h.b16 %v271
    %v694 = vunpack.c.l.b16 %v272
    %v695 = vunpack.c.h.b16 %v272
    %v696 = vunpack.c.l.b16 %v273
    %v697 = vunpack.c.h.b16 %v273
    %v698 = vunpack.c.l.b16 %v274
    %v699 = vunpack.c.h.b16 %v274
    %v700 = vunpack.c.l.b16 %v275
    %v701 = vunpack.c.h.b16 %v275
    %v702 = vunpack.c.l.b16 %v276
    %v703 = vunpack.c.h.b16 %v276
    %v704 = vunpack.c.l.b16 %v277
    %v705 = vunpack.c.h.b16 %v277
    %v706 = vunpack.c.l.b16 %v278
    %v707 = vunpack.c.h.b16 %v278
    %v708 = vunpack.c.l.b16 %v279
    %v709 = vunpack.c.h.b16 %v279
    %v710 = vunpack.c.l.b16 %v280
    %v711 = vunpack.c.h.b16 %v280
    %v712 = vunpack.c.l.b16 %v281
    %v713 = vunpack.c.h.b16 %v281
    %v714 = vunpack.c.l.b16 %v282
    %v715 = vunpack.c.h.b16 %v282
    %v716 = vpack.c.b16 %v468, %v460
    %v717 = vpack.c.b16 %v469, %v461
    %v718 = vpack.c.b16 %v470, %v462
    %v719 = vpack.c.b16 %v471, %v463
    %v720 = vpack.c.b16 %v472, %v464
    %v721 = vpack.c.b16 %v473, %v465
    %v722 = vpack.c.b16 %v474, %v466
    %v723 = vpack.c.b16 %v475, %v467
    %v724 = vpack.c.b16 %v484, %v476
    %v725 = vpack.c.b16 %v485, %v477
    %v726 = vpack.c.b16 %v486, %v478
    %v727 = vpack.c.b16 %v487, %v479
    %v728 = vpack.c.b16 %v488, %v480
    %v729 = vpack.c.b16 %v489, %v481
    %v730 = vpack.c.b16 %v490, %v482
    %v731 = vpack.c.b16 %v491, %v483
    %v732 = vpack.c.b16 %v500, %v492
    %v733 = vpack.c.b16 %v501, %v493
    %v734 = vpack.c.b16 %v502, %v494
    %v735 = vpack.c.b16 %v503, %v495
    %v736 = vpack.c.b16 %v504, %v496
    %v737 = vpack.c.b16 %v505, %v497
    %v738 = vpack.c.b16 %v506, %v498
    %v739 = vpack.c.b16 %v507, %v499
    %v740 = vpack.c.b16 %v516, %v508
    %v741 = vpack.c.b16 %v517, %v509
    %v742 = vpack.c.b16 %v518, %v510
    %v743 = vpack.c.b16 %v519, %v511
    %v744 = vpack.c.b16 %v520, %v512
    %v745 = vpack.c.b16 %v521, %v513
    %v746 = vpack.c.b16 %v522, %v514
    %v747 = vpack.c.b16 %v523, %v515
    %v748 = vpack.c.b16 %v532, %v524
    %v749 = vpack.c.b16 %v533, %v525
    %v750 = vpack.c.b16 %v534, %v526
    %v751 = vpack.c.b16 %v535, %v527
    %v752 = vpack.c.b16 %v536, %v528
    %v753 = vpack.c.b16 %v537, %v529
    %v754 = vpack.c.b16 %v538, %v530
    %v755 = vpack.c.b16 %v539, %v531
    %v756 = vpack.c.b16 %v548, %v540
    %v757 = vpack.c.b16 %v549, %v541
    %v758 = vpack.c.b16 %v550, %v542
    %v759 = vpack.c.b16 %v551, %v543
    %v760 = vpack.c.b16 %v552, %v544
    %v761 = vpack.c.b16 %v553, %v545
    %v762 = vpack.c.b16 %v554, %v546
    %v763 = vpack.c.b16 %v555, %v547
    %v764 = vpack.c.b16 %v564, %v556
    %v765 = vpack.c.b16 %v565, %v557
    %v766 = vpack.c.b16 %v566, %v558
    %v767 = vpack.c.b16 %v567, %v559
    %v768 = vpack.c.b16 %v568, %v560
    %v769 = vpack.c.b16 %v569, %v561
    %v770 = vpack.c.b16 %v570, %v562
    %v771 = vpack.c.b16 %v571, %v563
    %v772 = vpack.c.b16 %v580, %v572
    %v773 = vpack.c.b16 %v581, %v573
    %v774 = vpack.c.b16 %v582, %v574
    %v775 = vpack.c.b16 %v583, %v575
    %v776 = vpack.c.b16 %v584, %v576
    %v777 = vpack.c.b16 %v585, %v577
    %v778 = vpack.c.b16 %v586, %v578
    %v779 = vpack.c.b16 %v587, %v579
    %v780 = vpack.c.b16 %v596, %v588
    %v781 = vpack.c.b16 %v597, %v589
    %v782 = vpack.c.b16 %v598, %v590
    %v783 = vpack.c.b16 %v599, %v591
    %v784 = vpack.c.b16 %v600, %v592
    %v785 = vpack.c.b16 %v601, %v593
    %v786 = vpack.c.b16 %v602, %v594
    %v787 = vpack.c.b16 %v603, %v595
    %v788 = vpack.c.b16 %v612, %v604
    %v789 = vpack.c.b16 %v613, %v605
    %v790 = vpack.c.b16 %v614, %v606
    %v791 = vpack.c.b16 %v615, %v607
    %v792 = vpack.c.b16 %v616, %v608
    %v793 = vpack.c.b16 %v617, %v609
    %v794 = vpack.c.b16 %v618, %v610
    %v795 = vpack.c.b16 %v619, %v611
    %v796 = vpack.c.b16 %v628, %v620
    %v797 = vpack.c.b16 %v629, %v621
    %v798 = vpack.c.b16 %v630, %v622
    %v799 = vpack.c.b16 %v631, %v623
    %v800 = vpack.c.b16 %v632, %v624
    %v801 = vpack.c.b16 %v633, %v625
    %v802 = vpack.c.b16 %v634, %v626
    %v803 = vpack.c.b16 %v635, %v627
    %v804 = vpack.c.b16 %v644, %v636
    %v805 = vpack.c.b16 %v645, %v637
    %v806 = vpack.c.b16 %v646, %v638
    %v807 = vpack.c.b16 %v647, %v639
    %v808 = vpack.c.b16 %v648, %v640
    %v809 = vpack.c.b16 %v649, %v641
    %v810 = vpack.c.b16 %v650, %v642
    %v811 = vpack.c.b16 %v651, %v643
    %v812 = vpack.c.b16 %v660, %v652
    %v813 = vpack.c.b16 %v661, %v653
    %v814 = vpack.c.b16 %v662, %v654
    %v815 = vpack.c.b16 %v663, %v655
    %v816 = vpack.c.b16 %v664, %v656
    %v817 = vpack.c.b16 %v665, %v657
    %v818 = vpack.c.b16 %v666, %v658
    %v819 = vpack.c.b16 %v667, %v659
    %v820 = vpack.c.b16 %v676, %v668
    %v821 = vpack.c.b16 %v677, %v669
    %v822 = vpack.c.b16 %v678, %v670
    %v823 = vpack.c.b16 %v679, %v671
    %v824 = vpack.c.b16 %v680, %v672
    %v825 = vpack.c.b16 %v681, %v673
    %v826 = vpack.c.b16 %v682, %v674
    %v827 = vpack.c.b16 %v683, %v675
    %v828 = vpack.c.b16 %v692, %v684
    %v829 = vpack.c.b16 %v693, %v685
    %v830 = vpack.c.b16 %v694, %v686
    %v831 = vpack.c.b16 %v695, %v687
    %v832 = vpack.c.b16 %v696, %v688
    %v833 = vpack.c.b16 %v697, %v689
    %v834 = vpack.c.b16 %v698, %v690
    %v835 = vpack.c.b16 %v699, %v691
    %v836 = vpack.c.b16 %v708, %v700
    %v837 = vpack.c.b16 %v709, %v701
    %v838 = vpack.c.b16 %v710, %v702
    %v839 = vpack.c.b16 %v711, %v703
    %v840 = vpack.c.b16 %v712, %v704
    %v841 = vpack.c.b16 %v713, %v705
    %v842 = vpack.c.b16 %v714, %v706
    %v843 = vpack.c.b16 %v715, %v707
    %972 = vmatprep.subr.bf16.mxu0 %v717
    %973 = vmatpush1.bf16.msra.mxu0 %v716
    %974 = vmatprep.subr.bf16.mxu0 %v725
    %975 = vmatpush1.bf16.msra.mxu0 %v724
    %976 = vmatprep.subr.bf16.mxu0 %v733
    %977 = vmatpush1.bf16.msra.mxu0 %v732
    %978 = vmatprep.subr.bf16.mxu0 %v741
    %979 = vmatpush1.bf16.msra.mxu0 %v740
    %980 = vmatprep.subr.bf16.mxu0 %v749
    %981 = vmatpush1.bf16.msra.mxu0 %v748
    %982 = vmatprep.subr.bf16.mxu0 %v757
    %983 = vmatpush1.bf16.msra.mxu0 %v756
    %984 = vmatprep.subr.bf16.mxu0 %v765
    %985 = vmatpush1.bf16.msra.mxu0 %v764
    %986 = vmatprep.subr.bf16.mxu0 %v773
    %987 = vmatpush1.bf16.msra.mxu0 %v772
    %988 = vmatprep.subr.bf16.mxu0 %v781
    %989 = vmatpush1.bf16.msra.mxu0 %v780
    %990 = vmatprep.subr.bf16.mxu0 %v789
    %991 = vmatpush1.bf16.msra.mxu0 %v788
    %992 = vmatprep.subr.bf16.mxu0 %v797
    %993 = vmatpush1.bf16.msra.mxu0 %v796
    %994 = vmatprep.subr.bf16.mxu0 %v805
    %995 = vmatpush1.bf16.msra.mxu0 %v804
    %996 = vmatprep.subr.bf16.mxu0 %v813
    %997 = vmatpush1.bf16.msra.mxu0 %v812
    %998 = vmatprep.subr.bf16.mxu0 %v821
    %999 = vmatpush1.bf16.msra.mxu0 %v820
    %1000 = vmatprep.subr.bf16.mxu0 %v829
    %1001 = vmatpush1.bf16.msra.mxu0 %v828
    %1002 = vmatprep.subr.bf16.mxu0 %v837
    %1003 = vmatpush1.bf16.msra.mxu0 %v836
    %1004 = vmatprep.mubr.bf16.mxu0 %v329
    %1005 = vmatmul.mubr.bf16.gmra.mrb[0].mxu0 %v328
    %v1006 = vpop.f32.mrb[0].mxu0
    %v1007 = vadd.f32 %v288, %v1006
    %v1008 = vpop.f32.mrb[0].mxu0
    %v1009 = vadd.f32 %v292, %v1008
    %v1010 = vpop.f32.mrb[0].mxu0
    %v1011 = vpop.f32.mrb[0].mxu0
    %1012 = vdwg.mxu0
    %1013 = vmatprep.subr.bf16.mxu0 %v719
    %1014 = vmatpush1.bf16.msra.mxu0 %v718
    %1015 = vmatprep.subr.bf16.mxu0 %v727
    %1016 = vmatpush1.bf16.msra.mxu0 %v726
    %1017 = vmatprep.subr.bf16.mxu0 %v735
    %1018 = vmatpush1.bf16.msra.mxu0 %v734
    %1019 = vmatprep.subr.bf16.mxu0 %v743
    %1020 = vmatpush1.bf16.msra.mxu0 %v742
    %1021 = vmatprep.subr.bf16.mxu0 %v751
    %1022 = vmatpush1.bf16.msra.mxu0 %v750
    %1023 = vmatprep.subr.bf16.mxu0 %v759
    %1024 = vmatpush1.bf16.msra.mxu0 %v758
    %1025 = vmatprep.subr.bf16.mxu0 %v767
    %1026 = vmatpush1.bf16.msra.mxu0 %v766
    %1027 = vmatprep.subr.bf16.mxu0 %v775
    %1028 = vmatpush1.bf16.msra.mxu0 %v774
    %1029 = vmatprep.subr.bf16.mxu0 %v783
    %1030 = vmatpush1.bf16.msra.mxu0 %v782
    %1031 = vmatprep.subr.bf16.mxu0 %v791
    %1032 = vmatpush1.bf16.msra.mxu0 %v790
    %1033 = vmatprep.subr.bf16.mxu0 %v799
    %1034 = vmatpush1.bf16.msra.mxu0 %v798
    %1035 = vmatprep.subr.bf16.mxu0 %v807
    %1036 = vmatpush1.bf16.msra.mxu0 %v806
    %1037 = vmatprep.subr.bf16.mxu0 %v815
    %1038 = vmatpush1.bf16.msra.mxu0 %v814
    %1039 = vmatprep.subr.bf16.mxu0 %v823
    %1040 = vmatpush1.bf16.msra.mxu0 %v822
    %1041 = vmatprep.subr.bf16.mxu0 %v831
    %1042 = vmatpush1.bf16.msra.mxu0 %v830
    %1043 = vmatprep.subr.bf16.mxu0 %v839
    %1044 = vmatpush1.bf16.msra.mxu0 %v838
    %1045 = vmatprep.mubr.bf16.mxu0 %v329
    %1046 = vmatmul.mubr.bf16.gmra.mrb[0].mxu0 %v328
    %v1047 = vpop.f32.mrb[0].mxu0
    %v1048 = vadd.f32 %v296, %v1047
    %v1049 = vpop.f32.mrb[0].mxu0
    %v1050 = vadd.f32 %v300, %v1049
    %v1051 = vpop.f32.mrb[0].mxu0
    %v1052 = vpop.f32.mrb[0].mxu0
    %1053 = vdwg.mxu0
    %1054 = vmatprep.subr.bf16.mxu0 %v721
    %1055 = vmatpush1.bf16.msra.mxu0 %v720
    %1056 = vmatprep.subr.bf16.mxu0 %v729
    %1057 = vmatpush1.bf16.msra.mxu0 %v728
    %1058 = vmatprep.subr.bf16.mxu0 %v737
    %1059 = vmatpush1.bf16.msra.mxu0 %v736
    %1060 = vmatprep.subr.bf16.mxu0 %v745
    %1061 = vmatpush1.bf16.msra.mxu0 %v744
    %1062 = vmatprep.subr.bf16.mxu0 %v753
    %1063 = vmatpush1.bf16.msra.mxu0 %v752
    %1064 = vmatprep.subr.bf16.mxu0 %v761
    %1065 = vmatpush1.bf16.msra.mxu0 %v760
    %1066 = vmatprep.subr.bf16.mxu0 %v769
    %1067 = vmatpush1.bf16.msra.mxu0 %v768
    %1068 = vmatprep.subr.bf16.mxu0 %v777
    %1069 = vmatpush1.bf16.msra.mxu0 %v776
    %1070 = vmatprep.subr.bf16.mxu0 %v785
    %1071 = vmatpush1.bf16.msra.mxu0 %v784
    %1072 = vmatprep.subr.bf16.mxu0 %v793
    %1073 = vmatpush1.bf16.msra.mxu0 %v792
    %1074 = vmatprep.subr.bf16.mxu0 %v801
    %1075 = vmatpush1.bf16.msra.mxu0 %v800
    %1076 = vmatprep.subr.bf16.mxu0 %v809
    %1077 = vmatpush1.bf16.msra.mxu0 %v808
    %1078 = vmatprep.subr.bf16.mxu0 %v817
    %1079 = vmatpush1.bf16.msra.mxu0 %v816
    %1080 = vmatprep.subr.bf16.mxu0 %v825
    %1081 = vmatpush1.bf16.msra.mxu0 %v824
    %1082 = vmatprep.subr.bf16.mxu0 %v833
    %1083 = vmatpush1.bf16.msra.mxu0 %v832
    %1084 = vmatprep.subr.bf16.mxu0 %v841
    %1085 = vmatpush1.bf16.msra.mxu0 %v840
    %1086 = vmatprep.mubr.bf16.mxu0 %v329
    %1087 = vmatmul.mubr.bf16.gmra.mrb[0].mxu0 %v328
    %v1088 = vpop.f32.mrb[0].mxu0
    %v1089 = vadd.f32 %v304, %v1088
    %v1090 = vpop.f32.mrb[0].mxu0
    %v1091 = vadd.f32 %v308, %v1090
    %v1092 = vpop.f32.mrb[0].mxu0
    %v1093 = vpop.f32.mrb[0].mxu0
    %1094 = vdwg.mxu0
    %1095 = vmatprep.subr.bf16.mxu0 %v723
    %1096 = vmatpush1.bf16.msra.mxu0 %v722
    %1097 = vmatprep.subr.bf16.mxu0 %v731
    %1098 = vmatpush1.bf16.msra.mxu0 %v730
    %1099 = vmatprep.subr.bf16.mxu0 %v739
    %1100 = vmatpush1.bf16.msra.mxu0 %v738
    %1101 = vmatprep.subr.bf16.mxu0 %v747
    %1102 = vmatpush1.bf16.msra.mxu0 %v746
    %1103 = vmatprep.subr.bf16.mxu0 %v755
    %1104 = vmatpush1.bf16.msra.mxu0 %v754
    %1105 = vmatprep.subr.bf16.mxu0 %v763
    %1106 = vmatpush1.bf16.msra.mxu0 %v762
    %1107 = vmatprep.subr.bf16.mxu0 %v771
    %1108 = vmatpush1.bf16.msra.mxu0 %v770
    %1109 = vmatprep.subr.bf16.mxu0 %v779
    %1110 = vmatpush1.bf16.msra.mxu0 %v778
    %1111 = vmatprep.subr.bf16.mxu0 %v787
    %1112 = vmatpush1.bf16.msra.mxu0 %v786
    %1113 = vmatprep.subr.bf16.mxu0 %v795
    %1114 = vmatpush1.bf16.msra.mxu0 %v794
    %1115 = vmatprep.subr.bf16.mxu0 %v803
    %1116 = vmatpush1.bf16.msra.mxu0 %v802
    %1117 = vmatprep.subr.bf16.mxu0 %v811
    %1118 = vmatpush1.bf16.msra.mxu0 %v810
    %1119 = vmatprep.subr.bf16.mxu0 %v819
    %1120 = vmatpush1.bf16.msra.mxu0 %v818
    %1121 = vmatprep.subr.bf16.mxu0 %v827
    %1122 = vmatpush1.bf16.msra.mxu0 %v826
    %1123 = vmatprep.subr.bf16.mxu0 %v835
    %1124 = vmatpush1.bf16.msra.mxu0 %v834
    %1125 = vmatprep.subr.bf16.mxu0 %v843
    %1126 = vmatpush1.bf16.msra.mxu0 %v842
    %1127 = vmatprep.mubr.bf16.mxu0 %v329
    %1128 = vmatmul.mubr.bf16.gmra.mrb[0].mxu0 %v328
    %v1129 = vpop.f32.mrb[0].mxu0
    %v1130 = vadd.f32 %v312, %v1129
    %v1131 = vpop.f32.mrb[0].mxu0
    %v1132 = vadd.f32 %v316, %v1131
    %v1133 = vpop.f32.mrb[0].mxu0
    %v1134 = vpop.f32.mrb[0].mxu0
    %1135 = vdwg.mxu0
    %v1136 = vmax.f32 %v1007, 0.0
    %v1137 = vmax.f32 %v1009, 0.0
    %v1138 = vmax.f32 %v1048, 0.0
    %v1139 = vmax.f32 %v1050, 0.0
    %v1140 = vmax.f32 %v1089, 0.0
    %v1141 = vmax.f32 %v1091, 0.0
    %v1142 = vmax.f32 %v1130, 0.0
    %v1143 = vmax.f32 %v1132, 0.0
    %v1144 = vpack.c.bf16 %v1136, %v1136
    %v1145 = vpack.c.bf16 %v1137, %v1137
    %v1146 = vpack.c.bf16 %v1138, %v1138
    %v1147 = vpack.c.bf16 %v1139, %v1139
    %v1148 = vpack.c.bf16 %v1140, %v1140
    %v1149 = vpack.c.bf16 %v1141, %v1141
    %v1150 = vpack.c.bf16 %v1142, %v1142
    %v1151 = vpack.c.bf16 %v1143, %v1143
    %v1152 = vld [vmem:[#allocation8] sm:$0xff]
    %v1153 = vld [vmem:[#allocation8 + $0x8] sm:$0xff]
    %v1154 = vld [vmem:[#allocation8 + $0x10] sm:$0xff]
    %v1155 = vld [vmem:[#allocation8 + $0x18] sm:$0xff]
    %v1156 = vld [vmem:[#allocation8 + $0x20] sm:$0xff]
    %v1157 = vld [vmem:[#allocation8 + $0x28] sm:$0xff]
    %v1158 = vld [vmem:[#allocation8 + $0x30] sm:$0xff]
    %v1159 = vld [vmem:[#allocation8 + $0x38] sm:$0xff]
    %v1160 = vld [vmem:[#allocation8 + $0x40] sm:$0xff]
    %v1161 = vld [vmem:[#allocation8 + $0x48] sm:$0xff]
    %v1162 = vld [vmem:[#allocation8 + $0x50] sm:$0xff]
    %v1163 = vld [vmem:[#allocation8 + $0x58] sm:$0xff]
    %v1164 = vld [vmem:[#allocation8 + $0x60] sm:$0xff]
    %v1165 = vld [vmem:[#allocation8 + $0x68] sm:$0xff]
    %v1166 = vld [vmem:[#allocation8 + $0x70] sm:$0xff]
    %v1167 = vld [vmem:[#allocation8 + $0x78] sm:$0xff]
    %v1168 = vld [vmem:[#allocation8 + $0x80] sm:$0xff]
    %v1169 = vld [vmem:[#allocation8 + $0x88] sm:$0xff]
    %v1170 = vld [vmem:[#allocation8 + $0x90] sm:$0xff]
    %v1171 = vld [vmem:[#allocation8 + $0x98] sm:$0xff]
    %v1172 = vld [vmem:[#allocation8 + $0xa0] sm:$0xff]
    %v1173 = vld [vmem:[#allocation8 + $0xa8] sm:$0xff]
    %v1174 = vld [vmem:[#allocation8 + $0xb0] sm:$0xff]
    %v1175 = vld [vmem:[#allocation8 + $0xb8] sm:$0xff]
    %v1176 = vld [vmem:[#allocation8 + $0xc0] sm:$0xff]
    %v1177 = vld [vmem:[#allocation8 + $0xc8] sm:$0xff]
    %v1178 = vld [vmem:[#allocation8 + $0xd0] sm:$0xff]
    %v1179 = vld [vmem:[#allocation8 + $0xd8] sm:$0xff]
    %v1180 = vld [vmem:[#allocation8 + $0xe0] sm:$0xff]
    %v1181 = vld [vmem:[#allocation8 + $0xe8] sm:$0xff]
    %v1182 = vld [vmem:[#allocation8 + $0xf0] sm:$0xff]
    %v1183 = vld [vmem:[#allocation8 + $0xf8] sm:$0xff]
    %v1184 = vld [vmem:[#allocation8 + $0x100] sm:$0xff]
    %v1185 = vld [vmem:[#allocation8 + $0x108] sm:$0xff]
    %v1186 = vld [vmem:[#allocation8 + $0x110] sm:$0xff]
    %v1187 = vld [vmem:[#allocation8 + $0x118] sm:$0xff]
    %v1188 = vld [vmem:[#allocation8 + $0x120] sm:$0xff]
    %v1189 = vld [vmem:[#allocation8 + $0x128] sm:$0xff]
    %v1190 = vld [vmem:[#allocation8 + $0x130] sm:$0xff]
    %v1191 = vld [vmem:[#allocation8 + $0x138] sm:$0xff]
    %v1192 = vld [vmem:[#allocation8 + $0x140] sm:$0xff]
    %v1193 = vld [vmem:[#allocation8 + $0x148] sm:$0xff]
    %v1194 = vld [vmem:[#allocation8 + $0x150] sm:$0xff]
    %v1195 = vld [vmem:[#allocation8 + $0x158] sm:$0xff]
    %v1196 = vld [vmem:[#allocation8 + $0x160] sm:$0xff]
    %v1197 = vld [vmem:[#allocation8 + $0x168] sm:$0xff]
    %v1198 = vld [vmem:[#allocation8 + $0x170] sm:$0xff]
    %v1199 = vld [vmem:[#allocation8 + $0x178] sm:$0xff]
    %v1200 = vld [vmem:[#allocation8 + $0x180] sm:$0xff]
    %v1201 = vld [vmem:[#allocation8 + $0x188] sm:$0xff]
    %v1202 = vld [vmem:[#allocation8 + $0x190] sm:$0xff]
    %v1203 = vld [vmem:[#allocation8 + $0x198] sm:$0xff]
    %v1204 = vld [vmem:[#allocation8 + $0x1a0] sm:$0xff]
    %v1205 = vld [vmem:[#allocation8 + $0x1a8] sm:$0xff]
    %v1206 = vld [vmem:[#allocation8 + $0x1b0] sm:$0xff]
    %v1207 = vld [vmem:[#allocation8 + $0x1b8] sm:$0xff]
    %v1208 = vld [vmem:[#allocation8 + $0x1c0] sm:$0xff]
    %v1209 = vld [vmem:[#allocation8 + $0x1c8] sm:$0xff]
    %v1210 = vld [vmem:[#allocation8 + $0x1d0] sm:$0xff]
    %v1211 = vld [vmem:[#allocation8 + $0x1d8] sm:$0xff]
    %v1212 = vld [vmem:[#allocation8 + $0x1e0] sm:$0xff]
    %v1213 = vld [vmem:[#allocation8 + $0x1e8] sm:$0xff]
    %v1214 = vld [vmem:[#allocation8 + $0x1f0] sm:$0xff]
    %v1215 = vld [vmem:[#allocation8 + $0x1f8] sm:$0xff]
    %v1216 = vld [vmem:[#allocation8 + $0x200] sm:$0xff]
    %v1217 = vld [vmem:[#allocation8 + $0x208] sm:$0xff]
    %v1218 = vld [vmem:[#allocation8 + $0x210] sm:$0xff]
    %v1219 = vld [vmem:[#allocation8 + $0x218] sm:$0xff]
    %v1220 = vld [vmem:[#allocation8 + $0x220] sm:$0xff]
    %v1221 = vld [vmem:[#allocation8 + $0x228] sm:$0xff]
    %v1222 = vld [vmem:[#allocation8 + $0x230] sm:$0xff]
    %v1223 = vld [vmem:[#allocation8 + $0x238] sm:$0xff]
    %v1224 = vld [vmem:[#allocation8 + $0x240] sm:$0xff]
    %v1225 = vld [vmem:[#allocation8 + $0x248] sm:$0xff]
    %v1226 = vld [vmem:[#allocation8 + $0x250] sm:$0xff]
    %v1227 = vld [vmem:[#allocation8 + $0x258] sm:$0xff]
    %v1228 = vld [vmem:[#allocation8 + $0x260] sm:$0xff]
    %v1229 = vld [vmem:[#allocation8 + $0x268] sm:$0xff]
    %v1230 = vld [vmem:[#allocation8 + $0x270] sm:$0xff]
    %v1231 = vld [vmem:[#allocation8 + $0x278] sm:$0xff]
    %v1232 = vld [vmem:[#allocation8 + $0x280] sm:$0xff]
    %v1233 = vld [vmem:[#allocation8 + $0x288] sm:$0xff]
    %v1234 = vld [vmem:[#allocation8 + $0x290] sm:$0xff]
    %v1235 = vld [vmem:[#allocation8 + $0x298] sm:$0xff]
    %v1236 = vld [vmem:[#allocation8 + $0x2a0] sm:$0xff]
    %v1237 = vld [vmem:[#allocation8 + $0x2a8] sm:$0xff]
    %v1238 = vld [vmem:[#allocation8 + $0x2b0] sm:$0xff]
    %v1239 = vld [vmem:[#allocation8 + $0x2b8] sm:$0xff]
    %v1240 = vld [vmem:[#allocation8 + $0x2c0] sm:$0xff]
    %v1241 = vld [vmem:[#allocation8 + $0x2c8] sm:$0xff]
    %v1242 = vld [vmem:[#allocation8 + $0x2d0] sm:$0xff]
    %v1243 = vld [vmem:[#allocation8 + $0x2d8] sm:$0xff]
    %v1244 = vld [vmem:[#allocation8 + $0x2e0] sm:$0xff]
    %v1245 = vld [vmem:[#allocation8 + $0x2e8] sm:$0xff]
    %v1246 = vld [vmem:[#allocation8 + $0x2f0] sm:$0xff]
    %v1247 = vld [vmem:[#allocation8 + $0x2f8] sm:$0xff]
    %v1248 = vld [vmem:[#allocation8 + $0x300] sm:$0xff]
    %v1249 = vld [vmem:[#allocation8 + $0x308] sm:$0xff]
    %v1250 = vld [vmem:[#allocation8 + $0x310] sm:$0xff]
    %v1251 = vld [vmem:[#allocation8 + $0x318] sm:$0xff]
    %v1252 = vld [vmem:[#allocation8 + $0x320] sm:$0xff]
    %v1253 = vld [vmem:[#allocation8 + $0x328] sm:$0xff]
    %v1254 = vld [vmem:[#allocation8 + $0x330] sm:$0xff]
    %v1255 = vld [vmem:[#allocation8 + $0x338] sm:$0xff]
    %v1256 = vld [vmem:[#allocation8 + $0x340] sm:$0xff]
    %v1257 = vld [vmem:[#allocation8 + $0x348] sm:$0xff]
    %v1258 = vld [vmem:[#allocation8 + $0x350] sm:$0xff]
    %v1259 = vld [vmem:[#allocation8 + $0x358] sm:$0xff]
    %v1260 = vld [vmem:[#allocation8 + $0x360] sm:$0xff]
    %v1261 = vld [vmem:[#allocation8 + $0x368] sm:$0xff]
    %v1262 = vld [vmem:[#allocation8 + $0x370] sm:$0xff]
    %v1263 = vld [vmem:[#allocation8 + $0x378] sm:$0xff]
    %v1264 = vld [vmem:[#allocation8 + $0x380] sm:$0xff]
    %v1265 = vld [vmem:[#allocation8 + $0x388] sm:$0xff]
    %v1266 = vld [vmem:[#allocation8 + $0x390] sm:$0xff]
    %v1267 = vld [vmem:[#allocation8 + $0x398] sm:$0xff]
    %v1268 = vld [vmem:[#allocation8 + $0x3a0] sm:$0xff]
    %v1269 = vld [vmem:[#allocation8 + $0x3a8] sm:$0xff]
    %v1270 = vld [vmem:[#allocation8 + $0x3b0] sm:$0xff]
    %v1271 = vld [vmem:[#allocation8 + $0x3b8] sm:$0xff]
    %v1272 = vld [vmem:[#allocation8 + $0x3c0] sm:$0xff]
    %v1273 = vld [vmem:[#allocation8 + $0x3c8] sm:$0xff]
    %v1274 = vld [vmem:[#allocation8 + $0x3d0] sm:$0xff]
    %v1275 = vld [vmem:[#allocation8 + $0x3d8] sm:$0xff]
    %v1276 = vld [vmem:[#allocation8 + $0x3e0] sm:$0xff]
    %v1277 = vld [vmem:[#allocation8 + $0x3e8] sm:$0xff]
    %v1278 = vld [vmem:[#allocation8 + $0x3f0] sm:$0xff]
    %v1279 = vld [vmem:[#allocation8 + $0x3f8] sm:$0xff]
    %v1280 = vld [vmem:[#allocation8 + $0x400] sm:$0xff]
    %v1281 = vld [vmem:[#allocation8 + $0x408] sm:$0xff]
    %v1282 = vld [vmem:[#allocation8 + $0x410] sm:$0xff]
    %v1283 = vld [vmem:[#allocation8 + $0x418] sm:$0xff]
    %v1284 = vld [vmem:[#allocation8 + $0x420] sm:$0xff]
    %v1285 = vld [vmem:[#allocation8 + $0x428] sm:$0xff]
    %v1286 = vld [vmem:[#allocation8 + $0x430] sm:$0xff]
    %v1287 = vld [vmem:[#allocation8 + $0x438] sm:$0xff]
    %v1288 = vld [vmem:[#allocation8 + $0x440] sm:$0xff]
    %v1289 = vld [vmem:[#allocation8 + $0x448] sm:$0xff]
    %v1290 = vld [vmem:[#allocation8 + $0x450] sm:$0xff]
    %v1291 = vld [vmem:[#allocation8 + $0x458] sm:$0xff]
    %v1292 = vld [vmem:[#allocation8 + $0x460] sm:$0xff]
    %v1293 = vld [vmem:[#allocation8 + $0x468] sm:$0xff]
    %v1294 = vld [vmem:[#allocation8 + $0x470] sm:$0xff]
    %v1295 = vld [vmem:[#allocation8 + $0x478] sm:$0xff]
    %v1296 = vld [vmem:[#allocation8 + $0x480] sm:$0xff]
    %v1297 = vld [vmem:[#allocation8 + $0x488] sm:$0xff]
    %v1298 = vld [vmem:[#allocation8 + $0x490] sm:$0xff]
    %v1299 = vld [vmem:[#allocation8 + $0x498] sm:$0xff]
    %v1300 = vld [vmem:[#allocation8 + $0x4a0] sm:$0xff]
    %v1301 = vld [vmem:[#allocation8 + $0x4a8] sm:$0xff]
    %v1302 = vld [vmem:[#allocation8 + $0x4b0] sm:$0xff]
    %v1303 = vld [vmem:[#allocation8 + $0x4b8] sm:$0xff]
    %v1304 = vld [vmem:[#allocation8 + $0x4c0] sm:$0xff]
    %v1305 = vld [vmem:[#allocation8 + $0x4c8] sm:$0xff]
    %v1306 = vld [vmem:[#allocation8 + $0x4d0] sm:$0xff]
    %v1307 = vld [vmem:[#allocation8 + $0x4d8] sm:$0xff]
    %v1308 = vld [vmem:[#allocation8 + $0x4e0] sm:$0xff]
    %v1309 = vld [vmem:[#allocation8 + $0x4e8] sm:$0xff]
    %v1310 = vld [vmem:[#allocation8 + $0x4f0] sm:$0xff]
    %v1311 = vld [vmem:[#allocation8 + $0x4f8] sm:$0xff]
    %v1312 = vld [vmem:[#allocation8 + $0x500] sm:$0xff]
    %v1313 = vld [vmem:[#allocation8 + $0x508] sm:$0xff]
    %v1314 = vld [vmem:[#allocation8 + $0x510] sm:$0xff]
    %v1315 = vld [vmem:[#allocation8 + $0x518] sm:$0xff]
    %v1316 = vld [vmem:[#allocation8 + $0x520] sm:$0xff]
    %v1317 = vld [vmem:[#allocation8 + $0x528] sm:$0xff]
    %v1318 = vld [vmem:[#allocation8 + $0x530] sm:$0xff]
    %v1319 = vld [vmem:[#allocation8 + $0x538] sm:$0xff]
    %v1320 = vld [vmem:[#allocation8 + $0x540] sm:$0xff]
    %v1321 = vld [vmem:[#allocation8 + $0x548] sm:$0xff]
    %v1322 = vld [vmem:[#allocation8 + $0x550] sm:$0xff]
    %v1323 = vld [vmem:[#allocation8 + $0x558] sm:$0xff]
    %v1324 = vld [vmem:[#allocation8 + $0x560] sm:$0xff]
    %v1325 = vld [vmem:[#allocation8 + $0x568] sm:$0xff]
    %v1326 = vld [vmem:[#allocation8 + $0x570] sm:$0xff]
    %v1327 = vld [vmem:[#allocation8 + $0x578] sm:$0xff]
    %v1328 = vld [vmem:[#allocation8 + $0x580] sm:$0xff]
    %v1329 = vld [vmem:[#allocation8 + $0x588] sm:$0xff]
    %v1330 = vld [vmem:[#allocation8 + $0x590] sm:$0xff]
    %v1331 = vld [vmem:[#allocation8 + $0x598] sm:$0xff]
    %v1332 = vld [vmem:[#allocation8 + $0x5a0] sm:$0xff]
    %v1333 = vld [vmem:[#allocation8 + $0x5a8] sm:$0xff]
    %v1334 = vld [vmem:[#allocation8 + $0x5b0] sm:$0xff]
    %v1335 = vld [vmem:[#allocation8 + $0x5b8] sm:$0xff]
    %v1336 = vld [vmem:[#allocation8 + $0x5c0] sm:$0xff]
    %v1337 = vld [vmem:[#allocation8 + $0x5c8] sm:$0xff]
    %v1338 = vld [vmem:[#allocation8 + $0x5d0] sm:$0xff]
    %v1339 = vld [vmem:[#allocation8 + $0x5d8] sm:$0xff]
    %v1340 = vld [vmem:[#allocation8 + $0x5e0] sm:$0xff]
    %v1341 = vld [vmem:[#allocation8 + $0x5e8] sm:$0xff]
    %v1342 = vld [vmem:[#allocation8 + $0x5f0] sm:$0xff]
    %v1343 = vld [vmem:[#allocation8 + $0x5f8] sm:$0xff]
    %v1344 = vld [vmem:[#allocation8 + $0x600] sm:$0xff]
    %v1345 = vld [vmem:[#allocation8 + $0x608] sm:$0xff]
    %v1346 = vld [vmem:[#allocation8 + $0x610] sm:$0xff]
    %v1347 = vld [vmem:[#allocation8 + $0x618] sm:$0xff]
    %v1348 = vld [vmem:[#allocation8 + $0x620] sm:$0xff]
    %v1349 = vld [vmem:[#allocation8 + $0x628] sm:$0xff]
    %v1350 = vld [vmem:[#allocation8 + $0x630] sm:$0xff]
    %v1351 = vld [vmem:[#allocation8 + $0x638] sm:$0xff]
    %v1352 = vld [vmem:[#allocation8 + $0x640] sm:$0xff]
    %v1353 = vld [vmem:[#allocation8 + $0x648] sm:$0xff]
    %v1354 = vld [vmem:[#allocation8 + $0x650] sm:$0xff]
    %v1355 = vld [vmem:[#allocation8 + $0x658] sm:$0xff]
    %v1356 = vld [vmem:[#allocation8 + $0x660] sm:$0xff]
    %v1357 = vld [vmem:[#allocation8 + $0x668] sm:$0xff]
    %v1358 = vld [vmem:[#allocation8 + $0x670] sm:$0xff]
    %v1359 = vld [vmem:[#allocation8 + $0x678] sm:$0xff]
    %v1360 = vld [vmem:[#allocation8 + $0x680] sm:$0xff]
    %v1361 = vld [vmem:[#allocation8 + $0x688] sm:$0xff]
    %v1362 = vld [vmem:[#allocation8 + $0x690] sm:$0xff]
    %v1363 = vld [vmem:[#allocation8 + $0x698] sm:$0xff]
    %v1364 = vld [vmem:[#allocation8 + $0x6a0] sm:$0xff]
    %v1365 = vld [vmem:[#allocation8 + $0x6a8] sm:$0xff]
    %v1366 = vld [vmem:[#allocation8 + $0x6b0] sm:$0xff]
    %v1367 = vld [vmem:[#allocation8 + $0x6b8] sm:$0xff]
    %v1368 = vld [vmem:[#allocation8 + $0x6c0] sm:$0xff]
    %v1369 = vld [vmem:[#allocation8 + $0x6c8] sm:$0xff]
    %v1370 = vld [vmem:[#allocation8 + $0x6d0] sm:$0xff]
    %v1371 = vld [vmem:[#allocation8 + $0x6d8] sm:$0xff]
    %v1372 = vld [vmem:[#allocation8 + $0x6e0] sm:$0xff]
    %v1373 = vld [vmem:[#allocation8 + $0x6e8] sm:$0xff]
    %v1374 = vld [vmem:[#allocation8 + $0x6f0] sm:$0xff]
    %v1375 = vld [vmem:[#allocation8 + $0x6f8] sm:$0xff]
    %v1376 = vld [vmem:[#allocation8 + $0x700] sm:$0xff]
    %v1377 = vld [vmem:[#allocation8 + $0x708] sm:$0xff]
    %v1378 = vld [vmem:[#allocation8 + $0x710] sm:$0xff]
    %v1379 = vld [vmem:[#allocation8 + $0x718] sm:$0xff]
    %v1380 = vld [vmem:[#allocation8 + $0x720] sm:$0xff]
    %v1381 = vld [vmem:[#allocation8 + $0x728] sm:$0xff]
    %v1382 = vld [vmem:[#allocation8 + $0x730] sm:$0xff]
    %v1383 = vld [vmem:[#allocation8 + $0x738] sm:$0xff]
    %v1384 = vld [vmem:[#allocation8 + $0x740] sm:$0xff]
    %v1385 = vld [vmem:[#allocation8 + $0x748] sm:$0xff]
    %v1386 = vld [vmem:[#allocation8 + $0x750] sm:$0xff]
    %v1387 = vld [vmem:[#allocation8 + $0x758] sm:$0xff]
    %v1388 = vld [vmem:[#allocation8 + $0x760] sm:$0xff]
    %v1389 = vld [vmem:[#allocation8 + $0x768] sm:$0xff]
    %v1390 = vld [vmem:[#allocation8 + $0x770] sm:$0xff]
    %v1391 = vld [vmem:[#allocation8 + $0x778] sm:$0xff]
    %v1392 = vld [vmem:[#allocation8 + $0x780] sm:$0xff]
    %v1393 = vld [vmem:[#allocation8 + $0x788] sm:$0xff]
    %v1394 = vld [vmem:[#allocation8 + $0x790] sm:$0xff]
    %v1395 = vld [vmem:[#allocation8 + $0x798] sm:$0xff]
    %v1396 = vld [vmem:[#allocation8 + $0x7a0] sm:$0xff]
    %v1397 = vld [vmem:[#allocation8 + $0x7a8] sm:$0xff]
    %v1398 = vld [vmem:[#allocation8 + $0x7b0] sm:$0xff]
    %v1399 = vld [vmem:[#allocation8 + $0x7b8] sm:$0xff]
    %v1400 = vld [vmem:[#allocation8 + $0x7c0] sm:$0xff]
    %v1401 = vld [vmem:[#allocation8 + $0x7c8] sm:$0xff]
    %v1402 = vld [vmem:[#allocation8 + $0x7d0] sm:$0xff]
    %v1403 = vld [vmem:[#allocation8 + $0x7d8] sm:$0xff]
    %v1404 = vld [vmem:[#allocation8 + $0x7e0] sm:$0xff]
    %v1405 = vld [vmem:[#allocation8 + $0x7e8] sm:$0xff]
    %v1406 = vld [vmem:[#allocation8 + $0x7f0] sm:$0xff]
    %v1407 = vld [vmem:[#allocation8 + $0x7f8] sm:$0xff]
    %v1408 = vld [vmem:[%s4] sm:$0xf]
    %v1410 = vlaneseq
    %v1411 = vshrl.u32 %v1410, 7
    %v1412 = vsub.s32 0, %v1411
    %v1413 = vrot.slane %v1408, %v1412
    %v1414 = vlaneseq
    %v1415 = vshrl.u32 %v1414, 7
    %v1416 = vsub.s32 1, %v1415
    %v1417 = vrot.slane %v1408, %v1416
    %v1418 = vlaneseq
    %v1419 = vshrl.u32 %v1418, 7
    %v1420 = vsub.s32 2, %v1419
    %v1421 = vrot.slane %v1408, %v1420
    %v1422 = vlaneseq
    %v1423 = vshrl.u32 %v1422, 7
    %v1424 = vsub.s32 3, %v1423
    %v1425 = vrot.slane %v1408, %v1424
    %v1686 = vunpack.c.l.b16 %v1152
    %v1687 = vunpack.c.h.b16 %v1152
    %v1688 = vunpack.c.l.b16 %v1153
    %v1689 = vunpack.c.h.b16 %v1153
    %v1690 = vunpack.c.l.b16 %v1154
    %v1691 = vunpack.c.h.b16 %v1154
    %v1692 = vunpack.c.l.b16 %v1155
    %v1693 = vunpack.c.h.b16 %v1155
    %v1694 = vunpack.c.l.b16 %v1156
    %v1695 = vunpack.c.h.b16 %v1156
    %v1696 = vunpack.c.l.b16 %v1157
    %v1697 = vunpack.c.h.b16 %v1157
    %v1698 = vunpack.c.l.b16 %v1158
    %v1699 = vunpack.c.h.b16 %v1158
    %v1700 = vunpack.c.l.b16 %v1159
    %v1701 = vunpack.c.h.b16 %v1159
    %v1702 = vunpack.c.l.b16 %v1160
    %v1703 = vunpack.c.h.b16 %v1160
    %v1704 = vunpack.c.l.b16 %v1161
    %v1705 = vunpack.c.h.b16 %v1161
    %v1706 = vunpack.c.l.b16 %v1162
    %v1707 = vunpack.c.h.b16 %v1162
    %v1708 = vunpack.c.l.b16 %v1163
    %v1709 = vunpack.c.h.b16 %v1163
    %v1710 = vunpack.c.l.b16 %v1164
    %v1711 = vunpack.c.h.b16 %v1164
    %v1712 = vunpack.c.l.b16 %v1165
    %v1713 = vunpack.c.h.b16 %v1165
    %v1714 = vunpack.c.l.b16 %v1166
    %v1715 = vunpack.c.h.b16 %v1166
    %v1716 = vunpack.c.l.b16 %v1167
    %v1717 = vunpack.c.h.b16 %v1167
    %v1718 = vunpack.c.l.b16 %v1168
    %v1719 = vunpack.c.h.b16 %v1168
    %v1720 = vunpack.c.l.b16 %v1169
    %v1721 = vunpack.c.h.b16 %v1169
    %v1722 = vunpack.c.l.b16 %v1170
    %v1723 = vunpack.c.h.b16 %v1170
    %v1724 = vunpack.c.l.b16 %v1171
    %v1725 = vunpack.c.h.b16 %v1171
    %v1726 = vunpack.c.l.b16 %v1172
    %v1727 = vunpack.c.h.b16 %v1172
    %v1728 = vunpack.c.l.b16 %v1173
    %v1729 = vunpack.c.h.b16 %v1173
    %v1730 = vunpack.c.l.b16 %v1174
    %v1731 = vunpack.c.h.b16 %v1174
    %v1732 = vunpack.c.l.b16 %v1175
    %v1733 = vunpack.c.h.b16 %v1175
    %v1734 = vunpack.c.l.b16 %v1176
    %v1735 = vunpack.c.h.b16 %v1176
    %v1736 = vunpack.c.l.b16 %v1177
    %v1737 = vunpack.c.h.b16 %v1177
    %v1738 = vunpack.c.l.b16 %v1178
    %v1739 = vunpack.c.h.b16 %v1178
    %v1740 = vunpack.c.l.b16 %v1179
    %v1741 = vunpack.c.h.b16 %v1179
    %v1742 = vunpack.c.l.b16 %v1180
    %v1743 = vunpack.c.h.b16 %v1180
    %v1744 = vunpack.c.l.b16 %v1181
    %v1745 = vunpack.c.h.b16 %v1181
    %v1746 = vunpack.c.l.b16 %v1182
    %v1747 = vunpack.c.h.b16 %v1182
    %v1748 = vunpack.c.l.b16 %v1183
    %v1749 = vunpack.c.h.b16 %v1183
    %v1750 = vunpack.c.l.b16 %v1184
    %v1751 = vunpack.c.h.b16 %v1184
    %v1752 = vunpack.c.l.b16 %v1185
    %v1753 = vunpack.c.h.b16 %v1185
    %v1754 = vunpack.c.l.b16 %v1186
    %v1755 = vunpack.c.h.b16 %v1186
    %v1756 = vunpack.c.l.b16 %v1187
    %v1757 = vunpack.c.h.b16 %v1187
    %v1758 = vunpack.c.l.b16 %v1188
    %v1759 = vunpack.c.h.b16 %v1188
    %v1760 = vunpack.c.l.b16 %v1189
    %v1761 = vunpack.c.h.b16 %v1189
    %v1762 = vunpack.c.l.b16 %v1190
    %v1763 = vunpack.c.h.b16 %v1190
    %v1764 = vunpack.c.l.b16 %v1191
    %v1765 = vunpack.c.h.b16 %v1191
    %v1766 = vunpack.c.l.b16 %v1192
    %v1767 = vunpack.c.h.b16 %v1192
    %v1768 = vunpack.c.l.b16 %v1193
    %v1769 = vunpack.c.h.b16 %v1193
    %v1770 = vunpack.c.l.b16 %v1194
    %v1771 = vunpack.c.h.b16 %v1194
    %v1772 = vunpack.c.l.b16 %v1195
    %v1773 = vunpack.c.h.b16 %v1195
    %v1774 = vunpack.c.l.b16 %v1196
    %v1775 = vunpack.c.h.b16 %v1196
    %v1776 = vunpack.c.l.b16 %v1197
    %v1777 = vunpack.c.h.b16 %v1197
    %v1778 = vunpack.c.l.b16 %v1198
    %v1779 = vunpack.c.h.b16 %v1198
    %v1780 = vunpack.c.l.b16 %v1199
    %v1781 = vunpack.c.h.b16 %v1199
    %v1782 = vunpack.c.l.b16 %v1200
    %v1783 = vunpack.c.h.b16 %v1200
    %v1784 = vunpack.c.l.b16 %v1201
    %v1785 = vunpack.c.h.b16 %v1201
    %v1786 = vunpack.c.l.b16 %v1202
    %v1787 = vunpack.c.h.b16 %v1202
    %v1788 = vunpack.c.l.b16 %v1203
    %v1789 = vunpack.c.h.b16 %v1203
    %v1790 = vunpack.c.l.b16 %v1204
    %v1791 = vunpack.c.h.b16 %v1204
    %v1792 = vunpack.c.l.b16 %v1205
    %v1793 = vunpack.c.h.b16 %v1205
    %v1794 = vunpack.c.l.b16 %v1206
    %v1795 = vunpack.c.h.b16 %v1206
    %v1796 = vunpack.c.l.b16 %v1207
    %v1797 = vunpack.c.h.b16 %v1207
    %v1798 = vunpack.c.l.b16 %v1208
    %v1799 = vunpack.c.h.b16 %v1208
    %v1800 = vunpack.c.l.b16 %v1209
    %v1801 = vunpack.c.h.b16 %v1209
    %v1802 = vunpack.c.l.b16 %v1210
    %v1803 = vunpack.c.h.b16 %v1210
    %v1804 = vunpack.c.l.b16 %v1211
    %v1805 = vunpack.c.h.b16 %v1211
    %v1806 = vunpack.c.l.b16 %v1212
    %v1807 = vunpack.c.h.b16 %v1212
    %v1808 = vunpack.c.l.b16 %v1213
    %v1809 = vunpack.c.h.b16 %v1213
    %v1810 = vunpack.c.l.b16 %v1214
    %v1811 = vunpack.c.h.b16 %v1214
    %v1812 = vunpack.c.l.b16 %v1215
    %v1813 = vunpack.c.h.b16 %v1215
    %v1814 = vunpack.c.l.b16 %v1216
    %v1815 = vunpack.c.h.b16 %v1216
    %v1816 = vunpack.c.l.b16 %v1217
    %v1817 = vunpack.c.h.b16 %v1217
    %v1818 = vunpack.c.l.b16 %v1218
    %v1819 = vunpack.c.h.b16 %v1218
    %v1820 = vunpack.c.l.b16 %v1219
    %v1821 = vunpack.c.h.b16 %v1219
    %v1822 = vunpack.c.l.b16 %v1220
    %v1823 = vunpack.c.h.b16 %v1220
    %v1824 = vunpack.c.l.b16 %v1221
    %v1825 = vunpack.c.h.b16 %v1221
    %v1826 = vunpack.c.l.b16 %v1222
    %v1827 = vunpack.c.h.b16 %v1222
    %v1828 = vunpack.c.l.b16 %v1223
    %v1829 = vunpack.c.h.b16 %v1223
    %v1830 = vunpack.c.l.b16 %v1224
    %v1831 = vunpack.c.h.b16 %v1224
    %v1832 = vunpack.c.l.b16 %v1225
    %v1833 = vunpack.c.h.b16 %v1225
    %v1834 = vunpack.c.l.b16 %v1226
    %v1835 = vunpack.c.h.b16 %v1226
    %v1836 = vunpack.c.l.b16 %v1227
    %v1837 = vunpack.c.h.b16 %v1227
    %v1838 = vunpack.c.l.b16 %v1228
    %v1839 = vunpack.c.h.b16 %v1228
    %v1840 = vunpack.c.l.b16 %v1229
    %v1841 = vunpack.c.h.b16 %v1229
    %v1842 = vunpack.c.l.b16 %v1230
    %v1843 = vunpack.c.h.b16 %v1230
    %v1844 = vunpack.c.l.b16 %v1231
    %v1845 = vunpack.c.h.b16 %v1231
    %v1846 = vunpack.c.l.b16 %v1232
    %v1847 = vunpack.c.h.b16 %v1232
    %v1848 = vunpack.c.l.b16 %v1233
    %v1849 = vunpack.c.h.b16 %v1233
    %v1850 = vunpack.c.l.b16 %v1234
    %v1851 = vunpack.c.h.b16 %v1234
    %v1852 = vunpack.c.l.b16 %v1235
    %v1853 = vunpack.c.h.b16 %v1235
    %v1854 = vunpack.c.l.b16 %v1236
    %v1855 = vunpack.c.h.b16 %v1236
    %v1856 = vunpack.c.l.b16 %v1237
    %v1857 = vunpack.c.h.b16 %v1237
    %v1858 = vunpack.c.l.b16 %v1238
    %v1859 = vunpack.c.h.b16 %v1238
    %v1860 = vunpack.c.l.b16 %v1239
    %v1861 = vunpack.c.h.b16 %v1239
    %v1862 = vunpack.c.l.b16 %v1240
    %v1863 = vunpack.c.h.b16 %v1240
    %v1864 = vunpack.c.l.b16 %v1241
    %v1865 = vunpack.c.h.b16 %v1241
    %v1866 = vunpack.c.l.b16 %v1242
    %v1867 = vunpack.c.h.b16 %v1242
    %v1868 = vunpack.c.l.b16 %v1243
    %v1869 = vunpack.c.h.b16 %v1243
    %v1870 = vunpack.c.l.b16 %v1244
    %v1871 = vunpack.c.h.b16 %v1244
    %v1872 = vunpack.c.l.b16 %v1245
    %v1873 = vunpack.c.h.b16 %v1245
    %v1874 = vunpack.c.l.b16 %v1246
    %v1875 = vunpack.c.h.b16 %v1246
    %v1876 = vunpack.c.l.b16 %v1247
    %v1877 = vunpack.c.h.b16 %v1247
    %v1878 = vunpack.c.l.b16 %v1248
    %v1879 = vunpack.c.h.b16 %v1248
    %v1880 = vunpack.c.l.b16 %v1249
    %v1881 = vunpack.c.h.b16 %v1249
    %v1882 = vunpack.c.l.b16 %v1250
    %v1883 = vunpack.c.h.b16 %v1250
    %v1884 = vunpack.c.l.b16 %v1251
    %v1885 = vunpack.c.h.b16 %v1251
    %v1886 = vunpack.c.l.b16 %v1252
    %v1887 = vunpack.c.h.b16 %v1252
    %v1888 = vunpack.c.l.b16 %v1253
    %v1889 = vunpack.c.h.b16 %v1253
    %v1890 = vunpack.c.l.b16 %v1254
    %v1891 = vunpack.c.h.b16 %v1254
    %v1892 = vunpack.c.l.b16 %v1255
    %v1893 = vunpack.c.h.b16 %v1255
    %v1894 = vunpack.c.l.b16 %v1256
    %v1895 = vunpack.c.h.b16 %v1256
    %v1896 = vunpack.c.l.b16 %v1257
    %v1897 = vunpack.c.h.b16 %v1257
    %v1898 = vunpack.c.l.b16 %v1258
    %v1899 = vunpack.c.h.b16 %v1258
    %v1900 = vunpack.c.l.b16 %v1259
    %v1901 = vunpack.c.h.b16 %v1259
    %v1902 = vunpack.c.l.b16 %v1260
    %v1903 = vunpack.c.h.b16 %v1260
    %v1904 = vunpack.c.l.b16 %v1261
    %v1905 = vunpack.c.h.b16 %v1261
    %v1906 = vunpack.c.l.b16 %v1262
    %v1907 = vunpack.c.h.b16 %v1262
    %v1908 = vunpack.c.l.b16 %v1263
    %v1909 = vunpack.c.h.b16 %v1263
    %v1910 = vunpack.c.l.b16 %v1264
    %v1911 = vunpack.c.h.b16 %v1264
    %v1912 = vunpack.c.l.b16 %v1265
    %v1913 = vunpack.c.h.b16 %v1265
    %v1914 = vunpack.c.l.b16 %v1266
    %v1915 = vunpack.c.h.b16 %v1266
    %v1916 = vunpack.c.l.b16 %v1267
    %v1917 = vunpack.c.h.b16 %v1267
    %v1918 = vunpack.c.l.b16 %v1268
    %v1919 = vunpack.c.h.b16 %v1268
    %v1920 = vunpack.c.l.b16 %v1269
    %v1921 = vunpack.c.h.b16 %v1269
    %v1922 = vunpack.c.l.b16 %v1270
    %v1923 = vunpack.c.h.b16 %v1270
    %v1924 = vunpack.c.l.b16 %v1271
    %v1925 = vunpack.c.h.b16 %v1271
    %v1926 = vunpack.c.l.b16 %v1272
    %v1927 = vunpack.c.h.b16 %v1272
    %v1928 = vunpack.c.l.b16 %v1273
    %v1929 = vunpack.c.h.b16 %v1273
    %v1930 = vunpack.c.l.b16 %v1274
    %v1931 = vunpack.c.h.b16 %v1274
    %v1932 = vunpack.c.l.b16 %v1275
    %v1933 = vunpack.c.h.b16 %v1275
    %v1934 = vunpack.c.l.b16 %v1276
    %v1935 = vunpack.c.h.b16 %v1276
    %v1936 = vunpack.c.l.b16 %v1277
    %v1937 = vunpack.c.h.b16 %v1277
    %v1938 = vunpack.c.l.b16 %v1278
    %v1939 = vunpack.c.h.b16 %v1278
    %v1940 = vunpack.c.l.b16 %v1279
    %v1941 = vunpack.c.h.b16 %v1279
    %v1942 = vunpack.c.l.b16 %v1280
    %v1943 = vunpack.c.h.b16 %v1280
    %v1944 = vunpack.c.l.b16 %v1281
    %v1945 = vunpack.c.h.b16 %v1281
    %v1946 = vunpack.c.l.b16 %v1282
    %v1947 = vunpack.c.h.b16 %v1282
    %v1948 = vunpack.c.l.b16 %v1283
    %v1949 = vunpack.c.h.b16 %v1283
    %v1950 = vunpack.c.l.b16 %v1284
    %v1951 = vunpack.c.h.b16 %v1284
    %v1952 = vunpack.c.l.b16 %v1285
    %v1953 = vunpack.c.h.b16 %v1285
    %v1954 = vunpack.c.l.b16 %v1286
    %v1955 = vunpack.c.h.b16 %v1286
    %v1956 = vunpack.c.l.b16 %v1287
    %v1957 = vunpack.c.h.b16 %v1287
    %v1958 = vunpack.c.l.b16 %v1288
    %v1959 = vunpack.c.h.b16 %v1288
    %v1960 = vunpack.c.l.b16 %v1289
    %v1961 = vunpack.c.h.b16 %v1289
    %v1962 = vunpack.c.l.b16 %v1290
    %v1963 = vunpack.c.h.b16 %v1290
    %v1964 = vunpack.c.l.b16 %v1291
    %v1965 = vunpack.c.h.b16 %v1291
    %v1966 = vunpack.c.l.b16 %v1292
    %v1967 = vunpack.c.h.b16 %v1292
    %v1968 = vunpack.c.l.b16 %v1293
    %v1969 = vunpack.c.h.b16 %v1293
    %v1970 = vunpack.c.l.b16 %v1294
    %v1971 = vunpack.c.h.b16 %v1294
    %v1972 = vunpack.c.l.b16 %v1295
    %v1973 = vunpack.c.h.b16 %v1295
    %v1974 = vunpack.c.l.b16 %v1296
    %v1975 = vunpack.c.h.b16 %v1296
    %v1976 = vunpack.c.l.b16 %v1297
    %v1977 = vunpack.c.h.b16 %v1297
    %v1978 = vunpack.c.l.b16 %v1298
    %v1979 = vunpack.c.h.b16 %v1298
    %v1980 = vunpack.c.l.b16 %v1299
    %v1981 = vunpack.c.h.b16 %v1299
    %v1982 = vunpack.c.l.b16 %v1300
    %v1983 = vunpack.c.h.b16 %v1300
    %v1984 = vunpack.c.l.b16 %v1301
    %v1985 = vunpack.c.h.b16 %v1301
    %v1986 = vunpack.c.l.b16 %v1302
    %v1987 = vunpack.c.h.b16 %v1302
    %v1988 = vunpack.c.l.b16 %v1303
    %v1989 = vunpack.c.h.b16 %v1303
    %v1990 = vunpack.c.l.b16 %v1304
    %v1991 = vunpack.c.h.b16 %v1304
    %v1992 = vunpack.c.l.b16 %v1305
    %v1993 = vunpack.c.h.b16 %v1305
    %v1994 = vunpack.c.l.b16 %v1306
    %v1995 = vunpack.c.h.b16 %v1306
    %v1996 = vunpack.c.l.b16 %v1307
    %v1997 = vunpack.c.h.b16 %v1307
    %v1998 = vunpack.c.l.b16 %v1308
    %v1999 = vunpack.c.h.b16 %v1308
    %v2000 = vunpack.c.l.b16 %v1309
    %v2001 = vunpack.c.h.b16 %v1309
    %v2002 = vunpack.c.l.b16 %v1310
    %v2003 = vunpack.c.h.b16 %v1310
    %v2004 = vunpack.c.l.b16 %v1311
    %v2005 = vunpack.c.h.b16 %v1311
    %v2006 = vunpack.c.l.b16 %v1312
    %v2007 = vunpack.c.h.b16 %v1312
    %v2008 = vunpack.c.l.b16 %v1313
    %v2009 = vunpack.c.h.b16 %v1313
    %v2010 = vunpack.c.l.b16 %v1314
    %v2011 = vunpack.c.h.b16 %v1314
    %v2012 = vunpack.c.l.b16 %v1315
    %v2013 = vunpack.c.h.b16 %v1315
    %v2014 = vunpack.c.l.b16 %v1316
    %v2015 = vunpack.c.h.b16 %v1316
    %v2016 = vunpack.c.l.b16 %v1317
    %v2017 = vunpack.c.h.b16 %v1317
    %v2018 = vunpack.c.l.b16 %v1318
    %v2019 = vunpack.c.h.b16 %v1318
    %v2020 = vunpack.c.l.b16 %v1319
    %v2021 = vunpack.c.h.b16 %v1319
    %v2022 = vunpack.c.l.b16 %v1320
    %v2023 = vunpack.c.h.b16 %v1320
    %v2024 = vunpack.c.l.b16 %v1321
    %v2025 = vunpack.c.h.b16 %v1321
    %v2026 = vunpack.c.l.b16 %v1322
    %v2027 = vunpack.c.h.b16 %v1322
    %v2028 = vunpack.c.l.b16 %v1323
    %v2029 = vunpack.c.h.b16 %v1323
    %v2030 = vunpack.c.l.b16 %v1324
    %v2031 = vunpack.c.h.b16 %v1324
    %v2032 = vunpack.c.l.b16 %v1325
    %v2033 = vunpack.c.h.b16 %v1325
    %v2034 = vunpack.c.l.b16 %v1326
    %v2035 = vunpack.c.h.b16 %v1326
    %v2036 = vunpack.c.l.b16 %v1327
    %v2037 = vunpack.c.h.b16 %v1327
    %v2038 = vunpack.c.l.b16 %v1328
    %v2039 = vunpack.c.h.b16 %v1328
    %v2040 = vunpack.c.l.b16 %v1329
    %v2041 = vunpack.c.h.b16 %v1329
    %v2042 = vunpack.c.l.b16 %v1330
    %v2043 = vunpack.c.h.b16 %v1330
    %v2044 = vunpack.c.l.b16 %v1331
    %v2045 = vunpack.c.h.b16 %v1331
    %v2046 = vunpack.c.l.b16 %v1332
    %v2047 = vunpack.c.h.b16 %v1332
    %v2048 = vunpack.c.l.b16 %v1333
    %v2049 = vunpack.c.h.b16 %v1333
    %v2050 = vunpack.c.l.b16 %v1334
    %v2051 = vunpack.c.h.b16 %v1334
    %v2052 = vunpack.c.l.b16 %v1335
    %v2053 = vunpack.c.h.b16 %v1335
    %v2054 = vunpack.c.l.b16 %v1336
    %v2055 = vunpack.c.h.b16 %v1336
    %v2056 = vunpack.c.l.b16 %v1337
    %v2057 = vunpack.c.h.b16 %v1337
    %v2058 = vunpack.c.l.b16 %v1338
    %v2059 = vunpack.c.h.b16 %v1338
    %v2060 = vunpack.c.l.b16 %v1339
    %v2061 = vunpack.c.h.b16 %v1339
    %v2062 = vunpack.c.l.b16 %v1340
    %v2063 = vunpack.c.h.b16 %v1340
    %v2064 = vunpack.c.l.b16 %v1341
    %v2065 = vunpack.c.h.b16 %v1341
    %v2066 = vunpack.c.l.b16 %v1342
    %v2067 = vunpack.c.h.b16 %v1342
    %v2068 = vunpack.c.l.b16 %v1343
    %v2069 = vunpack.c.h.b16 %v1343
    %v2070 = vunpack.c.l.b16 %v1344
    %v2071 = vunpack.c.h.b16 %v1344
    %v2072 = vunpack.c.l.b16 %v1345
    %v2073 = vunpack.c.h.b16 %v1345
    %v2074 = vunpack.c.l.b16 %v1346
    %v2075 = vunpack.c.h.b16 %v1346
    %v2076 = vunpack.c.l.b16 %v1347
    %v2077 = vunpack.c.h.b16 %v1347
    %v2078 = vunpack.c.l.b16 %v1348
    %v2079 = vunpack.c.h.b16 %v1348
    %v2080 = vunpack.c.l.b16 %v1349
    %v2081 = vunpack.c.h.b16 %v1349
    %v2082 = vunpack.c.l.b16 %v1350
    %v2083 = vunpack.c.h.b16 %v1350
    %v2084 = vunpack.c.l.b16 %v1351
    %v2085 = vunpack.c.h.b16 %v1351
    %v2086 = vunpack.c.l.b16 %v1352
    %v2087 = vunpack.c.h.b16 %v1352
    %v2088 = vunpack.c.l.b16 %v1353
    %v2089 = vunpack.c.h.b16 %v1353
    %v2090 = vunpack.c.l.b16 %v1354
    %v2091 = vunpack.c.h.b16 %v1354
    %v2092 = vunpack.c.l.b16 %v1355
    %v2093 = vunpack.c.h.b16 %v1355
    %v2094 = vunpack.c.l.b16 %v1356
    %v2095 = vunpack.c.h.b16 %v1356
    %v2096 = vunpack.c.l.b16 %v1357
    %v2097 = vunpack.c.h.b16 %v1357
    %v2098 = vunpack.c.l.b16 %v1358
    %v2099 = vunpack.c.h.b16 %v1358
    %v2100 = vunpack.c.l.b16 %v1359
    %v2101 = vunpack.c.h.b16 %v1359
    %v2102 = vunpack.c.l.b16 %v1360
    %v2103 = vunpack.c.h.b16 %v1360
    %v2104 = vunpack.c.l.b16 %v1361
    %v2105 = vunpack.c.h.b16 %v1361
    %v2106 = vunpack.c.l.b16 %v1362
    %v2107 = vunpack.c.h.b16 %v1362
    %v2108 = vunpack.c.l.b16 %v1363
    %v2109 = vunpack.c.h.b16 %v1363
    %v2110 = vunpack.c.l.b16 %v1364
    %v2111 = vunpack.c.h.b16 %v1364
    %v2112 = vunpack.c.l.b16 %v1365
    %v2113 = vunpack.c.h.b16 %v1365
    %v2114 = vunpack.c.l.b16 %v1366
    %v2115 = vunpack.c.h.b16 %v1366
    %v2116 = vunpack.c.l.b16 %v1367
    %v2117 = vunpack.c.h.b16 %v1367
    %v2118 = vunpack.c.l.b16 %v1368
    %v2119 = vunpack.c.h.b16 %v1368
    %v2120 = vunpack.c.l.b16 %v1369
    %v2121 = vunpack.c.h.b16 %v1369
    %v2122 = vunpack.c.l.b16 %v1370
    %v2123 = vunpack.c.h.b16 %v1370
    %v2124 = vunpack.c.l.b16 %v1371
    %v2125 = vunpack.c.h.b16 %v1371
    %v2126 = vunpack.c.l.b16 %v1372
    %v2127 = vunpack.c.h.b16 %v1372
    %v2128 = vunpack.c.l.b16 %v1373
    %v2129 = vunpack.c.h.b16 %v1373
    %v2130 = vunpack.c.l.b16 %v1374
    %v2131 = vunpack.c.h.b16 %v1374
    %v2132 = vunpack.c.l.b16 %v1375
    %v2133 = vunpack.c.h.b16 %v1375
    %v2134 = vunpack.c.l.b16 %v1376
    %v2135 = vunpack.c.h.b16 %v1376
    %v2136 = vunpack.c.l.b16 %v1377
    %v2137 = vunpack.c.h.b16 %v1377
    %v2138 = vunpack.c.l.b16 %v1378
    %v2139 = vunpack.c.h.b16 %v1378
    %v2140 = vunpack.c.l.b16 %v1379
    %v2141 = vunpack.c.h.b16 %v1379
    %v2142 = vunpack.c.l.b16 %v1380
    %v2143 = vunpack.c.h.b16 %v1380
    %v2144 = vunpack.c.l.b16 %v1381
    %v2145 = vunpack.c.h.b16 %v1381
    %v2146 = vunpack.c.l.b16 %v1382
    %v2147 = vunpack.c.h.b16 %v1382
    %v2148 = vunpack.c.l.b16 %v1383
    %v2149 = vunpack.c.h.b16 %v1383
    %v2150 = vunpack.c.l.b16 %v1384
    %v2151 = vunpack.c.h.b16 %v1384
    %v2152 = vunpack.c.l.b16 %v1385
    %v2153 = vunpack.c.h.b16 %v1385
    %v2154 = vunpack.c.l.b16 %v1386
    %v2155 = vunpack.c.h.b16 %v1386
    %v2156 = vunpack.c.l.b16 %v1387
    %v2157 = vunpack.c.h.b16 %v1387
    %v2158 = vunpack.c.l.b16 %v1388
    %v2159 = vunpack.c.h.b16 %v1388
    %v2160 = vunpack.c.l.b16 %v1389
    %v2161 = vunpack.c.h.b16 %v1389
    %v2162 = vunpack.c.l.b16 %v1390
    %v2163 = vunpack.c.h.b16 %v1390
    %v2164 = vunpack.c.l.b16 %v1391
    %v2165 = vunpack.c.h.b16 %v1391
    %v2166 = vunpack.c.l.b16 %v1392
    %v2167 = vunpack.c.h.b16 %v1392
    %v2168 = vunpack.c.l.b16 %v1393
    %v2169 = vunpack.c.h.b16 %v1393
    %v2170 = vunpack.c.l.b16 %v1394
    %v2171 = vunpack.c.h.b16 %v1394
    %v2172 = vunpack.c.l.b16 %v1395
    %v2173 = vunpack.c.h.b16 %v1395
    %v2174 = vunpack.c.l.b16 %v1396
    %v2175 = vunpack.c.h.b16 %v1396
    %v2176 = vunpack.c.l.b16 %v1397
    %v2177 = vunpack.c.h.b16 %v1397
    %v2178 = vunpack.c.l.b16 %v1398
    %v2179 = vunpack.c.h.b16 %v1398
    %v2180 = vunpack.c.l.b16 %v1399
    %v2181 = vunpack.c.h.b16 %v1399
    %v2182 = vunpack.c.l.b16 %v1400
    %v2183 = vunpack.c.h.b16 %v1400
    %v2184 = vunpack.c.l.b16 %v1401
    %v2185 = vunpack.c.h.b16 %v1401
    %v2186 = vunpack.c.l.b16 %v1402
    %v2187 = vunpack.c.h.b16 %v1402
    %v2188 = vunpack.c.l.b16 %v1403
    %v2189 = vunpack.c.h.b16 %v1403
    %v2190 = vunpack.c.l.b16 %v1404
    %v2191 = vunpack.c.h.b16 %v1404
    %v2192 = vunpack.c.l.b16 %v1405
    %v2193 = vunpack.c.h.b16 %v1405
    %v2194 = vunpack.c.l.b16 %v1406
    %v2195 = vunpack.c.h.b16 %v1406
    %v2196 = vunpack.c.l.b16 %v1407
    %v2197 = vunpack.c.h.b16 %v1407
    %v2198 = vpack.c.b16 %v1690, %v1686
    %v2199 = vpack.c.b16 %v1691, %v1687
    %v2200 = vpack.c.b16 %v1692, %v1688
    %v2201 = vpack.c.b16 %v1693, %v1689
    %v2202 = vpack.c.b16 %v1698, %v1694
    %v2203 = vpack.c.b16 %v1699, %v1695
    %v2204 = vpack.c.b16 %v1700, %v1696
    %v2205 = vpack.c.b16 %v1701, %v1697
    %v2206 = vpack.c.b16 %v1706, %v1702
    %v2207 = vpack.c.b16 %v1707, %v1703
    %v2208 = vpack.c.b16 %v1708, %v1704
    %v2209 = vpack.c.b16 %v1709, %v1705
    %v2210 = vpack.c.b16 %v1714, %v1710
    %v2211 = vpack.c.b16 %v1715, %v1711
    %v2212 = vpack.c.b16 %v1716, %v1712
    %v2213 = vpack.c.b16 %v1717, %v1713
    %v2214 = vpack.c.b16 %v1722, %v1718
    %v2215 = vpack.c.b16 %v1723, %v1719
    %v2216 = vpack.c.b16 %v1724, %v1720
    %v2217 = vpack.c.b16 %v1725, %v1721
    %v2218 = vpack.c.b16 %v1730, %v1726
    %v2219 = vpack.c.b16 %v1731, %v1727
    %v2220 = vpack.c.b16 %v1732, %v1728
    %v2221 = vpack.c.b16 %v1733, %v1729
    %v2222 = vpack.c.b16 %v1738, %v1734
    %v2223 = vpack.c.b16 %v1739, %v1735
    %v2224 = vpack.c.b16 %v1740, %v1736
    %v2225 = vpack.c.b16 %v1741, %v1737
    %v2226 = vpack.c.b16 %v1746, %v1742
    %v2227 = vpack.c.b16 %v1747, %v1743
    %v2228 = vpack.c.b16 %v1748, %v1744
    %v2229 = vpack.c.b16 %v1749, %v1745
    %v2230 = vpack.c.b16 %v1754, %v1750
    %v2231 = vpack.c.b16 %v1755, %v1751
    %v2232 = vpack.c.b16 %v1756, %v1752
    %v2233 = vpack.c.b16 %v1757, %v1753
    %v2234 = vpack.c.b16 %v1762, %v1758
    %v2235 = vpack.c.b16 %v1763, %v1759
    %v2236 = vpack.c.b16 %v1764, %v1760
    %v2237 = vpack.c.b16 %v1765, %v1761
    %v2238 = vpack.c.b16 %v1770, %v1766
    %v2239 = vpack.c.b16 %v1771, %v1767
    %v2240 = vpack.c.b16 %v1772, %v1768
    %v2241 = vpack.c.b16 %v1773, %v1769
    %v2242 = vpack.c.b16 %v1778, %v1774
    %v2243 = vpack.c.b16 %v1779, %v1775
    %v2244 = vpack.c.b16 %v1780, %v1776
    %v2245 = vpack.c.b16 %v1781, %v1777
    %v2246 = vpack.c.b16 %v1786, %v1782
    %v2247 = vpack.c.b16 %v1787, %v1783
    %v2248 = vpack.c.b16 %v1788, %v1784
    %v2249 = vpack.c.b16 %v1789, %v1785
    %v2250 = vpack.c.b16 %v1794, %v1790
    %v2251 = vpack.c.b16 %v1795, %v1791
    %v2252 = vpack.c.b16 %v1796, %v1792
    %v2253 = vpack.c.b16 %v1797, %v1793
    %v2254 = vpack.c.b16 %v1802, %v1798
    %v2255 = vpack.c.b16 %v1803, %v1799
    %v2256 = vpack.c.b16 %v1804, %v1800
    %v2257 = vpack.c.b16 %v1805, %v1801
    %v2258 = vpack.c.b16 %v1810, %v1806
    %v2259 = vpack.c.b16 %v1811, %v1807
    %v2260 = vpack.c.b16 %v1812, %v1808
    %v2261 = vpack.c.b16 %v1813, %v1809
    %v2262 = vpack.c.b16 %v1818, %v1814
    %v2263 = vpack.c.b16 %v1819, %v1815
    %v2264 = vpack.c.b16 %v1820, %v1816
    %v2265 = vpack.c.b16 %v1821, %v1817
    %v2266 = vpack.c.b16 %v1826, %v1822
    %v2267 = vpack.c.b16 %v1827, %v1823
    %v2268 = vpack.c.b16 %v1828, %v1824
    %v2269 = vpack.c.b16 %v1829, %v1825
    %v2270 = vpack.c.b16 %v1834, %v1830
    %v2271 = vpack.c.b16 %v1835, %v1831
    %v2272 = vpack.c.b16 %v1836, %v1832
    %v2273 = vpack.c.b16 %v1837, %v1833
    %v2274 = vpack.c.b16 %v1842, %v1838
    %v2275 = vpack.c.b16 %v1843, %v1839
    %v2276 = vpack.c.b16 %v1844, %v1840
    %v2277 = vpack.c.b16 %v1845, %v1841
    %v2278 = vpack.c.b16 %v1850, %v1846
    %v2279 = vpack.c.b16 %v1851, %v1847
    %v2280 = vpack.c.b16 %v1852, %v1848
    %v2281 = vpack.c.b16 %v1853, %v1849
    %v2282 = vpack.c.b16 %v1858, %v1854
    %v2283 = vpack.c.b16 %v1859, %v1855
    %v2284 = vpack.c.b16 %v1860, %v1856
    %v2285 = vpack.c.b16 %v1861, %v1857
    %v2286 = vpack.c.b16 %v1866, %v1862
    %v2287 = vpack.c.b16 %v1867, %v1863
    %v2288 = vpack.c.b16 %v1868, %v1864
    %v2289 = vpack.c.b16 %v1869, %v1865
    %v2290 = vpack.c.b16 %v1874, %v1870
    %v2291 = vpack.c.b16 %v1875, %v1871
    %v2292 = vpack.c.b16 %v1876, %v1872
    %v2293 = vpack.c.b16 %v1877, %v1873
    %v2294 = vpack.c.b16 %v1882, %v1878
    %v2295 = vpack.c.b16 %v1883, %v1879
    %v2296 = vpack.c.b16 %v1884, %v1880
    %v2297 = vpack.c.b16 %v1885, %v1881
    %v2298 = vpack.c.b16 %v1890, %v1886
    %v2299 = vpack.c.b16 %v1891, %v1887
    %v2300 = vpack.c.b16 %v1892, %v1888
    %v2301 = vpack.c.b16 %v1893, %v1889
    %v2302 = vpack.c.b16 %v1898, %v1894
    %v2303 = vpack.c.b16 %v1899, %v1895
    %v2304 = vpack.c.b16 %v1900, %v1896
    %v2305 = vpack.c.b16 %v1901, %v1897
    %v2306 = vpack.c.b16 %v1906, %v1902
    %v2307 = vpack.c.b16 %v1907, %v1903
    %v2308 = vpack.c.b16 %v1908, %v1904
    %v2309 = vpack.c.b16 %v1909, %v1905
    %v2310 = vpack.c.b16 %v1914, %v1910
    %v2311 = vpack.c.b16 %v1915, %v1911
    %v2312 = vpack.c.b16 %v1916, %v1912
    %v2313 = vpack.c.b16 %v1917, %v1913
    %v2314 = vpack.c.b16 %v1922, %v1918
    %v2315 = vpack.c.b16 %v1923, %v1919
    %v2316 = vpack.c.b16 %v1924, %v1920
    %v2317 = vpack.c.b16 %v1925, %v1921
    %v2318 = vpack.c.b16 %v1930, %v1926
    %v2319 = vpack.c.b16 %v1931, %v1927
    %v2320 = vpack.c.b16 %v1932, %v1928
    %v2321 = vpack.c.b16 %v1933, %v1929
    %v2322 = vpack.c.b16 %v1938, %v1934
    %v2323 = vpack.c.b16 %v1939, %v1935
    %v2324 = vpack.c.b16 %v1940, %v1936
    %v2325 = vpack.c.b16 %v1941, %v1937
    %v2326 = vpack.c.b16 %v1946, %v1942
    %v2327 = vpack.c.b16 %v1947, %v1943
    %v2328 = vpack.c.b16 %v1948, %v1944
    %v2329 = vpack.c.b16 %v1949, %v1945
    %v2330 = vpack.c.b16 %v1954, %v1950
    %v2331 = vpack.c.b16 %v1955, %v1951
    %v2332 = vpack.c.b16 %v1956, %v1952
    %v2333 = vpack.c.b16 %v1957, %v1953
    %v2334 = vpack.c.b16 %v1962, %v1958
    %v2335 = vpack.c.b16 %v1963, %v1959
    %v2336 = vpack.c.b16 %v1964, %v1960
    %v2337 = vpack.c.b16 %v1965, %v1961
    %v2338 = vpack.c.b16 %v1970, %v1966
    %v2339 = vpack.c.b16 %v1971, %v1967
    %v2340 = vpack.c.b16 %v1972, %v1968
    %v2341 = vpack.c.b16 %v1973, %v1969
    %v2342 = vpack.c.b16 %v1978, %v1974
    %v2343 = vpack.c.b16 %v1979, %v1975
    %v2344 = vpack.c.b16 %v1980, %v1976
    %v2345 = vpack.c.b16 %v1981, %v1977
    %v2346 = vpack.c.b16 %v1986, %v1982
    %v2347 = vpack.c.b16 %v1987, %v1983
    %v2348 = vpack.c.b16 %v1988, %v1984
    %v2349 = vpack.c.b16 %v1989, %v1985
    %v2350 = vpack.c.b16 %v1994, %v1990
    %v2351 = vpack.c.b16 %v1995, %v1991
    %v2352 = vpack.c.b16 %v1996, %v1992
    %v2353 = vpack.c.b16 %v1997, %v1993
    %v2354 = vpack.c.b16 %v2002, %v1998
    %v2355 = vpack.c.b16 %v2003, %v1999
    %v2356 = vpack.c.b16 %v2004, %v2000
    %v2357 = vpack.c.b16 %v2005, %v2001
    %v2358 = vpack.c.b16 %v2010, %v2006
    %v2359 = vpack.c.b16 %v2011, %v2007
    %v2360 = vpack.c.b16 %v2012, %v2008
    %v2361 = vpack.c.b16 %v2013, %v2009
    %v2362 = vpack.c.b16 %v2018, %v2014
    %v2363 = vpack.c.b16 %v2019, %v2015
    %v2364 = vpack.c.b16 %v2020, %v2016
    %v2365 = vpack.c.b16 %v2021, %v2017
    %v2366 = vpack.c.b16 %v2026, %v2022
    %v2367 = vpack.c.b16 %v2027, %v2023
    %v2368 = vpack.c.b16 %v2028, %v2024
    %v2369 = vpack.c.b16 %v2029, %v2025
    %v2370 = vpack.c.b16 %v2034, %v2030
    %v2371 = vpack.c.b16 %v2035, %v2031
    %v2372 = vpack.c.b16 %v2036, %v2032
    %v2373 = vpack.c.b16 %v2037, %v2033
    %v2374 = vpack.c.b16 %v2042, %v2038
    %v2375 = vpack.c.b16 %v2043, %v2039
    %v2376 = vpack.c.b16 %v2044, %v2040
    %v2377 = vpack.c.b16 %v2045, %v2041
    %v2378 = vpack.c.b16 %v2050, %v2046
    %v2379 = vpack.c.b16 %v2051, %v2047
    %v2380 = vpack.c.b16 %v2052, %v2048
    %v2381 = vpack.c.b16 %v2053, %v2049
    %v2382 = vpack.c.b16 %v2058, %v2054
    %v2383 = vpack.c.b16 %v2059, %v2055
    %v2384 = vpack.c.b16 %v2060, %v2056
    %v2385 = vpack.c.b16 %v2061, %v2057
    %v2386 = vpack.c.b16 %v2066, %v2062
    %v2387 = vpack.c.b16 %v2067, %v2063
    %v2388 = vpack.c.b16 %v2068, %v2064
    %v2389 = vpack.c.b16 %v2069, %v2065
    %v2390 = vpack.c.b16 %v2074, %v2070
    %v2391 = vpack.c.b16 %v2075, %v2071
    %v2392 = vpack.c.b16 %v2076, %v2072
    %v2393 = vpack.c.b16 %v2077, %v2073
    %v2394 = vpack.c.b16 %v2082, %v2078
    %v2395 = vpack.c.b16 %v2083, %v2079
    %v2396 = vpack.c.b16 %v2084, %v2080
    %v2397 = vpack.c.b16 %v2085, %v2081
    %v2398 = vpack.c.b16 %v2090, %v2086
    %v2399 = vpack.c.b16 %v2091, %v2087
    %v2400 = vpack.c.b16 %v2092, %v2088
    %v2401 = vpack.c.b16 %v2093, %v2089
    %v2402 = vpack.c.b16 %v2098, %v2094
    %v2403 = vpack.c.b16 %v2099, %v2095
    %v2404 = vpack.c.b16 %v2100, %v2096
    %v2405 = vpack.c.b16 %v2101, %v2097
    %v2406 = vpack.c.b16 %v2106, %v2102
    %v2407 = vpack.c.b16 %v2107, %v2103
    %v2408 = vpack.c.b16 %v2108, %v2104
    %v2409 = vpack.c.b16 %v2109, %v2105
    %v2410 = vpack.c.b16 %v2114, %v2110
    %v2411 = vpack.c.b16 %v2115, %v2111
    %v2412 = vpack.c.b16 %v2116, %v2112
    %v2413 = vpack.c.b16 %v2117, %v2113
    %v2414 = vpack.c.b16 %v2122, %v2118
    %v2415 = vpack.c.b16 %v2123, %v2119
    %v2416 = vpack.c.b16 %v2124, %v2120
    %v2417 = vpack.c.b16 %v2125, %v2121
    %v2418 = vpack.c.b16 %v2130, %v2126
    %v2419 = vpack.c.b16 %v2131, %v2127
    %v2420 = vpack.c.b16 %v2132, %v2128
    %v2421 = vpack.c.b16 %v2133, %v2129
    %v2422 = vpack.c.b16 %v2138, %v2134
    %v2423 = vpack.c.b16 %v2139, %v2135
    %v2424 = vpack.c.b16 %v2140, %v2136
    %v2425 = vpack.c.b16 %v2141, %v2137
    %v2426 = vpack.c.b16 %v2146, %v2142
    %v2427 = vpack.c.b16 %v2147, %v2143
    %v2428 = vpack.c.b16 %v2148, %v2144
    %v2429 = vpack.c.b16 %v2149, %v2145
    %v2430 = vpack.c.b16 %v2154, %v2150
    %v2431 = vpack.c.b16 %v2155, %v2151
    %v2432 = vpack.c.b16 %v2156, %v2152
    %v2433 = vpack.c.b16 %v2157, %v2153
    %v2434 = vpack.c.b16 %v2162, %v2158
    %v2435 = vpack.c.b16 %v2163, %v2159
    %v2436 = vpack.c.b16 %v2164, %v2160
    %v2437 = vpack.c.b16 %v2165, %v2161
    %v2438 = vpack.c.b16 %v2170, %v2166
    %v2439 = vpack.c.b16 %v2171, %v2167
    %v2440 = vpack.c.b16 %v2172, %v2168
    %v2441 = vpack.c.b16 %v2173, %v2169
    %v2442 = vpack.c.b16 %v2178, %v2174
    %v2443 = vpack.c.b16 %v2179, %v2175
    %v2444 = vpack.c.b16 %v2180, %v2176
    %v2445 = vpack.c.b16 %v2181, %v2177
    %v2446 = vpack.c.b16 %v2186, %v2182
    %v2447 = vpack.c.b16 %v2187, %v2183
    %v2448 = vpack.c.b16 %v2188, %v2184
    %v2449 = vpack.c.b16 %v2189, %v2185
    %v2450 = vpack.c.b16 %v2194, %v2190
    %v2451 = vpack.c.b16 %v2195, %v2191
    %v2452 = vpack.c.b16 %v2196, %v2192
    %v2453 = vpack.c.b16 %v2197, %v2193
    %2710 = vmatprep.subr.bf16.mxu0 %v2199
    %2711 = vmatpush1.bf16.msra.mxu0 %v2198
    %2712 = vmatprep.subr.bf16.mxu0 %v2203
    %2713 = vmatpush1.bf16.msra.mxu0 %v2202
    %2714 = vmatprep.subr.bf16.mxu0 %v2207
    %2715 = vmatpush1.bf16.msra.mxu0 %v2206
    %2716 = vmatprep.subr.bf16.mxu0 %v2211
    %2717 = vmatpush1.bf16.msra.mxu0 %v2210
    %2718 = vmatprep.subr.bf16.mxu0 %v2215
    %2719 = vmatpush1.bf16.msra.mxu0 %v2214
    %2720 = vmatprep.subr.bf16.mxu0 %v2219
    %2721 = vmatpush1.bf16.msra.mxu0 %v2218
    %2722 = vmatprep.subr.bf16.mxu0 %v2223
    %2723 = vmatpush1.bf16.msra.mxu0 %v2222
    %2724 = vmatprep.subr.bf16.mxu0 %v2227
    %2725 = vmatpush1.bf16.msra.mxu0 %v2226
    %2726 = vmatprep.subr.bf16.mxu0 %v2231
    %2727 = vmatpush1.bf16.msra.mxu0 %v2230
    %2728 = vmatprep.subr.bf16.mxu0 %v2235
    %2729 = vmatpush1.bf16.msra.mxu0 %v2234
    %2730 = vmatprep.subr.bf16.mxu0 %v2239
    %2731 = vmatpush1.bf16.msra.mxu0 %v2238
    %2732 = vmatprep.subr.bf16.mxu0 %v2243
    %2733 = vmatpush1.bf16.msra.mxu0 %v2242
    %2734 = vmatprep.subr.bf16.mxu0 %v2247
    %2735 = vmatpush1.bf16.msra.mxu0 %v2246
    %2736 = vmatprep.subr.bf16.mxu0 %v2251
    %2737 = vmatpush1.bf16.msra.mxu0 %v2250
    %2738 = vmatprep.subr.bf16.mxu0 %v2255
    %2739 = vmatpush1.bf16.msra.mxu0 %v2254
    %2740 = vmatprep.subr.bf16.mxu0 %v2259
    %2741 = vmatpush1.bf16.msra.mxu0 %v2258
    %2742 = vmatprep.mubr.bf16.mxu0 %v1145
    %2743 = vmatmul.mubr.bf16.gmra.mrb[0].mxu0 %v1144
    %v2744 = vpop.f32.mrb[0].mxu0
    %v2745 = vadd.f32 %v1413, %v2744
    %v2746 = vpop.f32.mrb[0].mxu0
    %v2747 = vadd.f32 %v1417, %v2746
    %v2748 = vpop.f32.mrb[0].mxu0
    %v2749 = vpop.f32.mrb[0].mxu0
    %2750 = vdwg.mxu0
    %2751 = vmatprep.subr.bf16.mxu0 %v2263
    %2752 = vmatpush1.bf16.msra.mxu0 %v2262
    %2753 = vmatprep.subr.bf16.mxu0 %v2267
    %2754 = vmatpush1.bf16.msra.mxu0 %v2266
    %2755 = vmatprep.subr.bf16.mxu0 %v2271
    %2756 = vmatpush1.bf16.msra.mxu0 %v2270
    %2757 = vmatprep.subr.bf16.mxu0 %v2275
    %2758 = vmatpush1.bf16.msra.mxu0 %v2274
    %2759 = vmatprep.subr.bf16.mxu0 %v2279
    %2760 = vmatpush1.bf16.msra.mxu0 %v2278
    %2761 = vmatprep.subr.bf16.mxu0 %v2283
    %2762 = vmatpush1.bf16.msra.mxu0 %v2282
    %2763 = vmatprep.subr.bf16.mxu0 %v2287
    %2764 = vmatpush1.bf16.msra.mxu0 %v2286
    %2765 = vmatprep.subr.bf16.mxu0 %v2291
    %2766 = vmatpush1.bf16.msra.mxu0 %v2290
    %2767 = vmatprep.subr.bf16.mxu0 %v2295
    %2768 = vmatpush1.bf16.msra.mxu0 %v2294
    %2769 = vmatprep.subr.bf16.mxu0 %v2299
    %2770 = vmatpush1.bf16.msra.mxu0 %v2298
    %2771 = vmatprep.subr.bf16.mxu0 %v2303
    %2772 = vmatpush1.bf16.msra.mxu0 %v2302
    %2773 = vmatprep.subr.bf16.mxu0 %v2307
    %2774 = vmatpush1.bf16.msra.mxu0 %v2306
    %2775 = vmatprep.subr.bf16.mxu0 %v2311
    %2776 = vmatpush1.bf16.msra.mxu0 %v2310
    %2777 = vmatprep.subr.bf16.mxu0 %v2315
    %2778 = vmatpush1.bf16.msra.mxu0 %v2314
    %2779 = vmatprep.subr.bf16.mxu0 %v2319
    %2780 = vmatpush1.bf16.msra.mxu0 %v2318
    %2781 = vmatprep.subr.bf16.mxu0 %v2323
    %2782 = vmatpush1.bf16.msra.mxu0 %v2322
    %2783 = vmatprep.mubr.bf16.mxu0 %v1147
    %2784 = vmatmul.mubr.bf16.gmra.mrb[0].mxu0 %v1146
    %v2785 = vpop.f32.mrb[0].mxu0
    %v2786 = vadd.f32 %v2745, %v2785
    %v2787 = vpop.f32.mrb[0].mxu0
    %v2788 = vadd.f32 %v2747, %v2787
    %v2789 = vpop.f32.mrb[0].mxu0
    %v2790 = vpop.f32.mrb[0].mxu0
    %2791 = vdwg.mxu0
    %2792 = vmatprep.subr.bf16.mxu0 %v2327
    %2793 = vmatpush1.bf16.msra.mxu0 %v2326
    %2794 = vmatprep.subr.bf16.mxu0 %v2331
    %2795 = vmatpush1.bf16.msra.mxu0 %v2330
    %2796 = vmatprep.subr.bf16.mxu0 %v2335
    %2797 = vmatpush1.bf16.msra.mxu0 %v2334
    %2798 = vmatprep.subr.bf16.mxu0 %v2339
    %2799 = vmatpush1.bf16.msra.mxu0 %v2338
    %2800 = vmatprep.subr.bf16.mxu0 %v2343
    %2801 = vmatpush1.bf16.msra.mxu0 %v2342
    %2802 = vmatprep.subr.bf16.mxu0 %v2347
    %2803 = vmatpush1.bf16.msra.mxu0 %v2346
    %2804 = vmatprep.subr.bf16.mxu0 %v2351
    %2805 = vmatpush1.bf16.msra.mxu0 %v2350
    %2806 = vmatprep.subr.bf16.mxu0 %v2355
    %2807 = vmatpush1.bf16.msra.mxu0 %v2354
    %2808 = vmatprep.subr.bf16.mxu0 %v2359
    %2809 = vmatpush1.bf16.msra.mxu0 %v2358
    %2810 = vmatprep.subr.bf16.mxu0 %v2363
    %2811 = vmatpush1.bf16.msra.mxu0 %v2362
    %2812 = vmatprep.subr.bf16.mxu0 %v2367
    %2813 = vmatpush1.bf16.msra.mxu0 %v2366
    %2814 = vmatprep.subr.bf16.mxu0 %v2371
    %2815 = vmatpush1.bf16.msra.mxu0 %v2370
    %2816 = vmatprep.subr.bf16.mxu0 %v2375
    %2817 = vmatpush1.bf16.msra.mxu0 %v2374
    %2818 = vmatprep.subr.bf16.mxu0 %v2379
    %2819 = vmatpush1.bf16.msra.mxu0 %v2378
    %2820 = vmatprep.subr.bf16.mxu0 %v2383
    %2821 = vmatpush1.bf16.msra.mxu0 %v2382
    %2822 = vmatprep.subr.bf16.mxu0 %v2387
    %2823 = vmatpush1.bf16.msra.mxu0 %v2386
    %2824 = vmatprep.mubr.bf16.mxu0 %v1149
    %2825 = vmatmul.mubr.bf16.gmra.mrb[0].mxu0 %v1148
    %v2826 = vpop.f32.mrb[0].mxu0
    %v2827 = vadd.f32 %v2786, %v2826
    %v2828 = vpop.f32.mrb[0].mxu0
    %v2829 = vadd.f32 %v2788, %v2828
    %v2830 = vpop.f32.mrb[0].mxu0
    %v2831 = vpop.f32.mrb[0].mxu0
    %2832 = vdwg.mxu0
    %2833 = vmatprep.subr.bf16.mxu0 %v2391
    %2834 = vmatpush1.bf16.msra.mxu0 %v2390
    %2835 = vmatprep.subr.bf16.mxu0 %v2395
    %2836 = vmatpush1.bf16.msra.mxu0 %v2394
    %2837 = vmatprep.subr.bf16.mxu0 %v2399
    %2838 = vmatpush1.bf16.msra.mxu0 %v2398
    %2839 = vmatprep.subr.bf16.mxu0 %v2403
    %2840 = vmatpush1.bf16.msra.mxu0 %v2402
    %2841 = vmatprep.subr.bf16.mxu0 %v2407
    %2842 = vmatpush1.bf16.msra.mxu0 %v2406
    %2843 = vmatprep.subr.bf16.mxu0 %v2411
    %2844 = vmatpush1.bf16.msra.mxu0 %v2410
    %2845 = vmatprep.subr.bf16.mxu0 %v2415
    %2846 = vmatpush1.bf16.msra.mxu0 %v2414
    %2847 = vmatprep.subr.bf16.mxu0 %v2419
    %2848 = vmatpush1.bf16.msra.mxu0 %v2418
    %2849 = vmatprep.subr.bf16.mxu0 %v2423
    %2850 = vmatpush1.bf16.msra.mxu0 %v2422
    %2851 = vmatprep.subr.bf16.mxu0 %v2427
    %2852 = vmatpush1.bf16.msra.mxu0 %v2426
    %2853 = vmatprep.subr.bf16.mxu0 %v2431
    %2854 = vmatpush1.bf16.msra.mxu0 %v2430
    %2855 = vmatprep.subr.bf16.mxu0 %v2435
    %2856 = vmatpush1.bf16.msra.mxu0 %v2434
    %2857 = vmatprep.subr.bf16.mxu0 %v2439
    %2858 = vmatpush1.bf16.msra.mxu0 %v2438
    %2859 = vmatprep.subr.bf16.mxu0 %v2443
    %2860 = vmatpush1.bf16.msra.mxu0 %v2442
    %2861 = vmatprep.subr.bf16.mxu0 %v2447
    %2862 = vmatpush1.bf16.msra.mxu0 %v2446
    %2863 = vmatprep.subr.bf16.mxu0 %v2451
    %2864 = vmatpush1.bf16.msra.mxu0 %v2450
    %2865 = vmatprep.mubr.bf16.mxu0 %v1151
    %2866 = vmatmul.mubr.bf16.gmra.mrb[0].mxu0 %v1150
    %v2867 = vpop.f32.mrb[0].mxu0
    %v2868 = vadd.f32 %v2827, %v2867
    %v2869 = vpop.f32.mrb[0].mxu0
    %v2870 = vadd.f32 %v2829, %v2869
    %v2871 = vpop.f32.mrb[0].mxu0
    %v2872 = vpop.f32.mrb[0].mxu0
    %2873 = vdwg.mxu0
    %2874 = vmatprep.subr.bf16.mxu0 %v2201
    %2875 = vmatpush1.bf16.msra.mxu0 %v2200
    %2876 = vmatprep.subr.bf16.mxu0 %v2205
    %2877 = vmatpush1.bf16.msra.mxu0 %v2204
    %2878 = vmatprep.subr.bf16.mxu0 %v2209
    %2879 = vmatpush1.bf16.msra.mxu0 %v2208
    %2880 = vmatprep.subr.bf16.mxu0 %v2213
    %2881 = vmatpush1.bf16.msra.mxu0 %v2212
    %2882 = vmatprep.subr.bf16.mxu0 %v2217
    %2883 = vmatpush1.bf16.msra.mxu0 %v2216
    %2884 = vmatprep.subr.bf16.mxu0 %v2221
    %2885 = vmatpush1.bf16.msra.mxu0 %v2220
    %2886 = vmatprep.subr.bf16.mxu0 %v2225
    %2887 = vmatpush1.bf16.msra.mxu0 %v2224
    %2888 = vmatprep.subr.bf16.mxu0 %v2229
    %2889 = vmatpush1.bf16.msra.mxu0 %v2228
    %2890 = vmatprep.subr.bf16.mxu0 %v2233
    %2891 = vmatpush1.bf16.msra.mxu0 %v2232
    %2892 = vmatprep.subr.bf16.mxu0 %v2237
    %2893 = vmatpush1.bf16.msra.mxu0 %v2236
    %2894 = vmatprep.subr.bf16.mxu0 %v2241
    %2895 = vmatpush1.bf16.msra.mxu0 %v2240
    %2896 = vmatprep.subr.bf16.mxu0 %v2245
    %2897 = vmatpush1.bf16.msra.mxu0 %v2244
    %2898 = vmatprep.subr.bf16.mxu0 %v2249
    %2899 = vmatpush1.bf16.msra.mxu0 %v2248
    %2900 = vmatprep.subr.bf16.mxu0 %v2253
    %2901 = vmatpush1.bf16.msra.mxu0 %v2252
    %2902 = vmatprep.subr.bf16.mxu0 %v2257
    %2903 = vmatpush1.bf16.msra.mxu0 %v2256
    %2904 = vmatprep.subr.bf16.mxu0 %v2261
    %2905 = vmatpush1.bf16.msra.mxu0 %v2260
    %2906 = vmatprep.mubr.bf16.mxu0 %v1145
    %2907 = vmatmul.mubr.bf16.gmra.mrb[0].mxu0 %v1144
    %v2908 = vpop.f32.mrb[0].mxu0
    %v2909 = vadd.f32 %v1421, %v2908
    %v2910 = vpop.f32.mrb[0].mxu0
    %v2911 = vadd.f32 %v1425, %v2910
    %v2912 = vpop.f32.mrb[0].mxu0
    %v2913 = vpop.f32.mrb[0].mxu0
    %2914 = vdwg.mxu0
    %2915 = vmatprep.subr.bf16.mxu0 %v2265
    %2916 = vmatpush1.bf16.msra.mxu0 %v2264
    %2917 = vmatprep.subr.bf16.mxu0 %v2269
    %2918 = vmatpush1.bf16.msra.mxu0 %v2268
    %2919 = vmatprep.subr.bf16.mxu0 %v2273
    %2920 = vmatpush1.bf16.msra.mxu0 %v2272
    %2921 = vmatprep.subr.bf16.mxu0 %v2277
    %2922 = vmatpush1.bf16.msra.mxu0 %v2276
    %2923 = vmatprep.subr.bf16.mxu0 %v2281
    %2924 = vmatpush1.bf16.msra.mxu0 %v2280
    %2925 = vmatprep.subr.bf16.mxu0 %v2285
    %2926 = vmatpush1.bf16.msra.mxu0 %v2284
    %2927 = vmatprep.subr.bf16.mxu0 %v2289
    %2928 = vmatpush1.bf16.msra.mxu0 %v2288
    %2929 = vmatprep.subr.bf16.mxu0 %v2293
    %2930 = vmatpush1.bf16.msra.mxu0 %v2292
    %2931 = vmatprep.subr.bf16.mxu0 %v2297
    %2932 = vmatpush1.bf16.msra.mxu0 %v2296
    %2933 = vmatprep.subr.bf16.mxu0 %v2301
    %2934 = vmatpush1.bf16.msra.mxu0 %v2300
    %2935 = vmatprep.subr.bf16.mxu0 %v2305
    %2936 = vmatpush1.bf16.msra.mxu0 %v2304
    %2937 = vmatprep.subr.bf16.mxu0 %v2309
    %2938 = vmatpush1.bf16.msra.mxu0 %v2308
    %2939 = vmatprep.subr.bf16.mxu0 %v2313
    %2940 = vmatpush1.bf16.msra.mxu0 %v2312
    %2941 = vmatprep.subr.bf16.mxu0 %v2317
    %2942 = vmatpush1.bf16.msra.mxu0 %v2316
    %2943 = vmatprep.subr.bf16.mxu0 %v2321
    %2944 = vmatpush1.bf16.msra.mxu0 %v2320
    %2945 = vmatprep.subr.bf16.mxu0 %v2325
    %2946 = vmatpush1.bf16.msra.mxu0 %v2324
    %2947 = vmatprep.mubr.bf16.mxu0 %v1147
    %2948 = vmatmul.mubr.bf16.gmra.mrb[0].mxu0 %v1146
    %v2949 = vpop.f32.mrb[0].mxu0
    %v2950 = vadd.f32 %v2909, %v2949
    %v2951 = vpop.f32.mrb[0].mxu0
    %v2952 = vadd.f32 %v2911, %v2951
    %v2953 = vpop.f32.mrb[0].mxu0
    %v2954 = vpop.f32.mrb[0].mxu0
    %2955 = vdwg.mxu0
    %2956 = vmatprep.subr.bf16.mxu0 %v2329
    %2957 = vmatpush1.bf16.msra.mxu0 %v2328
    %2958 = vmatprep.subr.bf16.mxu0 %v2333
    %2959 = vmatpush1.bf16.msra.mxu0 %v2332
    %2960 = vmatprep.subr.bf16.mxu0 %v2337
    %2961 = vmatpush1.bf16.msra.mxu0 %v2336
    %2962 = vmatprep.subr.bf16.mxu0 %v2341
    %2963 = vmatpush1.bf16.msra.mxu0 %v2340
    %2964 = vmatprep.subr.bf16.mxu0 %v2345
    %2965 = vmatpush1.bf16.msra.mxu0 %v2344
    %2966 = vmatprep.subr.bf16.mxu0 %v2349
    %2967 = vmatpush1.bf16.msra.mxu0 %v2348
    %2968 = vmatprep.subr.bf16.mxu0 %v2353
    %2969 = vmatpush1.bf16.msra.mxu0 %v2352
    %2970 = vmatprep.subr.bf16.mxu0 %v2357
    %2971 = vmatpush1.bf16.msra.mxu0 %v2356
    %2972 = vmatprep.subr.bf16.mxu0 %v2361
    %2973 = vmatpush1.bf16.msra.mxu0 %v2360
    %2974 = vmatprep.subr.bf16.mxu0 %v2365
    %2975 = vmatpush1.bf16.msra.mxu0 %v2364
    %2976 = vmatprep.subr.bf16.mxu0 %v2369
    %2977 = vmatpush1.bf16.msra.mxu0 %v2368
    %2978 = vmatprep.subr.bf16.mxu0 %v2373
    %2979 = vmatpush1.bf16.msra.mxu0 %v2372
    %2980 = vmatprep.subr.bf16.mxu0 %v2377
    %2981 = vmatpush1.bf16.msra.mxu0 %v2376
    %2982 = vmatprep.subr.bf16.mxu0 %v2381
    %2983 = vmatpush1.bf16.msra.mxu0 %v2380
    %2984 = vmatprep.subr.bf16.mxu0 %v2385
    %2985 = vmatpush1.bf16.msra.mxu0 %v2384
    %2986 = vmatprep.subr.bf16.mxu0 %v2389
    %2987 = vmatpush1.bf16.msra.mxu0 %v2388
    %2988 = vmatprep.mubr.bf16.mxu0 %v1149
    %2989 = vmatmul.mubr.bf16.gmra.mrb[0].mxu0 %v1148
    %v2990 = vpop.f32.mrb[0].mxu0
    %v2991 = vadd.f32 %v2950, %v2990
    %v2992 = vpop.f32.mrb[0].mxu0
    %v2993 = vadd.f32 %v2952, %v2992
    %v2994 = vpop.f32.mrb[0].mxu0
    %v2995 = vpop.f32.mrb[0].mxu0
    %2996 = vdwg.mxu0
    %2997 = vmatprep.subr.bf16.mxu0 %v2393
    %2998 = vmatpush1.bf16.msra.mxu0 %v2392
    %2999 = vmatprep.subr.bf16.mxu0 %v2397
    %3000 = vmatpush1.bf16.msra.mxu0 %v2396
    %3001 = vmatprep.subr.bf16.mxu0 %v2401
    %3002 = vmatpush1.bf16.msra.mxu0 %v2400
    %3003 = vmatprep.subr.bf16.mxu0 %v2405
    %3004 = vmatpush1.bf16.msra.mxu0 %v2404
    %3005 = vmatprep.subr.bf16.mxu0 %v2409
    %3006 = vmatpush1.bf16.msra.mxu0 %v2408
    %3007 = vmatprep.subr.bf16.mxu0 %v2413
    %3008 = vmatpush1.bf16.msra.mxu0 %v2412
    %3009 = vmatprep.subr.bf16.mxu0 %v2417
    %3010 = vmatpush1.bf16.msra.mxu0 %v2416
    %3011 = vmatprep.subr.bf16.mxu0 %v2421
    %3012 = vmatpush1.bf16.msra.mxu0 %v2420
    %3013 = vmatprep.subr.bf16.mxu0 %v2425
    %3014 = vmatpush1.bf16.msra.mxu0 %v2424
    %3015 = vmatprep.subr.bf16.mxu0 %v2429
    %3016 = vmatpush1.bf16.msra.mxu0 %v2428
    %3017 = vmatprep.subr.bf16.mxu0 %v2433
    %3018 = vmatpush1.bf16.msra.mxu0 %v2432
    %3019 = vmatprep.subr.bf16.mxu0 %v2437
    %3020 = vmatpush1.bf16.msra.mxu0 %v2436
    %3021 = vmatprep.subr.bf16.mxu0 %v2441
    %3022 = vmatpush1.bf16.msra.mxu0 %v2440
    %3023 = vmatprep.subr.bf16.mxu0 %v2445
    %3024 = vmatpush1.bf16.msra.mxu0 %v2444
    %3025 = vmatprep.subr.bf16.mxu0 %v2449
    %3026 = vmatpush1.bf16.msra.mxu0 %v2448
    %3027 = vmatprep.subr.bf16.mxu0 %v2453
    %3028 = vmatpush1.bf16.msra.mxu0 %v2452
    %3029 = vmatprep.mubr.bf16.mxu0 %v1151
    %3030 = vmatmul.mubr.bf16.gmra.mrb[0].mxu0 %v1150
    %v3031 = vpop.f32.mrb[0].mxu0
    %v3032 = vadd.f32 %v2991, %v3031
    %v3033 = vpop.f32.mrb[0].mxu0
    %v3034 = vadd.f32 %v2993, %v3033
    %v3035 = vpop.f32.mrb[0].mxu0
    %v3036 = vpop.f32.mrb[0].mxu0
    %3037 = vdwg.mxu0
    %v3038 = vmax.f32 %v2868, 0.0
    %v3039 = vmax.f32 %v2870, 0.0
    %v3040 = vmax.f32 %v3032, 0.0
    %v3041 = vmax.f32 %v3034, 0.0
    %v3042 = vpack.c.bf16 %v3038, %v3038
    %v3043 = vpack.c.bf16 %v3039, %v3039
    %v3044 = vpack.c.bf16 %v3040, %v3040
    %v3045 = vpack.c.bf16 %v3041, %v3041
    %v3046 = vld [vmem:[#allocation10] sm:$0xff]
    %v3047 = vld [vmem:[#allocation10 + $0x8] sm:$0xff]
    %v3048 = vld [vmem:[#allocation10 + $0x10] sm:$0xff]
    %v3049 = vld [vmem:[#allocation10 + $0x18] sm:$0xff]
    %v3050 = vld [vmem:[#allocation10 + $0x20] sm:$0xff]
    %v3051 = vld [vmem:[#allocation10 + $0x28] sm:$0xff]
    %v3052 = vld [vmem:[#allocation10 + $0x30] sm:$0xff]
    %v3053 = vld [vmem:[#allocation10 + $0x38] sm:$0xff]
    %v3054 = vld [vmem:[#allocation10 + $0x40] sm:$0xff]
    %v3055 = vld [vmem:[#allocation10 + $0x48] sm:$0xff]
    %v3056 = vld [vmem:[#allocation10 + $0x50] sm:$0xff]
    %v3057 = vld [vmem:[#allocation10 + $0x58] sm:$0xff]
    %v3058 = vld [vmem:[#allocation10 + $0x60] sm:$0xff]
    %v3059 = vld [vmem:[#allocation10 + $0x68] sm:$0xff]
    %v3060 = vld [vmem:[#allocation10 + $0x70] sm:$0xff]
    %v3061 = vld [vmem:[#allocation10 + $0x78] sm:$0xff]
    %v3062 = vld [vmem:[#allocation10 + $0x80] sm:$0xff]
    %v3063 = vld [vmem:[#allocation10 + $0x88] sm:$0xff]
    %v3064 = vld [vmem:[#allocation10 + $0x90] sm:$0xff]
    %v3065 = vld [vmem:[#allocation10 + $0x98] sm:$0xff]
    %v3066 = vld [vmem:[#allocation10 + $0xa0] sm:$0xff]
    %v3067 = vld [vmem:[#allocation10 + $0xa8] sm:$0xff]
    %v3068 = vld [vmem:[#allocation10 + $0xb0] sm:$0xff]
    %v3069 = vld [vmem:[#allocation10 + $0xb8] sm:$0xff]
    %v3070 = vld [vmem:[#allocation10 + $0xc0] sm:$0xff]
    %v3071 = vld [vmem:[#allocation10 + $0xc8] sm:$0xff]
    %v3072 = vld [vmem:[#allocation10 + $0xd0] sm:$0xff]
    %v3073 = vld [vmem:[#allocation10 + $0xd8] sm:$0xff]
    %v3074 = vld [vmem:[#allocation10 + $0xe0] sm:$0xff]
    %v3075 = vld [vmem:[#allocation10 + $0xe8] sm:$0xff]
    %v3076 = vld [vmem:[#allocation10 + $0xf0] sm:$0xff]
    %v3077 = vld [vmem:[#allocation10 + $0xf8] sm:$0xff]
    %v3078 = vld [vmem:[#allocation10 + $0x100] sm:$0xff]
    %v3079 = vld [vmem:[#allocation10 + $0x108] sm:$0xff]
    %v3080 = vld [vmem:[#allocation10 + $0x110] sm:$0xff]
    %v3081 = vld [vmem:[#allocation10 + $0x118] sm:$0xff]
    %v3082 = vld [vmem:[#allocation10 + $0x120] sm:$0xff]
    %v3083 = vld [vmem:[#allocation10 + $0x128] sm:$0xff]
    %v3084 = vld [vmem:[#allocation10 + $0x130] sm:$0xff]
    %v3085 = vld [vmem:[#allocation10 + $0x138] sm:$0xff]
    %v3086 = vld [vmem:[#allocation10 + $0x140] sm:$0xff]
    %v3087 = vld [vmem:[#allocation10 + $0x148] sm:$0xff]
    %v3088 = vld [vmem:[#allocation10 + $0x150] sm:$0xff]
    %v3089 = vld [vmem:[#allocation10 + $0x158] sm:$0xff]
    %v3090 = vld [vmem:[#allocation10 + $0x160] sm:$0xff]
    %v3091 = vld [vmem:[#allocation10 + $0x168] sm:$0xff]
    %v3092 = vld [vmem:[#allocation10 + $0x170] sm:$0xff]
    %v3093 = vld [vmem:[#allocation10 + $0x178] sm:$0xff]
    %v3094 = vld [vmem:[#allocation10 + $0x180] sm:$0xff]
    %v3095 = vld [vmem:[#allocation10 + $0x188] sm:$0xff]
    %v3096 = vld [vmem:[#allocation10 + $0x190] sm:$0xff]
    %v3097 = vld [vmem:[#allocation10 + $0x198] sm:$0xff]
    %v3098 = vld [vmem:[#allocation10 + $0x1a0] sm:$0xff]
    %v3099 = vld [vmem:[#allocation10 + $0x1a8] sm:$0xff]
    %v3100 = vld [vmem:[#allocation10 + $0x1b0] sm:$0xff]
    %v3101 = vld [vmem:[#allocation10 + $0x1b8] sm:$0xff]
    %v3102 = vld [vmem:[#allocation10 + $0x1c0] sm:$0xff]
    %v3103 = vld [vmem:[#allocation10 + $0x1c8] sm:$0xff]
    %v3104 = vld [vmem:[#allocation10 + $0x1d0] sm:$0xff]
    %v3105 = vld [vmem:[#allocation10 + $0x1d8] sm:$0xff]
    %v3106 = vld [vmem:[#allocation10 + $0x1e0] sm:$0xff]
    %v3107 = vld [vmem:[#allocation10 + $0x1e8] sm:$0xff]
    %v3108 = vld [vmem:[#allocation10 + $0x1f0] sm:$0xff]
    %v3109 = vld [vmem:[#allocation10 + $0x1f8] sm:$0xff]
    %v3110 = vld [vmem:[%s6] sm:$0x3]
    %v3112 = vlaneseq
    %v3113 = vshrl.u32 %v3112, 7
    %v3114 = vsub.s32 0, %v3113
    %v3115 = vrot.slane %v3110, %v3114
    %v3116 = vlaneseq
    %v3117 = vshrl.u32 %v3116, 7
    %v3118 = vsub.s32 1, %v3117
    %v3119 = vrot.slane %v3110, %v3118
    %v3186 = vunpack.c.l.b16 %v3046
    %v3187 = vunpack.c.h.b16 %v3046
    %v3188 = vunpack.c.l.b16 %v3047
    %v3189 = vunpack.c.h.b16 %v3047
    %v3190 = vunpack.c.l.b16 %v3048
    %v3191 = vunpack.c.h.b16 %v3048
    %v3192 = vunpack.c.l.b16 %v3049
    %v3193 = vunpack.c.h.b16 %v3049
    %v3194 = vunpack.c.l.b16 %v3050
    %v3195 = vunpack.c.h.b16 %v3050
    %v3196 = vunpack.c.l.b16 %v3051
    %v3197 = vunpack.c.h.b16 %v3051
    %v3198 = vunpack.c.l.b16 %v3052
    %v3199 = vunpack.c.h.b16 %v3052
    %v3200 = vunpack.c.l.b16 %v3053
    %v3201 = vunpack.c.h.b16 %v3053
    %v3202 = vunpack.c.l.b16 %v3054
    %v3203 = vunpack.c.h.b16 %v3054
    %v3204 = vunpack.c.l.b16 %v3055
    %v3205 = vunpack.c.h.b16 %v3055
    %v3206 = vunpack.c.l.b16 %v3056
    %v3207 = vunpack.c.h.b16 %v3056
    %v3208 = vunpack.c.l.b16 %v3057
    %v3209 = vunpack.c.h.b16 %v3057
    %v3210 = vunpack.c.l.b16 %v3058
    %v3211 = vunpack.c.h.b16 %v3058
    %v3212 = vunpack.c.l.b16 %v3059
    %v3213 = vunpack.c.h.b16 %v3059
    %v3214 = vunpack.c.l.b16 %v3060
    %v3215 = vunpack.c.h.b16 %v3060
    %v3216 = vunpack.c.l.b16 %v3061
    %v3217 = vunpack.c.h.b16 %v3061
    %v3218 = vunpack.c.l.b16 %v3062
    %v3219 = vunpack.c.h.b16 %v3062
    %v3220 = vunpack.c.l.b16 %v3063
    %v3221 = vunpack.c.h.b16 %v3063
    %v3222 = vunpack.c.l.b16 %v3064
    %v3223 = vunpack.c.h.b16 %v3064
    %v3224 = vunpack.c.l.b16 %v3065
    %v3225 = vunpack.c.h.b16 %v3065
    %v3226 = vunpack.c.l.b16 %v3066
    %v3227 = vunpack.c.h.b16 %v3066
    %v3228 = vunpack.c.l.b16 %v3067
    %v3229 = vunpack.c.h.b16 %v3067
    %v3230 = vunpack.c.l.b16 %v3068
    %v3231 = vunpack.c.h.b16 %v3068
    %v3232 = vunpack.c.l.b16 %v3069
    %v3233 = vunpack.c.h.b16 %v3069
    %v3234 = vunpack.c.l.b16 %v3070
    %v3235 = vunpack.c.h.b16 %v3070
    %v3236 = vunpack.c.l.b16 %v3071
    %v3237 = vunpack.c.h.b16 %v3071
    %v3238 = vunpack.c.l.b16 %v3072
    %v3239 = vunpack.c.h.b16 %v3072
    %v3240 = vunpack.c.l.b16 %v3073
    %v3241 = vunpack.c.h.b16 %v3073
    %v3242 = vunpack.c.l.b16 %v3074
    %v3243 = vunpack.c.h.b16 %v3074
    %v3244 = vunpack.c.l.b16 %v3075
    %v3245 = vunpack.c.h.b16 %v3075
    %v3246 = vunpack.c.l.b16 %v3076
    %v3247 = vunpack.c.h.b16 %v3076
    %v3248 = vunpack.c.l.b16 %v3077
    %v3249 = vunpack.c.h.b16 %v3077
    %v3250 = vunpack.c.l.b16 %v3078
    %v3251 = vunpack.c.h.b16 %v3078
    %v3252 = vunpack.c.l.b16 %v3079
    %v3253 = vunpack.c.h.b16 %v3079
    %v3254 = vunpack.c.l.b16 %v3080
    %v3255 = vunpack.c.h.b16 %v3080
    %v3256 = vunpack.c.l.b16 %v3081
    %v3257 = vunpack.c.h.b16 %v3081
    %v3258 = vunpack.c.l.b16 %v3082
    %v3259 = vunpack.c.h.b16 %v3082
    %v3260 = vunpack.c.l.b16 %v3083
    %v3261 = vunpack.c.h.b16 %v3083
    %v3262 = vunpack.c.l.b16 %v3084
    %v3263 = vunpack.c.h.b16 %v3084
    %v3264 = vunpack.c.l.b16 %v3085
    %v3265 = vunpack.c.h.b16 %v3085
    %v3266 = vunpack.c.l.b16 %v3086
    %v3267 = vunpack.c.h.b16 %v3086
    %v3268 = vunpack.c.l.b16 %v3087
    %v3269 = vunpack.c.h.b16 %v3087
    %v3270 = vunpack.c.l.b16 %v3088
    %v3271 = vunpack.c.h.b16 %v3088
    %v3272 = vunpack.c.l.b16 %v3089
    %v3273 = vunpack.c.h.b16 %v3089
    %v3274 = vunpack.c.l.b16 %v3090
    %v3275 = vunpack.c.h.b16 %v3090
    %v3276 = vunpack.c.l.b16 %v3091
    %v3277 = vunpack.c.h.b16 %v3091
    %v3278 = vunpack.c.l.b16 %v3092
    %v3279 = vunpack.c.h.b16 %v3092
    %v3280 = vunpack.c.l.b16 %v3093
    %v3281 = vunpack.c.h.b16 %v3093
    %v3282 = vunpack.c.l.b16 %v3094
    %v3283 = vunpack.c.h.b16 %v3094
    %v3284 = vunpack.c.l.b16 %v3095
    %v3285 = vunpack.c.h.b16 %v3095
    %v3286 = vunpack.c.l.b16 %v3096
    %v3287 = vunpack.c.h.b16 %v3096
    %v3288 = vunpack.c.l.b16 %v3097
    %v3289 = vunpack.c.h.b16 %v3097
    %v3290 = vunpack.c.l.b16 %v3098
    %v3291 = vunpack.c.h.b16 %v3098
    %v3292 = vunpack.c.l.b16 %v3099
    %v3293 = vunpack.c.h.b16 %v3099
    %v3294 = vunpack.c.l.b16 %v3100
    %v3295 = vunpack.c.h.b16 %v3100
    %v3296 = vunpack.c.l.b16 %v3101
    %v3297 = vunpack.c.h.b16 %v3101
    %v3298 = vunpack.c.l.b16 %v3102
    %v3299 = vunpack.c.h.b16 %v3102
    %v3300 = vunpack.c.l.b16 %v3103
    %v3301 = vunpack.c.h.b16 %v3103
    %v3302 = vunpack.c.l.b16 %v3104
    %v3303 = vunpack.c.h.b16 %v3104
    %v3304 = vunpack.c.l.b16 %v3105
    %v3305 = vunpack.c.h.b16 %v3105
    %v3306 = vunpack.c.l.b16 %v3106
    %v3307 = vunpack.c.h.b16 %v3106
    %v3308 = vunpack.c.l.b16 %v3107
    %v3309 = vunpack.c.h.b16 %v3107
    %v3310 = vunpack.c.l.b16 %v3108
    %v3311 = vunpack.c.h.b16 %v3108
    %v3312 = vunpack.c.l.b16 %v3109
    %v3313 = vunpack.c.h.b16 %v3109
    %v3314 = vpack.c.b16 %v3188, %v3186
    %v3315 = vpack.c.b16 %v3189, %v3187
    %v3316 = vpack.c.b16 %v3192, %v3190
    %v3317 = vpack.c.b16 %v3193, %v3191
    %v3318 = vpack.c.b16 %v3196, %v3194
    %v3319 = vpack.c.b16 %v3197, %v3195
    %v3320 = vpack.c.b16 %v3200, %v3198
    %v3321 = vpack.c.b16 %v3201, %v3199
    %v3322 = vpack.c.b16 %v3204, %v3202
    %v3323 = vpack.c.b16 %v3205, %v3203
    %v3324 = vpack.c.b16 %v3208, %v3206
    %v3325 = vpack.c.b16 %v3209, %v3207
    %v3326 = vpack.c.b16 %v3212, %v3210
    %v3327 = vpack.c.b16 %v3213, %v3211
    %v3328 = vpack.c.b16 %v3216, %v3214
    %v3329 = vpack.c.b16 %v3217, %v3215
    %v3330 = vpack.c.b16 %v3220, %v3218
    %v3331 = vpack.c.b16 %v3221, %v3219
    %v3332 = vpack.c.b16 %v3224, %v3222
    %v3333 = vpack.c.b16 %v3225, %v3223
    %v3334 = vpack.c.b16 %v3228, %v3226
    %v3335 = vpack.c.b16 %v3229, %v3227
    %v3336 = vpack.c.b16 %v3232, %v3230
    %v3337 = vpack.c.b16 %v3233, %v3231
    %v3338 = vpack.c.b16 %v3236, %v3234
    %v3339 = vpack.c.b16 %v3237, %v3235
    %v3340 = vpack.c.b16 %v3240, %v3238
    %v3341 = vpack.c.b16 %v3241, %v3239
    %v3342 = vpack.c.b16 %v3244, %v3242
    %v3343 = vpack.c.b16 %v3245, %v3243
    %v3344 = vpack.c.b16 %v3248, %v3246
    %v3345 = vpack.c.b16 %v3249, %v3247
    %v3346 = vpack.c.b16 %v3252, %v3250
    %v3347 = vpack.c.b16 %v3253, %v3251
    %v3348 = vpack.c.b16 %v3256, %v3254
    %v3349 = vpack.c.b16 %v3257, %v3255
    %v3350 = vpack.c.b16 %v3260, %v3258
    %v3351 = vpack.c.b16 %v3261, %v3259
    %v3352 = vpack.c.b16 %v3264, %v3262
    %v3353 = vpack.c.b16 %v3265, %v3263
    %v3354 = vpack.c.b16 %v3268, %v3266
    %v3355 = vpack.c.b16 %v3269, %v3267
    %v3356 = vpack.c.b16 %v3272, %v3270
    %v3357 = vpack.c.b16 %v3273, %v3271
    %v3358 = vpack.c.b16 %v3276, %v3274
    %v3359 = vpack.c.b16 %v3277, %v3275
    %v3360 = vpack.c.b16 %v3280, %v3278
    %v3361 = vpack.c.b16 %v3281, %v3279
    %v3362 = vpack.c.b16 %v3284, %v3282
    %v3363 = vpack.c.b16 %v3285, %v3283
    %v3364 = vpack.c.b16 %v3288, %v3286
    %v3365 = vpack.c.b16 %v3289, %v3287
    %v3366 = vpack.c.b16 %v3292, %v3290
    %v3367 = vpack.c.b16 %v3293, %v3291
    %v3368 = vpack.c.b16 %v3296, %v3294
    %v3369 = vpack.c.b16 %v3297, %v3295
    %v3370 = vpack.c.b16 %v3300, %v3298
    %v3371 = vpack.c.b16 %v3301, %v3299
    %v3372 = vpack.c.b16 %v3304, %v3302
    %v3373 = vpack.c.b16 %v3305, %v3303
    %v3374 = vpack.c.b16 %v3308, %v3306
    %v3375 = vpack.c.b16 %v3309, %v3307
    %v3376 = vpack.c.b16 %v3312, %v3310
    %v3377 = vpack.c.b16 %v3313, %v3311
    %3442 = vmatprep.subr.bf16.mxu0 %v3315
    %3443 = vmatpush1.bf16.msra.mxu0 %v3314
    %3444 = vmatprep.subr.bf16.mxu0 %v3317
    %3445 = vmatpush1.bf16.msra.mxu0 %v3316
    %3446 = vmatprep.subr.bf16.mxu0 %v3319
    %3447 = vmatpush1.bf16.msra.mxu0 %v3318
    %3448 = vmatprep.subr.bf16.mxu0 %v3321
    %3449 = vmatpush1.bf16.msra.mxu0 %v3320
    %3450 = vmatprep.subr.bf16.mxu0 %v3323
    %3451 = vmatpush1.bf16.msra.mxu0 %v3322
    %3452 = vmatprep.subr.bf16.mxu0 %v3325
    %3453 = vmatpush1.bf16.msra.mxu0 %v3324
    %3454 = vmatprep.subr.bf16.mxu0 %v3327
    %3455 = vmatpush1.bf16.msra.mxu0 %v3326
    %3456 = vmatprep.subr.bf16.mxu0 %v3329
    %3457 = vmatpush1.bf16.msra.mxu0 %v3328
    %3458 = vmatprep.subr.bf16.mxu0 %v3331
    %3459 = vmatpush1.bf16.msra.mxu0 %v3330
    %3460 = vmatprep.subr.bf16.mxu0 %v3333
    %3461 = vmatpush1.bf16.msra.mxu0 %v3332
    %3462 = vmatprep.subr.bf16.mxu0 %v3335
    %3463 = vmatpush1.bf16.msra.mxu0 %v3334
    %3464 = vmatprep.subr.bf16.mxu0 %v3337
    %3465 = vmatpush1.bf16.msra.mxu0 %v3336
    %3466 = vmatprep.subr.bf16.mxu0 %v3339
    %3467 = vmatpush1.bf16.msra.mxu0 %v3338
    %3468 = vmatprep.subr.bf16.mxu0 %v3341
    %3469 = vmatpush1.bf16.msra.mxu0 %v3340
    %3470 = vmatprep.subr.bf16.mxu0 %v3343
    %3471 = vmatpush1.bf16.msra.mxu0 %v3342
    %3472 = vmatprep.subr.bf16.mxu0 %v3345
    %3473 = vmatpush1.bf16.msra.mxu0 %v3344
    %3474 = vmatprep.mubr.bf16.mxu0 %v3043
    %3475 = vmatmul.mubr.bf16.gmra.mrb[0].mxu0 %v3042
    %v3476 = vpop.f32.mrb[0].mxu0
    %v3477 = vadd.f32 %v3115, %v3476
    %v3478 = vpop.f32.mrb[0].mxu0
    %v3479 = vadd.f32 %v3119, %v3478
    %v3480 = vpop.f32.mrb[0].mxu0
    %v3481 = vpop.f32.mrb[0].mxu0
    %3482 = vdwg.mxu0
    %3483 = vmatprep.subr.bf16.mxu0 %v3347
    %3484 = vmatpush1.bf16.msra.mxu0 %v3346
    %3485 = vmatprep.subr.bf16.mxu0 %v3349
    %3486 = vmatpush1.bf16.msra.mxu0 %v3348
    %3487 = vmatprep.subr.bf16.mxu0 %v3351
    %3488 = vmatpush1.bf16.msra.mxu0 %v3350
    %3489 = vmatprep.subr.bf16.mxu0 %v3353
    %3490 = vmatpush1.bf16.msra.mxu0 %v3352
    %3491 = vmatprep.subr.bf16.mxu0 %v3355
    %3492 = vmatpush1.bf16.msra.mxu0 %v3354
    %3493 = vmatprep.subr.bf16.mxu0 %v3357
    %3494 = vmatpush1.bf16.msra.mxu0 %v3356
    %3495 = vmatprep.subr.bf16.mxu0 %v3359
    %3496 = vmatpush1.bf16.msra.mxu0 %v3358
    %3497 = vmatprep.subr.bf16.mxu0 %v3361
    %3498 = vmatpush1.bf16.msra.mxu0 %v3360
    %3499 = vmatprep.subr.bf16.mxu0 %v3363
    %3500 = vmatpush1.bf16.msra.mxu0 %v3362
    %3501 = vmatprep.subr.bf16.mxu0 %v3365
    %3502 = vmatpush1.bf16.msra.mxu0 %v3364
    %3503 = vmatprep.subr.bf16.mxu0 %v3367
    %3504 = vmatpush1.bf16.msra.mxu0 %v3366
    %3505 = vmatprep.subr.bf16.mxu0 %v3369
    %3506 = vmatpush1.bf16.msra.mxu0 %v3368
    %3507 = vmatprep.subr.bf16.mxu0 %v3371
    %3508 = vmatpush1.bf16.msra.mxu0 %v3370
    %3509 = vmatprep.subr.bf16.mxu0 %v3373
    %3510 = vmatpush1.bf16.msra.mxu0 %v3372
    %3511 = vmatprep.subr.bf16.mxu0 %v3375
    %3512 = vmatpush1.bf16.msra.mxu0 %v3374
    %3513 = vmatprep.subr.bf16.mxu0 %v3377
    %3514 = vmatpush1.bf16.msra.mxu0 %v3376
    %3515 = vmatprep.mubr.bf16.mxu0 %v3045
    %3516 = vmatmul.mubr.bf16.gmra.mrb[0].mxu0 %v3044
    %v3517 = vpop.f32.mrb[0].mxu0
    %v3518 = vadd.f32 %v3477, %v3517
    %v3519 = vpop.f32.mrb[0].mxu0
    %v3520 = vadd.f32 %v3479, %v3519
    %v3521 = vpop.f32.mrb[0].mxu0
    %v3522 = vpop.f32.mrb[0].mxu0
    %3523 = vdwg.mxu0
    %v3524 = vmax.f32 %v3518, 0.0
    %v3525 = vmax.f32 %v3520, 0.0
    %v3526 = vpack.c.bf16 %v3524, %v3524
    %v3527 = vpack.c.bf16 %v3525, %v3525
    %v3528 = vld [vmem:[#allocation11] sm:$0xff]
    %v3529 = vld [vmem:[#allocation11 + $0x8] sm:$0xff]
    %v3530 = vld [vmem:[#allocation11 + $0x10] sm:$0xff]
    %v3531 = vld [vmem:[#allocation11 + $0x18] sm:$0xff]
    %v3532 = vld [vmem:[#allocation11 + $0x20] sm:$0xff]
    %v3533 = vld [vmem:[#allocation11 + $0x28] sm:$0xff]
    %v3534 = vld [vmem:[#allocation11 + $0x30] sm:$0xff]
    %v3535 = vld [vmem:[#allocation11 + $0x38] sm:$0xff]
    %v3536 = vld [vmem:[#allocation11 + $0x40] sm:$0xff]
    %v3537 = vld [vmem:[#allocation11 + $0x48] sm:$0xff]
    %v3538 = vld [vmem:[#allocation11 + $0x50] sm:$0xff]
    %v3539 = vld [vmem:[#allocation11 + $0x58] sm:$0xff]
    %v3540 = vld [vmem:[#allocation11 + $0x60] sm:$0xff]
    %v3541 = vld [vmem:[#allocation11 + $0x68] sm:$0xff]
    %v3542 = vld [vmem:[#allocation11 + $0x70] sm:$0xff]
    %v3543 = vld [vmem:[#allocation11 + $0x78] sm:$0xff]
    %v3544 = vld [vmem:[#allocation11 + $0x80] sm:$0xff]
    %v3545 = vld [vmem:[#allocation11 + $0x88] sm:$0xff]
    %v3546 = vld [vmem:[#allocation11 + $0x90] sm:$0xff]
    %v3547 = vld [vmem:[#allocation11 + $0x98] sm:$0xff]
    %v3548 = vld [vmem:[#allocation11 + $0xa0] sm:$0xff]
    %v3549 = vld [vmem:[#allocation11 + $0xa8] sm:$0xff]
    %v3550 = vld [vmem:[#allocation11 + $0xb0] sm:$0xff]
    %v3551 = vld [vmem:[#allocation11 + $0xb8] sm:$0xff]
    %v3552 = vld [vmem:[#allocation11 + $0xc0] sm:$0xff]
    %v3553 = vld [vmem:[#allocation11 + $0xc8] sm:$0xff]
    %v3554 = vld [vmem:[#allocation11 + $0xd0] sm:$0xff]
    %v3555 = vld [vmem:[#allocation11 + $0xd8] sm:$0xff]
    %v3556 = vld [vmem:[#allocation11 + $0xe0] sm:$0xff]
    %v3557 = vld [vmem:[#allocation11 + $0xe8] sm:$0xff]
    %v3558 = vld [vmem:[#allocation11 + $0xf0] sm:$0xff]
    %v3559 = vld [vmem:[#allocation11 + $0xf8] sm:$0xff]
    %v3560 = vld [vmem:[%s8] sm:$0x3]
    %v3562 = vlaneseq
    %v3563 = vshrl.u32 %v3562, 7
    %v3564 = vsub.s32 0, %v3563
    %v3565 = vrot.slane %v3560, %v3564
    %v3566 = vlaneseq
    %v3567 = vshrl.u32 %v3566, 7
    %v3568 = vsub.s32 1, %v3567
    %v3569 = vrot.slane %v3560, %v3568
    %v3604 = vunpack.c.l.b16 %v3528
    %v3605 = vunpack.c.h.b16 %v3528
    %v3606 = vunpack.c.l.b16 %v3529
    %v3607 = vunpack.c.h.b16 %v3529
    %v3608 = vunpack.c.l.b16 %v3530
    %v3609 = vunpack.c.h.b16 %v3530
    %v3610 = vunpack.c.l.b16 %v3531
    %v3611 = vunpack.c.h.b16 %v3531
    %v3612 = vunpack.c.l.b16 %v3532
    %v3613 = vunpack.c.h.b16 %v3532
    %v3614 = vunpack.c.l.b16 %v3533
    %v3615 = vunpack.c.h.b16 %v3533
    %v3616 = vunpack.c.l.b16 %v3534
    %v3617 = vunpack.c.h.b16 %v3534
    %v3618 = vunpack.c.l.b16 %v3535
    %v3619 = vunpack.c.h.b16 %v3535
    %v3620 = vunpack.c.l.b16 %v3536
    %v3621 = vunpack.c.h.b16 %v3536
    %v3622 = vunpack.c.l.b16 %v3537
    %v3623 = vunpack.c.h.b16 %v3537
    %v3624 = vunpack.c.l.b16 %v3538
    %v3625 = vunpack.c.h.b16 %v3538
    %v3626 = vunpack.c.l.b16 %v3539
    %v3627 = vunpack.c.h.b16 %v3539
    %v3628 = vunpack.c.l.b16 %v3540
    %v3629 = vunpack.c.h.b16 %v3540
    %v3630 = vunpack.c.l.b16 %v3541
    %v3631 = vunpack.c.h.b16 %v3541
    %v3632 = vunpack.c.l.b16 %v3542
    %v3633 = vunpack.c.h.b16 %v3542
    %v3634 = vunpack.c.l.b16 %v3543
    %v3635 = vunpack.c.h.b16 %v3543
    %v3636 = vunpack.c.l.b16 %v3544
    %v3637 = vunpack.c.h.b16 %v3544
    %v3638 = vunpack.c.l.b16 %v3545
    %v3639 = vunpack.c.h.b16 %v3545
    %v3640 = vunpack.c.l.b16 %v3546
    %v3641 = vunpack.c.h.b16 %v3546
    %v3642 = vunpack.c.l.b16 %v3547
    %v3643 = vunpack.c.h.b16 %v3547
    %v3644 = vunpack.c.l.b16 %v3548
    %v3645 = vunpack.c.h.b16 %v3548
    %v3646 = vunpack.c.l.b16 %v3549
    %v3647 = vunpack.c.h.b16 %v3549
    %v3648 = vunpack.c.l.b16 %v3550
    %v3649 = vunpack.c.h.b16 %v3550
    %v3650 = vunpack.c.l.b16 %v3551
    %v3651 = vunpack.c.h.b16 %v3551
    %v3652 = vunpack.c.l.b16 %v3552
    %v3653 = vunpack.c.h.b16 %v3552
    %v3654 = vunpack.c.l.b16 %v3553
    %v3655 = vunpack.c.h.b16 %v3553
    %v3656 = vunpack.c.l.b16 %v3554
    %v3657 = vunpack.c.h.b16 %v3554
    %v3658 = vunpack.c.l.b16 %v3555
    %v3659 = vunpack.c.h.b16 %v3555
    %v3660 = vunpack.c.l.b16 %v3556
    %v3661 = vunpack.c.h.b16 %v3556
    %v3662 = vunpack.c.l.b16 %v3557
    %v3663 = vunpack.c.h.b16 %v3557
    %v3664 = vunpack.c.l.b16 %v3558
    %v3665 = vunpack.c.h.b16 %v3558
    %v3666 = vunpack.c.l.b16 %v3559
    %v3667 = vunpack.c.h.b16 %v3559
    %v3668 = vpack.c.b16 %v3606, %v3604
    %v3669 = vpack.c.b16 %v3607, %v3605
    %v3670 = vpack.c.b16 %v3610, %v3608
    %v3671 = vpack.c.b16 %v3611, %v3609
    %v3672 = vpack.c.b16 %v3614, %v3612
    %v3673 = vpack.c.b16 %v3615, %v3613
    %v3674 = vpack.c.b16 %v3618, %v3616
    %v3675 = vpack.c.b16 %v3619, %v3617
    %v3676 = vpack.c.b16 %v3622, %v3620
    %v3677 = vpack.c.b16 %v3623, %v3621
    %v3678 = vpack.c.b16 %v3626, %v3624
    %v3679 = vpack.c.b16 %v3627, %v3625
    %v3680 = vpack.c.b16 %v3630, %v3628
    %v3681 = vpack.c.b16 %v3631, %v3629
    %v3682 = vpack.c.b16 %v3634, %v3632
    %v3683 = vpack.c.b16 %v3635, %v3633
    %v3684 = vpack.c.b16 %v3638, %v3636
    %v3685 = vpack.c.b16 %v3639, %v3637
    %v3686 = vpack.c.b16 %v3642, %v3640
    %v3687 = vpack.c.b16 %v3643, %v3641
    %v3688 = vpack.c.b16 %v3646, %v3644
    %v3689 = vpack.c.b16 %v3647, %v3645
    %v3690 = vpack.c.b16 %v3650, %v3648
    %v3691 = vpack.c.b16 %v3651, %v3649
    %v3692 = vpack.c.b16 %v3654, %v3652
    %v3693 = vpack.c.b16 %v3655, %v3653
    %v3694 = vpack.c.b16 %v3658, %v3656
    %v3695 = vpack.c.b16 %v3659, %v3657
    %v3696 = vpack.c.b16 %v3662, %v3660
    %v3697 = vpack.c.b16 %v3663, %v3661
    %v3698 = vpack.c.b16 %v3666, %v3664
    %v3699 = vpack.c.b16 %v3667, %v3665
    %3732 = vmatprep.subr.bf16.mxu0 %v3669
    %3733 = vmatpush1.bf16.msra.mxu0 %v3668
    %3734 = vmatprep.subr.bf16.mxu0 %v3671
    %3735 = vmatpush1.bf16.msra.mxu0 %v3670
    %3736 = vmatprep.subr.bf16.mxu0 %v3673
    %3737 = vmatpush1.bf16.msra.mxu0 %v3672
    %3738 = vmatprep.subr.bf16.mxu0 %v3675
    %3739 = vmatpush1.bf16.msra.mxu0 %v3674
    %3740 = vmatprep.subr.bf16.mxu0 %v3677
    %3741 = vmatpush1.bf16.msra.mxu0 %v3676
    %3742 = vmatprep.subr.bf16.mxu0 %v3679
    %3743 = vmatpush1.bf16.msra.mxu0 %v3678
    %3744 = vmatprep.subr.bf16.mxu0 %v3681
    %3745 = vmatpush1.bf16.msra.mxu0 %v3680
    %3746 = vmatprep.subr.bf16.mxu0 %v3683
    %3747 = vmatpush1.bf16.msra.mxu0 %v3682
    %3748 = vmatprep.subr.bf16.mxu0 %v3685
    %3749 = vmatpush1.bf16.msra.mxu0 %v3684
    %3750 = vmatprep.subr.bf16.mxu0 %v3687
    %3751 = vmatpush1.bf16.msra.mxu0 %v3686
    %3752 = vmatprep.subr.bf16.mxu0 %v3689
    %3753 = vmatpush1.bf16.msra.mxu0 %v3688
    %3754 = vmatprep.subr.bf16.mxu0 %v3691
    %3755 = vmatpush1.bf16.msra.mxu0 %v3690
    %3756 = vmatprep.subr.bf16.mxu0 %v3693
    %3757 = vmatpush1.bf16.msra.mxu0 %v3692
    %3758 = vmatprep.subr.bf16.mxu0 %v3695
    %3759 = vmatpush1.bf16.msra.mxu0 %v3694
    %3760 = vmatprep.subr.bf16.mxu0 %v3697
    %3761 = vmatpush1.bf16.msra.mxu0 %v3696
    %3762 = vmatprep.subr.bf16.mxu0 %v3699
    %3763 = vmatpush1.bf16.msra.mxu0 %v3698
    %3764 = vmatprep.mubr.bf16.mxu0 %v3527
    %3765 = vmatmul.mubr.bf16.gmra.mrb[0].mxu0 %v3526
    %v3766 = vpop.f32.mrb[0].mxu0
    %v3767 = vadd.f32 %v3565, %v3766
    %v3768 = vpop.f32.mrb[0].mxu0
    %v3769 = vadd.f32 %v3569, %v3768
    %v3770 = vpop.f32.mrb[0].mxu0
    %v3771 = vpop.f32.mrb[0].mxu0
    %3772 = vdwg.mxu0
    %v3773 = vmax.f32 %v3767, 0.0
    %v3774 = vmax.f32 %v3769, 0.0
    %v3775 = vpack.c.bf16 %v3773, %v3773
    %v3776 = vpack.c.bf16 %v3774, %v3774
    %v3777 = vld [vmem:[#allocation13] sm:$0xf]
    %v3778 = vld [vmem:[#allocation13 + $0x4] sm:$0xf]
    %v3779 = vld [vmem:[#allocation13 + $0x8] sm:$0xf]
    %v3780 = vld [vmem:[#allocation13 + $0xc] sm:$0xf]
    %v3781 = vld [vmem:[#allocation13 + $0x10] sm:$0xf]
    %v3782 = vld [vmem:[#allocation13 + $0x14] sm:$0xf]
    %v3783 = vld [vmem:[#allocation13 + $0x18] sm:$0xf]
    %v3784 = vld [vmem:[#allocation13 + $0x1c] sm:$0xf]
    %v3785 = vld [vmem:[#allocation13 + $0x20] sm:$0xf]
    %v3786 = vld [vmem:[#allocation13 + $0x24] sm:$0xf]
    %v3787 = vld [vmem:[#allocation13 + $0x28] sm:$0xf]
    %v3788 = vld [vmem:[#allocation13 + $0x2c] sm:$0xf]
    %v3789 = vld [vmem:[#allocation13 + $0x30] sm:$0xf]
    %v3790 = vld [vmem:[#allocation13 + $0x34] sm:$0xf]
    %v3791 = vld [vmem:[#allocation13 + $0x38] sm:$0xf]
    %v3792 = vld [vmem:[#allocation13 + $0x3c] sm:$0xf]
    %v3793 = vld [vmem:[#allocation13 + $0x40] sm:$0xf]
    %v3794 = vld [vmem:[#allocation13 + $0x44] sm:$0xf]
    %v3795 = vld [vmem:[#allocation13 + $0x48] sm:$0xf]
    %v3796 = vld [vmem:[#allocation13 + $0x4c] sm:$0xf]
    %v3797 = vld [vmem:[#allocation13 + $0x50] sm:$0xf]
    %v3798 = vld [vmem:[#allocation13 + $0x54] sm:$0xf]
    %v3799 = vld [vmem:[#allocation13 + $0x58] sm:$0xf]
    %v3800 = vld [vmem:[#allocation13 + $0x5c] sm:$0xf]
    %v3801 = vld [vmem:[#allocation13 + $0x60] sm:$0xf]
    %v3802 = vld [vmem:[#allocation13 + $0x64] sm:$0xf]
    %v3803 = vld [vmem:[#allocation13 + $0x68] sm:$0xf]
    %v3804 = vld [vmem:[#allocation13 + $0x6c] sm:$0xf]
    %v3805 = vld [vmem:[#allocation13 + $0x70] sm:$0xf]
    %v3806 = vld [vmem:[#allocation13 + $0x74] sm:$0xf]
    %v3807 = vld [vmem:[#allocation13 + $0x78] sm:$0xf]
    %v3808 = vld [vmem:[#allocation13 + $0x7c] sm:$0xf]
    %v3809 = vld [vmem:[%s10] sm:$0x1]
    %v3811 = vlaneseq
    %v3812 = vshrl.u32 %v3811, 7
    %v3813 = vsub.s32 0, %v3812
    %v3814 = vrot.slane %v3809, %v3813
    %v3848 = vunpack.c.l.b16 %v3777
    %v3849 = vunpack.c.l.b16 %v3778
    %v3850 = vunpack.c.l.b16 %v3779
    %v3851 = vunpack.c.l.b16 %v3780
    %v3852 = vunpack.c.l.b16 %v3781
    %v3853 = vunpack.c.l.b16 %v3782
    %v3854 = vunpack.c.l.b16 %v3783
    %v3855 = vunpack.c.l.b16 %v3784
    %v3856 = vunpack.c.l.b16 %v3785
    %v3857 = vunpack.c.l.b16 %v3786
    %v3858 = vunpack.c.l.b16 %v3787
    %v3859 = vunpack.c.l.b16 %v3788
    %v3860 = vunpack.c.l.b16 %v3789
    %v3861 = vunpack.c.l.b16 %v3790
    %v3862 = vunpack.c.l.b16 %v3791
    %v3863 = vunpack.c.l.b16 %v3792
    %v3864 = vunpack.c.l.b16 %v3793
    %v3865 = vunpack.c.l.b16 %v3794
    %v3866 = vunpack.c.l.b16 %v3795
    %v3867 = vunpack.c.l.b16 %v3796
    %v3868 = vunpack.c.l.b16 %v3797
    %v3869 = vunpack.c.l.b16 %v3798
    %v3870 = vunpack.c.l.b16 %v3799
    %v3871 = vunpack.c.l.b16 %v3800
    %v3872 = vunpack.c.l.b16 %v3801
    %v3873 = vunpack.c.l.b16 %v3802
    %v3874 = vunpack.c.l.b16 %v3803
    %v3875 = vunpack.c.l.b16 %v3804
    %v3876 = vunpack.c.l.b16 %v3805
    %v3877 = vunpack.c.l.b16 %v3806
    %v3878 = vunpack.c.l.b16 %v3807
    %v3879 = vunpack.c.l.b16 %v3808
    %v3880 = vpack.c.b16 %v3849, %v3848
    %v3881 = vpack.c.b16 %v3851, %v3850
    %v3882 = vpack.c.b16 %v3853, %v3852
    %v3883 = vpack.c.b16 %v3855, %v3854
    %v3884 = vpack.c.b16 %v3857, %v3856
    %v3885 = vpack.c.b16 %v3859, %v3858
    %v3886 = vpack.c.b16 %v3861, %v3860
    %v3887 = vpack.c.b16 %v3863, %v3862
    %v3888 = vpack.c.b16 %v3865, %v3864
    %v3889 = vpack.c.b16 %v3867, %v3866
    %v3890 = vpack.c.b16 %v3869, %v3868
    %v3891 = vpack.c.b16 %v3871, %v3870
    %v3892 = vpack.c.b16 %v3873, %v3872
    %v3893 = vpack.c.b16 %v3875, %v3874
    %v3894 = vpack.c.b16 %v3877, %v3876
    %v3895 = vpack.c.b16 %v3879, %v3878
    %3912 = vmatprep.subr.bf16.mxu0 0
    %3913 = vmatpush1.bf16.msra.mxu0 %v3880
    %3914 = vmatprep.subr.bf16.mxu0 0
    %3915 = vmatpush1.bf16.msra.mxu0 %v3881
    %3916 = vmatprep.subr.bf16.mxu0 0
    %3917 = vmatpush1.bf16.msra.mxu0 %v3882
    %3918 = vmatprep.subr.bf16.mxu0 0
    %3919 = vmatpush1.bf16.msra.mxu0 %v3883
    %3920 = vmatprep.subr.bf16.mxu0 0
    %3921 = vmatpush1.bf16.msra.mxu0 %v3884
    %3922 = vmatprep.subr.bf16.mxu0 0
    %3923 = vmatpush1.bf16.msra.mxu0 %v3885
    %3924 = vmatprep.subr.bf16.mxu0 0
    %3925 = vmatpush1.bf16.msra.mxu0 %v3886
    %3926 = vmatprep.subr.bf16.mxu0 0
    %3927 = vmatpush1.bf16.msra.mxu0 %v3887
    %3928 = vmatprep.subr.bf16.mxu0 0
    %3929 = vmatpush1.bf16.msra.mxu0 %v3888
    %3930 = vmatprep.subr.bf16.mxu0 0
    %3931 = vmatpush1.bf16.msra.mxu0 %v3889
    %3932 = vmatprep.subr.bf16.mxu0 0
    %3933 = vmatpush1.bf16.msra.mxu0 %v3890
    %3934 = vmatprep.subr.bf16.mxu0 0
    %3935 = vmatpush1.bf16.msra.mxu0 %v3891
    %3936 = vmatprep.subr.bf16.mxu0 0
    %3937 = vmatpush1.bf16.msra.mxu0 %v3892
    %3938 = vmatprep.subr.bf16.mxu0 0
    %3939 = vmatpush1.bf16.msra.mxu0 %v3893
    %3940 = vmatprep.subr.bf16.mxu0 0
    %3941 = vmatpush1.bf16.msra.mxu0 %v3894
    %3942 = vmatprep.subr.bf16.mxu0 0
    %3943 = vmatpush1.bf16.msra.mxu0 %v3895
    %3944 = vmatprep.mubr.bf16.mxu0 %v3776
    %3945 = vmatmul.mubr.bf16.gmra.mrb[0].mxu0 %v3775
    %v3946 = vpop.f32.mrb[0].mxu0
    %v3947 = vadd.f32 %v3814, %v3946
    %v3948 = vpop.f32.mrb[0].mxu0
    %v3949 = vpop.f32.mrb[0].mxu0
    %v3950 = vpop.f32.mrb[0].mxu0
    %3951 = vdwg.mxu0
    %v3952 = vmax.f32 %v3947, 0.0
    %v3953 = vpack.c.bf16 %v3952, %v3952
    %v3954 = vld [vmem:[#allocation14] sm:$0xf]
    %v3955 = vld [vmem:[#allocation14 + $0x4] sm:$0xf]
    %v3956 = vld [vmem:[#allocation14 + $0x8] sm:$0xf]
    %v3957 = vld [vmem:[#allocation14 + $0xc] sm:$0xf]
    %v3958 = vld [vmem:[#allocation14 + $0x10] sm:$0xf]
    %v3959 = vld [vmem:[#allocation14 + $0x14] sm:$0xf]
    %v3960 = vld [vmem:[#allocation14 + $0x18] sm:$0xf]
    %v3961 = vld [vmem:[#allocation14 + $0x1c] sm:$0xf]
    %v3962 = vld [vmem:[#allocation14 + $0x20] sm:$0xf]
    %v3963 = vld [vmem:[#allocation14 + $0x24] sm:$0xf]
    %v3964 = vld [vmem:[#allocation14 + $0x28] sm:$0xf]
    %v3965 = vld [vmem:[#allocation14 + $0x2c] sm:$0xf]
    %v3966 = vld [vmem:[#allocation14 + $0x30] sm:$0xf]
    %v3967 = vld [vmem:[#allocation14 + $0x34] sm:$0xf]
    %v3968 = vld [vmem:[#allocation14 + $0x38] sm:$0xf]
    %v3969 = vld [vmem:[#allocation14 + $0x3c] sm:$0xf]
    %v3986 = vunpack.c.l.b16 %v3954
    %v3987 = vunpack.c.l.b16 %v3955
    %v3988 = vunpack.c.l.b16 %v3956
    %v3989 = vunpack.c.l.b16 %v3957
    %v3990 = vunpack.c.l.b16 %v3958
    %v3991 = vunpack.c.l.b16 %v3959
    %v3992 = vunpack.c.l.b16 %v3960
    %v3993 = vunpack.c.l.b16 %v3961
    %v3994 = vunpack.c.l.b16 %v3962
    %v3995 = vunpack.c.l.b16 %v3963
    %v3996 = vunpack.c.l.b16 %v3964
    %v3997 = vunpack.c.l.b16 %v3965
    %v3998 = vunpack.c.l.b16 %v3966
    %v3999 = vunpack.c.l.b16 %v3967
    %v4000 = vunpack.c.l.b16 %v3968
    %v4001 = vunpack.c.l.b16 %v3969
    %v4002 = vpack.c.b16 %v3987, %v3986
    %v4003 = vpack.c.b16 %v3989, %v3988
    %v4004 = vpack.c.b16 %v3991, %v3990
    %v4005 = vpack.c.b16 %v3993, %v3992
    %v4006 = vpack.c.b16 %v3995, %v3994
    %v4007 = vpack.c.b16 %v3997, %v3996
    %v4008 = vpack.c.b16 %v3999, %v3998
    %v4009 = vpack.c.b16 %v4001, %v4000
    %4018 = vmatprep.subr.bf16.mxu0 0
    %4019 = vmatpush1.bf16.msra.mxu0 %v4002
    %4020 = vmatprep.subr.bf16.mxu0 0
    %4021 = vmatpush1.bf16.msra.mxu0 %v4003
    %4022 = vmatprep.subr.bf16.mxu0 0
    %4023 = vmatpush1.bf16.msra.mxu0 %v4004
    %4024 = vmatprep.subr.bf16.mxu0 0
    %4025 = vmatpush1.bf16.msra.mxu0 %v4005
    %4026 = vmatprep.subr.bf16.mxu0 0
    %4027 = vmatpush1.bf16.msra.mxu0 %v4006
    %4028 = vmatprep.subr.bf16.mxu0 0
    %4029 = vmatpush1.bf16.msra.mxu0 %v4007
    %4030 = vmatprep.subr.bf16.mxu0 0
    %4031 = vmatpush1.bf16.msra.mxu0 %v4008
    %4032 = vmatprep.subr.bf16.mxu0 0
    %4033 = vmatpush1.bf16.msra.mxu0 %v4009
    %4034 = vmatprep.subr.bf16.mxu0 0
    %4035 = vmatpush1.bf16.msra.mxu0 0
    %4036 = vmatprep.subr.bf16.mxu0 0
    %4037 = vmatpush1.bf16.msra.mxu0 0
    %4038 = vmatprep.subr.bf16.mxu0 0
    %4039 = vmatpush1.bf16.msra.mxu0 0
    %4040 = vmatprep.subr.bf16.mxu0 0
    %4041 = vmatpush1.bf16.msra.mxu0 0
    %4042 = vmatprep.subr.bf16.mxu0 0
    %4043 = vmatpush1.bf16.msra.mxu0 0
    %4044 = vmatprep.subr.bf16.mxu0 0
    %4045 = vmatpush1.bf16.msra.mxu0 0
    %4046 = vmatprep.subr.bf16.mxu0 0
    %4047 = vmatpush1.bf16.msra.mxu0 0
    %4048 = vmatprep.subr.bf16.mxu0 0
    %4049 = vmatpush1.bf16.msra.mxu0 0
    %4050 = vmatprep.mubr.bf16.mxu0 0
    %4051 = vmatmul.mubr.bf16.gmra.mrb[0].mxu0 %v3953
    %v4052 = vpop.f32.mrb[0].mxu0
    %v4053 = vadd.f32 0.0, %v4052
    %v4054 = vpop.f32.mrb[0].mxu0
    %v4055 = vpop.f32.mrb[0].mxu0
    %v4056 = vpop.f32.mrb[0].mxu0
    %4057 = vdwg.mxu0
    %v4058 = vld [vmem:[%s12] sm:$0x1]
    %v4060 = vlaneseq
    %v4061 = vshrl.u32 %v4060, 7
    %v4062 = vsub.s32 0, %v4061
    %v4063 = vrot.slane %v4058, %v4062
    %v4065 = vmul.f32 %v4053, %v4063
    %v4066 = vld [vmem:[%s13] sm:$0x1]
    %v4068 = vlaneseq
    %v4069 = vshrl.u32 %v4068, 7
    %v4070 = vsub.s32 0, %v4069
    %v4071 = vrot.slane %v4066, %v4070
    %v4073 = vadd.f32 %v4065, %v4071
    %4074 = vst [vmem:[#allocation16] sm:$0xff] %v4073
    // Predicated region
    $region90: #{tpu_custom_call.1} parent=1 // pred_check
      _
    $region91: #{tpu_custom_call.1} parent=1 // pred_check_branch
      %4076 = sbr.rel (0) target = $region93
    $region92: #{tpu_custom_call.1} parent=1 // pred_region
      %s4078 = ssub.s32 128, 128
      %4079 = vsyncadd [#allocation4], %s4078
      %s4081 = sshll.u32 [#allocation16], 4
      %s4082 = int_to_ptr.vmem [resolvable:$true] %s4081
      %4084 = dma.vmem_to_hbm [thread:$0]  %s4082, 128, %s14, [#allocation4]
    $region93: #{tpu_custom_call.1} parent=1 // pred_fallthru
      _
    // Predicated region
    $region94: #{tpu_custom_call.1} parent=1 // pred_check
      _
    $region95: #{tpu_custom_call.1} parent=1 // pred_check_branch
      %4086 = sbr.rel (0) target = $region97
    $region96: #{tpu_custom_call.1} parent=1 // pred_region
      %4087 = dma.done [#allocation4], 128
    $region97: #{tpu_custom_call.1} parent=1 // pred_fallthru
      _
    %4088 = vsyncpa [#allocation3], 1
    %4089 = vsyncpa [#allocation6], 1
    %4090 = vsyncpa [#allocation9], 1
    %4091 = vsyncpa [#allocation12], 1
    %4092 = vsyncpa [#allocation15], 1
    %4093 = vsyncpa [#allocation4], 1

</llo_original>
